<compile_context>
chip_gen: v5e
topology: v5e:2x2
jax: 0.10.0
libtpu: 0.0.40
codegen_flags: <defaults>
</compile_context>

<pallas_src>
import functools

import jax
import jax.numpy as jnp
from jax.experimental import pallas as pl
from jax.experimental.pallas import tpu as pltpu

_LANE = 128
_VMEM_LIMIT = 48 * 1024 * 1024      # < v7x's 64 MiB / TensorCore


def _rpad(c):
    """Round a channel / feature dim up to a full 128-lane multiple."""
    return ((c + _LANE - 1) // _LANE) * _LANE


def _pick_batch_tile(n):
    """Images per grid step: big tiles feed the MXU, but keep >= 2 grid steps
    when possible so v7x's two TensorCores both get work."""
    if n >= 16:
        return 8
    for bt in (4, 2, 1):
        if n % bt == 0 and n // bt >= 2:
            return bt
    return 1


# -----------------------------------------------------------------------------
# Fully fused forward kernel: conv blocks + BN(eval) + maxpool + classifier.
# -----------------------------------------------------------------------------
def _fused_net_kernel(*refs, cfg):
    bt, in_h, in_w, cin, filters, pool_every, n_hidden = cfg
    n_conv = len(filters)
    n_blocks = n_conv // pool_every
    n_lin = n_hidden + 1

    it = iter(refs)
    x_ref = next(it)
    conv_refs = [(next(it), next(it)) for _ in range(n_conv)]    # (w9, bias)
    bn_refs = [(next(it), next(it)) for _ in range(n_blocks)]    # (scale, shift)
    lin_refs = [(next(it), next(it)) for _ in range(n_lin)]      # (w, bias)
    o_ref = next(it)
    act = [next(it) for _ in range(n_conv)]                      # padded activations
    pool = [next(it) for _ in range(n_blocks)]                   # H-pooled scratch

    # Zero the padded activation scratches: gives the 1-pixel conv halo and the
    # channel padding for free (interiors are fully overwritten below).
    for a in act:
        a[...] = jnp.zeros_like(a)

    # Input tile -> interior of the first padded activation buffer.
    act[0][:, 1:in_h + 1, 1:in_w + 1, 0:cin] = x_ref[...]

    h, w = in_h, in_w
    feat = None
    li = 0
    for b in range(n_blocks):
        for j in range(pool_every):
            src = act[li]
            w9_ref, b_ref = conv_refs[li]
            cp_in = src.shape[-1]
            cp_out = w9_ref.shape[-1]
            m = bt * h * w

            # Conv3x3(pad=1) as 9 accumulated per-tap MXU matmuls
            # (im2col without the concatenate): M = bt*h*w, K = cp_in, N = cp_out.
            acc = None
            for t in range(9):
                dy, dx = divmod(t, 3)
                tap = src[:, dy:dy + h, dx:dx + w, :].reshape(m, cp_in)
                p = jnp.dot(tap.astype(jnp.bfloat16), w9_ref[t],
                            preferred_element_type=jnp.float32)
                acc = p if acc is None else acc + p
            y = jnp.maximum(acc + b_ref[...], 0.0)   # ReLU (Dropout2d = id, eval)

            if j == pool_every - 1:
                # BatchNorm2d (eval, folded affine) then MaxPool 2x2.
                sc_ref, sh_ref = bn_refs[b]
                y = y * sc_ref[...] + sh_ref[...]
                y = y.reshape(bt * (h // 2), 2, w, cp_out)
                pool[b][...] = jnp.max(y, axis=1)                  # pool H pairs
                even = pool[b][:, pl.ds(0, w // 2, stride=2), :]   # pool W pairs
                odd = pool[b][:, pl.ds(1, w // 2, stride=2), :]
                pooled = jnp.maximum(even, odd)                    # (bt*h/2, w/2, C)
                h, w = h // 2, w // 2
                pooled = pooled.reshape(bt, h, w, cp_out)
                if li + 1 < n_conv:
                    act[li + 1][:, 1:h + 1, 1:w + 1, :] = pooled
                else:
                    feat = pooled                                  # (bt, hf, wf, Cpad)
            else:
                act[li + 1][:, 1:h + 1, 1:w + 1, :] = y.reshape(bt, h, w, cp_out)
            li += 1

    # Classifier: (Linear -> ReLU -> Dropout(id))*M -> Linear, all dims padded
    # to 128 lanes.  The first linear consumes the feature map directly as
    # per-spatial-position accumulated matmuls; the NCHW flatten permutation is
    # folded into the weight layout at init, so no in-kernel reshape/transpose.
    hf, wf = h, w
    w1_ref, b1_ref = lin_refs[0]
    z = None
    for s in range(hf * wf):
        hi, wi = divmod(s, wf)
        v = feat[:, hi, wi, :].astype(jnp.bfloat16)                # (bt, Cpad)
        p = jnp.dot(v, w1_ref[s], preferred_element_type=jnp.float32)
        z = p if z is None else z + p
    z = z + b1_ref[...]
    if n_lin > 1:
        z = jnp.maximum(z, 0.0)
    for k in range(1, n_lin):
        wk_ref, bk_ref = lin_refs[k]
        z = jnp.dot(z.astype(jnp.bfloat16), wk_ref[...],
                    preferred_element_type=jnp.float32) + bk_ref[...]
        if k < n_lin - 1:
            z = jnp.maximum(z, 0.0)

    o_ref[0] = z                                                   # (bt, out_pad)


# -----------------------------------------------------------------------------
# Host-side wrapper: one pallas_call for the whole forward pass.
# -----------------------------------------------------------------------------
def your_code_net_forward(params, x_nchw, *, in_size, out_classes, filters,
                          pool_every, hidden_dims):
    cin0, in_h, in_w = in_size
    filters = tuple(filters)
    hidden_dims = tuple(hidden_dims)
    n_conv = len(filters)
    assert n_conv % pool_every == 0
    n_blocks = n_conv // pool_every
    assert in_h % (2 ** n_blocks) == 0 and in_w % (2 ** n_blocks) == 0
    # TODO(synk): odd pre-pool spatial sizes (PyTorch MaxPool floor) not handled.

    n = x_nchw.shape[0]
    x = jnp.transpose(x_nchw, (0, 2, 3, 1)).astype(jnp.float32)    # NCHW -> NHWC
    bt = _pick_batch_tile(n)
    n_pad = -(-n // bt) * bt
    if n_pad != n:
        x = jnp.pad(x, ((0, n_pad - n), (0, 0), (0, 0), (0, 0)))
    num_tiles = n_pad // bt

    out_pad = params["lin_b"][-1].shape[-1]

    def full_spec(a):
        nd = a.ndim
        return pl.BlockSpec(a.shape, lambda i: (0,) * nd)

    args = [x]
    in_specs = [pl.BlockSpec((bt, in_h, in_w, cin0), lambda i: (i, 0, 0, 0))]
    for wk, bk in zip(params["conv_w"], params["conv_b"]):
        args += [wk, bk]
        in_specs += [full_spec(wk), full_spec(bk)]
    for sc, sh in zip(params["bn_scale"], params["bn_shift"]):
        args += [sc, sh]
        in_specs += [full_spec(sc), full_spec(sh)]
    for wk, bk in zip(params["lin_w"], params["lin_b"]):
        args += [wk, bk]
        in_specs += [full_spec(wk), full_spec(bk)]

    # Per-conv-layer padded activation scratch (+1 px halo, 128-lane channels)
    # and a per-block scratch for the H-pooled intermediate (strided W-pool).
    act_shapes, pool_shapes = [], []
    h, w, ch = in_h, in_w, cin0
    for li in range(n_conv):
        act_shapes.append((bt, h + 2, w + 2, _rpad(ch)))
        ch = filters[li]
        if (li + 1) % pool_every == 0:
            pool_shapes.append((bt * (h // 2), w, _rpad(ch)))
            h, w = h // 2, w // 2
    scratch_shapes = ([pltpu.VMEM(s, jnp.float32) for s in act_shapes]
                      + [pltpu.VMEM(s, jnp.float32) for s in pool_shapes])

    cfg = (bt, in_h, in_w, cin0, filters, pool_every, len(hidden_dims))

    out = pl.pallas_call(
        functools.partial(_fused_net_kernel, cfg=cfg),
        out_shape=jax.ShapeDtypeStruct((num_tiles, bt, out_pad), jnp.float32),
        grid=(num_tiles,),
        in_specs=in_specs,
        out_specs=pl.BlockSpec((1, bt, out_pad), lambda i: (i, 0, 0)),
        scratch_shapes=scratch_shapes,
        compiler_params=pltpu.CompilerParams(
            dimension_semantics=("parallel",),
            vmem_limit_bytes=_VMEM_LIMIT),
    )(*args)

    return out.reshape(n_pad, out_pad)[:n, :out_classes]


# -----------------------------------------------------------------------------
# Deterministic parameter init (shapes follow the PyTorch __init__), with all
# channel / feature dims zero-padded to 128 lanes for the TPU kernel.
# -----------------------------------------------------------------------------
def init_params(key, in_size, out_classes, filters, pool_every, hidden_dims,
                eps=1e-5):
    cin0, in_h, in_w = in_size
    filters = tuple(filters)
    hidden_dims = tuple(hidden_dims)
    n_conv = len(filters)
    assert n_conv % pool_every == 0
    n_blocks = n_conv // pool_every
    n_lin = len(hidden_dims) + 1
    keys = iter(jax.random.split(key, 2 * n_conv + 2 * n_lin))

    conv_w, conv_b, bn_scale, bn_shift = [], [], [], []
    prev = cin0
    for li, cout in enumerate(filters):
        cp_in, cp_out = _rpad(prev), _rpad(cout)
        wkey, bkey = next(keys), next(keys)
        bound = 1.0 / float(prev * 9) ** 0.5
        w = jax.random.uniform(wkey, (3, 3, prev, cout), jnp.float32, -bound, bound)
        bvec = jax.random.uniform(bkey, (cout,), jnp.float32, -bound, bound)
        w9 = jnp.zeros((9, cp_in, cp_out), jnp.float32)
        w9 = w9.at[:, :prev, :cout].set(w.reshape(9, prev, cout))
        conv_w.append(w9.astype(jnp.bfloat16))
        conv_b.append(jnp.zeros((1, cp_out), jnp.float32).at[0, :cout].set(bvec))
        prev = cout
        if (li + 1) % pool_every == 0:
            # BatchNorm2d eval affine from init-time running stats:
            # gamma=1, beta=0, running_mean=0, running_var=1.
            inv = 1.0 / (1.0 + eps) ** 0.5
            bn_scale.append(
                jnp.zeros((1, cp_out), jnp.float32).at[0, :cout].set(inv))
            bn_shift.append(jnp.zeros((1, cp_out), jnp.float32))

    hf, wf = in_h // (2 ** n_blocks), in_w // (2 ** n_blocks)
    cf = filters[-1]
    cp_f = _rpad(cf)
    feat_dim = cf * hf * wf
    dims = list(hidden_dims) + [out_classes]

    lin_w, lin_b = [], []
    d_prev = feat_dim
    for k, d_out in enumerate(dims):
        dp_out = _rpad(d_out)
        wkey, bkey = next(keys), next(keys)
        bound = 1.0 / float(d_prev) ** 0.5
        bvec = jax.random.uniform(bkey, (d_out,), jnp.float32, -bound, bound)
        if k == 0:
            # Linear(feat_dim, d_out) with the NCHW flatten permutation and the
            # channel zero-padding folded into an (hf*wf, Cpad, Dpad) layout so
            # the kernel consumes the NHWC feature map per spatial position.
            w = jax.random.uniform(wkey, (hf, wf, cf, d_out), jnp.float32,
                                   -bound, bound)
            wp = jnp.zeros((hf * wf, cp_f, dp_out), jnp.float32)
            wp = wp.at[:, :cf, :d_out].set(w.reshape(hf * wf, cf, d_out))
        else:
            dp_prev = _rpad(d_prev)
            w = jax.random.uniform(wkey, (d_prev, d_out), jnp.float32,
                                   -bound, bound)
            wp = jnp.zeros((dp_prev, dp_out), jnp.float32)
            wp = wp.at[:d_prev, :d_out].set(w)
        lin_w.append(wp.astype(jnp.bfloat16))
        lin_b.append(jnp.zeros((1, dp_out), jnp.float32).at[0, :d_out].set(bvec))
        d_prev = d_out

    return {"conv_w": conv_w, "conv_b": conv_b,
            "bn_scale": bn_scale, "bn_shift": bn_shift,
            "lin_w": lin_w, "lin_b": lin_b}


if __name__ == "__main__":
    key = jax.random.PRNGKey(0)
    in_size = (4, 16, 16)        # (C, H, W)
    out_classes = 10
    filters = [8, 16]
    pool_every = 1
    hidden_dims = [32]

    pkey, xkey = jax.random.split(key)
    params = init_params(pkey, in_size, out_classes, filters, pool_every,
                         hidden_dims)
    x = jax.random.normal(xkey, (2,) + in_size, jnp.float32)     # NCHW input

    fwd = jax.jit(functools.partial(
        your_code_net_forward, in_size=in_size, out_classes=out_classes,
        filters=tuple(filters), pool_every=pool_every,
        hidden_dims=tuple(hidden_dims)))
    out = jax.block_until_ready(fwd(params, x))
    assert out.shape == (2, out_classes), out.shape
    print("KERNEL_OK")
</pallas_src>

<mosaic_0001>
module attributes {stable_mosaic.version = 11 : i64} {
  func.func @_fused_net_kernel(%arg0: i32, %arg1: memref<1x16x16x4xf32, #tpu.memory_space<vmem>>, %arg2: memref<9x128x128xbf16, #tpu.memory_space<vmem>>, %arg3: memref<1x128xf32, #tpu.memory_space<vmem>>, %arg4: memref<9x128x128xbf16, #tpu.memory_space<vmem>>, %arg5: memref<1x128xf32, #tpu.memory_space<vmem>>, %arg6: memref<1x128xf32, #tpu.memory_space<vmem>>, %arg7: memref<1x128xf32, #tpu.memory_space<vmem>>, %arg8: memref<1x128xf32, #tpu.memory_space<vmem>>, %arg9: memref<1x128xf32, #tpu.memory_space<vmem>>, %arg10: memref<16x128x128xbf16, #tpu.memory_space<vmem>>, %arg11: memref<1x128xf32, #tpu.memory_space<vmem>>, %arg12: memref<128x128xbf16, #tpu.memory_space<vmem>>, %arg13: memref<1x128xf32, #tpu.memory_space<vmem>>, %arg14: memref<1x1x128xf32, #tpu.memory_space<vmem>>, %arg15: memref<1x18x18x128xf32, #tpu.memory_space<vmem>>, %arg16: memref<1x10x10x128xf32, #tpu.memory_space<vmem>>, %arg17: memref<8x16x128xf32, #tpu.memory_space<vmem>>, %arg18: memref<4x8x128xf32, #tpu.memory_space<vmem>>) attributes {dimension_semantics = [#tpu.dimension_semantics<parallel>], iteration_bounds = array<i64: 2>, scalar_prefetch = 0 : i64, scratch_operands = 4 : i64, tpu.core_type = #tpu.core_type<tc>, window_params = [{transform_indices = @transform_0, window_bounds = array<i64: 1, 16, 16, 4>}, {pipeline_mode = #tpu.pipeline_mode<synchronous>, transform_indices = @transform_1, window_bounds = array<i64: 9, 128, 128>}, {pipeline_mode = #tpu.pipeline_mode<synchronous>, transform_indices = @transform_2, window_bounds = array<i64: 1, 128>}, {pipeline_mode = #tpu.pipeline_mode<synchronous>, transform_indices = @transform_3, window_bounds = array<i64: 9, 128, 128>}, {pipeline_mode = #tpu.pipeline_mode<synchronous>, transform_indices = @transform_4, window_bounds = array<i64: 1, 128>}, {pipeline_mode = #tpu.pipeline_mode<synchronous>, transform_indices = @transform_5, window_bounds = array<i64: 1, 128>}, {pipeline_mode = #tpu.pipeline_mode<synchronous>, transform_indices = @transform_6, window_bounds = array<i64: 1, 128>}, {pipeline_mode = #tpu.pipeline_mode<synchronous>, transform_indices = @transform_7, window_bounds = array<i64: 1, 128>}, {pipeline_mode = #tpu.pipeline_mode<synchronous>, transform_indices = @transform_8, window_bounds = array<i64: 1, 128>}, {pipeline_mode = #tpu.pipeline_mode<synchronous>, transform_indices = @transform_9, window_bounds = array<i64: 16, 128, 128>}, {pipeline_mode = #tpu.pipeline_mode<synchronous>, transform_indices = @transform_10, window_bounds = array<i64: 1, 128>}, {pipeline_mode = #tpu.pipeline_mode<synchronous>, transform_indices = @transform_11, window_bounds = array<i64: 128, 128>}, {pipeline_mode = #tpu.pipeline_mode<synchronous>, transform_indices = @transform_12, window_bounds = array<i64: 1, 128>}, {transform_indices = @transform_13, window_bounds = array<i64: 1, 1, 128>}]} {
    %cst = arith.constant 0.000000e+00 : f32
    %0 = vector.broadcast %cst : f32 to vector<1x18x18x128xf32>
    %c0 = arith.constant 0 : index
    %c0_0 = arith.constant 0 : index
    %c0_1 = arith.constant 0 : index
    %c0_2 = arith.constant 0 : index
    %1 = vector.load %arg15[%c0, %c0_0, %c0_1, %c0_2] : memref<1x18x18x128xf32, #tpu.memory_space<vmem>>, vector<1x18x18x128xf32>
    tpu.vector_store %arg15[%c0, %c0_0, %c0_1, %c0_2], %0 {strides = array<i32>} : memref<1x18x18x128xf32, #tpu.memory_space<vmem>>, vector<1x18x18x128xf32>,
    %cst_3 = arith.constant 0.000000e+00 : f32
    %2 = vector.broadcast %cst_3 : f32 to vector<1x10x10x128xf32>
    %c0_4 = arith.constant 0 : index
    %c0_5 = arith.constant 0 : index
    %c0_6 = arith.constant 0 : index
    %c0_7 = arith.constant 0 : index
    %3 = vector.load %arg16[%c0_4, %c0_5, %c0_6, %c0_7] : memref<1x10x10x128xf32, #tpu.memory_space<vmem>>, vector<1x10x10x128xf32>
    tpu.vector_store %arg16[%c0_4, %c0_5, %c0_6, %c0_7], %2 {strides = array<i32>} : memref<1x10x10x128xf32, #tpu.memory_space<vmem>>, vector<1x10x10x128xf32>,
    %c0_8 = arith.constant 0 : index
    %c0_9 = arith.constant 0 : index
    %c0_10 = arith.constant 0 : index
    %c0_11 = arith.constant 0 : index
    %4 = vector.load %arg1[%c0_8, %c0_9, %c0_10, %c0_11] : memref<1x16x16x4xf32, #tpu.memory_space<vmem>>, vector<1x16x16x4xf32>
    %c0_12 = arith.constant 0 : index
    %c1 = arith.constant 1 : index
    %c1_13 = arith.constant 1 : index
    %c0_14 = arith.constant 0 : index
    %5 = vector.load %arg15[%c0_12, %c1, %c1_13, %c0_14] : memref<1x18x18x128xf32, #tpu.memory_space<vmem>>, vector<1x16x16x4xf32>
    tpu.vector_store %arg15[%c0_12, %c1, %c1_13, %c0_14], %4 {strides = array<i32>} : memref<1x18x18x128xf32, #tpu.memory_space<vmem>>, vector<1x16x16x4xf32>,
    %c0_15 = arith.constant 0 : index
    %c0_16 = arith.constant 0 : index
    %c0_17 = arith.constant 0 : index
    %c0_18 = arith.constant 0 : index
    %6 = vector.load %arg15[%c0_15, %c0_16, %c0_17, %c0_18] : memref<1x18x18x128xf32, #tpu.memory_space<vmem>>, vector<1x16x16x128xf32>
    %7 = vector.shape_cast %6 : vector<1x16x16x128xf32> to vector<256x128xf32>
    %8 = arith.truncf %7 : vector<256x128xf32> to vector<256x128xbf16>
    %c0_19 = arith.constant 0 : index
    %c0_20 = arith.constant 0 : index
    %c0_21 = arith.constant 0 : index
    %9 = vector.load %arg2[%c0_19, %c0_20, %c0_21] : memref<9x128x128xbf16, #tpu.memory_space<vmem>>, vector<1x128x128xbf16>
    %10 = vector.shape_cast %9 : vector<1x128x128xbf16> to vector<128x128xbf16>
    %cst_22 = arith.constant dense<0.000000e+00> : vector<256x128xf32>
    %11 = tpu.matmul %8, %10, %cst_22 {dimension_numbers = #tpu.dot_dimension_numbers<[1], [0], [0], [1], [0, 0, 1, 1], [], []>} : vector<256x128xbf16>, vector<128x128xbf16>, vector<256x128xf32> -> vector<256x128xf32>
    %c0_23 = arith.constant 0 : index
    %c0_24 = arith.constant 0 : index
    %c1_25 = arith.constant 1 : index
    %c0_26 = arith.constant 0 : index
    %12 = vector.load %arg15[%c0_23, %c0_24, %c1_25, %c0_26] : memref<1x18x18x128xf32, #tpu.memory_space<vmem>>, vector<1x16x16x128xf32>
    %13 = vector.shape_cast %12 : vector<1x16x16x128xf32> to vector<256x128xf32>
    %14 = arith.truncf %13 : vector<256x128xf32> to vector<256x128xbf16>
    %c1_27 = arith.constant 1 : index
    %c0_28 = arith.constant 0 : index
    %c0_29 = arith.constant 0 : index
    %15 = vector.load %arg2[%c1_27, %c0_28, %c0_29] : memref<9x128x128xbf16, #tpu.memory_space<vmem>>, vector<1x128x128xbf16>
    %16 = vector.shape_cast %15 : vector<1x128x128xbf16> to vector<128x128xbf16>
    %cst_30 = arith.constant dense<0.000000e+00> : vector<256x128xf32>
    %17 = tpu.matmul %14, %16, %cst_30 {dimension_numbers = #tpu.dot_dimension_numbers<[1], [0], [0], [1], [0, 0, 1, 1], [], []>} : vector<256x128xbf16>, vector<128x128xbf16>, vector<256x128xf32> -> vector<256x128xf32>
    %18 = arith.addf %11, %17 : vector<256x128xf32>
    %c0_31 = arith.constant 0 : index
    %c0_32 = arith.constant 0 : index
    %c2 = arith.constant 2 : index
    %c0_33 = arith.constant 0 : index
    %19 = vector.load %arg15[%c0_31, %c0_32, %c2, %c0_33] : memref<1x18x18x128xf32, #tpu.memory_space<vmem>>, vector<1x16x16x128xf32>
    %20 = vector.shape_cast %19 : vector<1x16x16x128xf32> to vector<256x128xf32>
    %21 = arith.truncf %20 : vector<256x128xf32> to vector<256x128xbf16>
    %c2_34 = arith.constant 2 : index
    %c0_35 = arith.constant 0 : index
    %c0_36 = arith.constant 0 : index
    %22 = vector.load %arg2[%c2_34, %c0_35, %c0_36] : memref<9x128x128xbf16, #tpu.memory_space<vmem>>, vector<1x128x128xbf16>
    %23 = vector.shape_cast %22 : vector<1x128x128xbf16> to vector<128x128xbf16>
    %cst_37 = arith.constant dense<0.000000e+00> : vector<256x128xf32>
    %24 = tpu.matmul %21, %23, %cst_37 {dimension_numbers = #tpu.dot_dimension_numbers<[1], [0], [0], [1], [0, 0, 1, 1], [], []>} : vector<256x128xbf16>, vector<128x128xbf16>, vector<256x128xf32> -> vector<256x128xf32>
    %25 = arith.addf %18, %24 : vector<256x128xf32>
    %c0_38 = arith.constant 0 : index
    %c1_39 = arith.constant 1 : index
    %c0_40 = arith.constant 0 : index
    %c0_41 = arith.constant 0 : index
    %26 = vector.load %arg15[%c0_38, %c1_39, %c0_40, %c0_41] : memref<1x18x18x128xf32, #tpu.memory_space<vmem>>, vector<1x16x16x128xf32>
    %27 = vector.shape_cast %26 : vector<1x16x16x128xf32> to vector<256x128xf32>
    %28 = arith.truncf %27 : vector<256x128xf32> to vector<256x128xbf16>
    %c3 = arith.constant 3 : index
    %c0_42 = arith.constant 0 : index
    %c0_43 = arith.constant 0 : index
    %29 = vector.load %arg2[%c3, %c0_42, %c0_43] : memref<9x128x128xbf16, #tpu.memory_space<vmem>>, vector<1x128x128xbf16>
    %30 = vector.shape_cast %29 : vector<1x128x128xbf16> to vector<128x128xbf16>
    %cst_44 = arith.constant dense<0.000000e+00> : vector<256x128xf32>
    %31 = tpu.matmul %28, %30, %cst_44 {dimension_numbers = #tpu.dot_dimension_numbers<[1], [0], [0], [1], [0, 0, 1, 1], [], []>} : vector<256x128xbf16>, vector<128x128xbf16>, vector<256x128xf32> -> vector<256x128xf32>
    %32 = arith.addf %25, %31 : vector<256x128xf32>
    %c0_45 = arith.constant 0 : index
    %c1_46 = arith.constant 1 : index
    %c1_47 = arith.constant 1 : index
    %c0_48 = arith.constant 0 : index
    %33 = vector.load %arg15[%c0_45, %c1_46, %c1_47, %c0_48] : memref<1x18x18x128xf32, #tpu.memory_space<vmem>>, vector<1x16x16x128xf32>
    %34 = vector.shape_cast %33 : vector<1x16x16x128xf32> to vector<256x128xf32>
    %35 = arith.truncf %34 : vector<256x128xf32> to vector<256x128xbf16>
    %c4 = arith.constant 4 : index
    %c0_49 = arith.constant 0 : index
    %c0_50 = arith.constant 0 : index
    %36 = vector.load %arg2[%c4, %c0_49, %c0_50] : memref<9x128x128xbf16, #tpu.memory_space<vmem>>, vector<1x128x128xbf16>
    %37 = vector.shape_cast %36 : vector<1x128x128xbf16> to vector<128x128xbf16>
    %cst_51 = arith.constant dense<0.000000e+00> : vector<256x128xf32>
    %38 = tpu.matmul %35, %37, %cst_51 {dimension_numbers = #tpu.dot_dimension_numbers<[1], [0], [0], [1], [0, 0, 1, 1], [], []>} : vector<256x128xbf16>, vector<128x128xbf16>, vector<256x128xf32> -> vector<256x128xf32>
    %39 = arith.addf %32, %38 : vector<256x128xf32>
    %c0_52 = arith.constant 0 : index
    %c1_53 = arith.constant 1 : index
    %c2_54 = arith.constant 2 : index
    %c0_55 = arith.constant 0 : index
    %40 = vector.load %arg15[%c0_52, %c1_53, %c2_54, %c0_55] : memref<1x18x18x128xf32, #tpu.memory_space<vmem>>, vector<1x16x16x128xf32>
    %41 = vector.shape_cast %40 : vector<1x16x16x128xf32> to vector<256x128xf32>
    %42 = arith.truncf %41 : vector<256x128xf32> to vector<256x128xbf16>
    %c5 = arith.constant 5 : index
    %c0_56 = arith.constant 0 : index
    %c0_57 = arith.constant 0 : index
    %43 = vector.load %arg2[%c5, %c0_56, %c0_57] : memref<9x128x128xbf16, #tpu.memory_space<vmem>>, vector<1x128x128xbf16>
    %44 = vector.shape_cast %43 : vector<1x128x128xbf16> to vector<128x128xbf16>
    %cst_58 = arith.constant dense<0.000000e+00> : vector<256x128xf32>
    %45 = tpu.matmul %42, %44, %cst_58 {dimension_numbers = #tpu.dot_dimension_numbers<[1], [0], [0], [1], [0, 0, 1, 1], [], []>} : vector<256x128xbf16>, vector<128x128xbf16>, vector<256x128xf32> -> vector<256x128xf32>
    %46 = arith.addf %39, %45 : vector<256x128xf32>
    %c0_59 = arith.constant 0 : index
    %c2_60 = arith.constant 2 : index
    %c0_61 = arith.constant 0 : index
    %c0_62 = arith.constant 0 : index
    %47 = vector.load %arg15[%c0_59, %c2_60, %c0_61, %c0_62] : memref<1x18x18x128xf32, #tpu.memory_space<vmem>>, vector<1x16x16x128xf32>
    %48 = vector.shape_cast %47 : vector<1x16x16x128xf32> to vector<256x128xf32>
    %49 = arith.truncf %48 : vector<256x128xf32> to vector<256x128xbf16>
    %c6 = arith.constant 6 : index
    %c0_63 = arith.constant 0 : index
    %c0_64 = arith.constant 0 : index
    %50 = vector.load %arg2[%c6, %c0_63, %c0_64] : memref<9x128x128xbf16, #tpu.memory_space<vmem>>, vector<1x128x128xbf16>
    %51 = vector.shape_cast %50 : vector<1x128x128xbf16> to vector<128x128xbf16>
    %cst_65 = arith.constant dense<0.000000e+00> : vector<256x128xf32>
    %52 = tpu.matmul %49, %51, %cst_65 {dimension_numbers = #tpu.dot_dimension_numbers<[1], [0], [0], [1], [0, 0, 1, 1], [], []>} : vector<256x128xbf16>, vector<128x128xbf16>, vector<256x128xf32> -> vector<256x128xf32>
    %53 = arith.addf %46, %52 : vector<256x128xf32>
    %c0_66 = arith.constant 0 : index
    %c2_67 = arith.constant 2 : index
    %c1_68 = arith.constant 1 : index
    %c0_69 = arith.constant 0 : index
    %54 = vector.load %arg15[%c0_66, %c2_67, %c1_68, %c0_69] : memref<1x18x18x128xf32, #tpu.memory_space<vmem>>, vector<1x16x16x128xf32>
    %55 = vector.shape_cast %54 : vector<1x16x16x128xf32> to vector<256x128xf32>
    %56 = arith.truncf %55 : vector<256x128xf32> to vector<256x128xbf16>
    %c7 = arith.constant 7 : index
    %c0_70 = arith.constant 0 : index
    %c0_71 = arith.constant 0 : index
    %57 = vector.load %arg2[%c7, %c0_70, %c0_71] : memref<9x128x128xbf16, #tpu.memory_space<vmem>>, vector<1x128x128xbf16>
    %58 = vector.shape_cast %57 : vector<1x128x128xbf16> to vector<128x128xbf16>
    %cst_72 = arith.constant dense<0.000000e+00> : vector<256x128xf32>
    %59 = tpu.matmul %56, %58, %cst_72 {dimension_numbers = #tpu.dot_dimension_numbers<[1], [0], [0], [1], [0, 0, 1, 1], [], []>} : vector<256x128xbf16>, vector<128x128xbf16>, vector<256x128xf32> -> vector<256x128xf32>
    %60 = arith.addf %53, %59 : vector<256x128xf32>
    %c0_73 = arith.constant 0 : index
    %c2_74 = arith.constant 2 : index
    %c2_75 = arith.constant 2 : index
    %c0_76 = arith.constant 0 : index
    %61 = vector.load %arg15[%c0_73, %c2_74, %c2_75, %c0_76] : memref<1x18x18x128xf32, #tpu.memory_space<vmem>>, vector<1x16x16x128xf32>
    %62 = vector.shape_cast %61 : vector<1x16x16x128xf32> to vector<256x128xf32>
    %63 = arith.truncf %62 : vector<256x128xf32> to vector<256x128xbf16>
    %c8 = arith.constant 8 : index
    %c0_77 = arith.constant 0 : index
    %c0_78 = arith.constant 0 : index
    %64 = vector.load %arg2[%c8, %c0_77, %c0_78] : memref<9x128x128xbf16, #tpu.memory_space<vmem>>, vector<1x128x128xbf16>
    %65 = vector.shape_cast %64 : vector<1x128x128xbf16> to vector<128x128xbf16>
    %cst_79 = arith.constant dense<0.000000e+00> : vector<256x128xf32>
    %66 = tpu.matmul %63, %65, %cst_79 {dimension_numbers = #tpu.dot_dimension_numbers<[1], [0], [0], [1], [0, 0, 1, 1], [], []>} : vector<256x128xbf16>, vector<128x128xbf16>, vector<256x128xf32> -> vector<256x128xf32>
    %67 = arith.addf %60, %66 : vector<256x128xf32>
    %c0_80 = arith.constant 0 : index
    %c0_81 = arith.constant 0 : index
    %68 = vector.load %arg3[%c0_80, %c0_81] : memref<1x128xf32, #tpu.memory_space<vmem>>, vector<1x128xf32>
    %69 = vector.broadcast %68 : vector<1x128xf32> to vector<256x128xf32>
    %70 = arith.addf %67, %69 : vector<256x128xf32>
    %cst_82 = arith.constant 0.000000e+00 : f32
    %71 = vector.broadcast %cst_82 : f32 to vector<256x128xf32>
    %72 = arith.maximumf %70, %71 : vector<256x128xf32>
    %c0_83 = arith.constant 0 : index
    %c0_84 = arith.constant 0 : index
    %73 = vector.load %arg6[%c0_83, %c0_84] : memref<1x128xf32, #tpu.memory_space<vmem>>, vector<1x128xf32>
    %74 = vector.broadcast %73 : vector<1x128xf32> to vector<256x128xf32>
    %75 = arith.mulf %72, %74 : vector<256x128xf32>
    %c0_85 = arith.constant 0 : index
    %c0_86 = arith.constant 0 : index
    %76 = vector.load %arg7[%c0_85, %c0_86] : memref<1x128xf32, #tpu.memory_space<vmem>>, vector<1x128xf32>
    %77 = vector.broadcast %76 : vector<1x128xf32> to vector<256x128xf32>
    %78 = arith.addf %75, %77 : vector<256x128xf32>
    %79 = vector.shape_cast %78 : vector<256x128xf32> to vector<8x2x16x128xf32>
    %cst_87 = arith.constant dense<0xFF800000> : vector<8x16x128xf32>
    %80 = vector.multi_reduction <maximumf>, %79, %cst_87 [1] : vector<8x2x16x128xf32> to vector<8x16x128xf32>
    %c0_88 = arith.constant 0 : index
    %c0_89 = arith.constant 0 : index
    %c0_90 = arith.constant 0 : index
    %81 = vector.load %arg17[%c0_88, %c0_89, %c0_90] : memref<8x16x128xf32, #tpu.memory_space<vmem>>, vector<8x16x128xf32>
    tpu.vector_store %arg17[%c0_88, %c0_89, %c0_90], %80 {strides = array<i32>} : memref<8x16x128xf32, #tpu.memory_space<vmem>>, vector<8x16x128xf32>,
    %c0_91 = arith.constant 0 : index
    %c0_92 = arith.constant 0 : index
    %c0_93 = arith.constant 0 : index
    %82 = tpu.strided_load %arg17[%c0_91, %c0_92, %c0_93] {strides = array<i32: 1, 2, 1>} : memref<8x16x128xf32, #tpu.memory_space<vmem>>, vector<8x8x128xf32>
    %c0_94 = arith.constant 0 : index
    %c1_95 = arith.constant 1 : index
    %c0_96 = arith.constant 0 : index
    %83 = tpu.strided_load %arg17[%c0_94, %c1_95, %c0_96] {strides = array<i32: 1, 2, 1>} : memref<8x16x128xf32, #tpu.memory_space<vmem>>, vector<8x8x128xf32>
    %84 = arith.maximumf %82, %83 : vector<8x8x128xf32>
    %85 = vector.shape_cast %84 : vector<8x8x128xf32> to vector<1x8x8x128xf32>
    %c0_97 = arith.constant 0 : index
    %c1_98 = arith.constant 1 : index
    %c1_99 = arith.constant 1 : index
    %c0_100 = arith.constant 0 : index
    %86 = vector.load %arg16[%c0_97, %c1_98, %c1_99, %c0_100] : memref<1x10x10x128xf32, #tpu.memory_space<vmem>>, vector<1x8x8x128xf32>
    tpu.vector_store %arg16[%c0_97, %c1_98, %c1_99, %c0_100], %85 {strides = array<i32>} : memref<1x10x10x128xf32, #tpu.memory_space<vmem>>, vector<1x8x8x128xf32>,
    %c0_101 = arith.constant 0 : index
    %c0_102 = arith.constant 0 : index
    %c0_103 = arith.constant 0 : index
    %c0_104 = arith.constant 0 : index
    %87 = vector.load %arg16[%c0_101, %c0_102, %c0_103, %c0_104] : memref<1x10x10x128xf32, #tpu.memory_space<vmem>>, vector<1x8x8x128xf32>
    %88 = vector.shape_cast %87 : vector<1x8x8x128xf32> to vector<64x128xf32>
    %89 = arith.truncf %88 : vector<64x128xf32> to vector<64x128xbf16>
    %c0_105 = arith.constant 0 : index
    %c0_106 = arith.constant 0 : index
    %c0_107 = arith.constant 0 : index
    %90 = vector.load %arg4[%c0_105, %c0_106, %c0_107] : memref<9x128x128xbf16, #tpu.memory_space<vmem>>, vector<1x128x128xbf16>
    %91 = vector.shape_cast %90 : vector<1x128x128xbf16> to vector<128x128xbf16>
    %cst_108 = arith.constant dense<0.000000e+00> : vector<64x128xf32>
    %92 = tpu.matmul %89, %91, %cst_108 {dimension_numbers = #tpu.dot_dimension_numbers<[1], [0], [0], [1], [0, 0, 1, 1], [], []>} : vector<64x128xbf16>, vector<128x128xbf16>, vector<64x128xf32> -> vector<64x128xf32>
    %c0_109 = arith.constant 0 : index
    %c0_110 = arith.constant 0 : index
    %c1_111 = arith.constant 1 : index
    %c0_112 = arith.constant 0 : index
    %93 = vector.load %arg16[%c0_109, %c0_110, %c1_111, %c0_112] : memref<1x10x10x128xf32, #tpu.memory_space<vmem>>, vector<1x8x8x128xf32>
    %94 = vector.shape_cast %93 : vector<1x8x8x128xf32> to vector<64x128xf32>
    %95 = arith.truncf %94 : vector<64x128xf32> to vector<64x128xbf16>
    %c1_113 = arith.constant 1 : index
    %c0_114 = arith.constant 0 : index
    %c0_115 = arith.constant 0 : index
    %96 = vector.load %arg4[%c1_113, %c0_114, %c0_115] : memref<9x128x128xbf16, #tpu.memory_space<vmem>>, vector<1x128x128xbf16>
    %97 = vector.shape_cast %96 : vector<1x128x128xbf16> to vector<128x128xbf16>
    %cst_116 = arith.constant dense<0.000000e+00> : vector<64x128xf32>
    %98 = tpu.matmul %95, %97, %cst_116 {dimension_numbers = #tpu.dot_dimension_numbers<[1], [0], [0], [1], [0, 0, 1, 1], [], []>} : vector<64x128xbf16>, vector<128x128xbf16>, vector<64x128xf32> -> vector<64x128xf32>
    %99 = arith.addf %92, %98 : vector<64x128xf32>
    %c0_117 = arith.constant 0 : index
    %c0_118 = arith.constant 0 : index
    %c2_119 = arith.constant 2 : index
    %c0_120 = arith.constant 0 : index
    %100 = vector.load %arg16[%c0_117, %c0_118, %c2_119, %c0_120] : memref<1x10x10x128xf32, #tpu.memory_space<vmem>>, vector<1x8x8x128xf32>
    %101 = vector.shape_cast %100 : vector<1x8x8x128xf32> to vector<64x128xf32>
    %102 = arith.truncf %101 : vector<64x128xf32> to vector<64x128xbf16>
    %c2_121 = arith.constant 2 : index
    %c0_122 = arith.constant 0 : index
    %c0_123 = arith.constant 0 : index
    %103 = vector.load %arg4[%c2_121, %c0_122, %c0_123] : memref<9x128x128xbf16, #tpu.memory_space<vmem>>, vector<1x128x128xbf16>
    %104 = vector.shape_cast %103 : vector<1x128x128xbf16> to vector<128x128xbf16>
    %cst_124 = arith.constant dense<0.000000e+00> : vector<64x128xf32>
    %105 = tpu.matmul %102, %104, %cst_124 {dimension_numbers = #tpu.dot_dimension_numbers<[1], [0], [0], [1], [0, 0, 1, 1], [], []>} : vector<64x128xbf16>, vector<128x128xbf16>, vector<64x128xf32> -> vector<64x128xf32>
    %106 = arith.addf %99, %105 : vector<64x128xf32>
    %c0_125 = arith.constant 0 : index
    %c1_126 = arith.constant 1 : index
    %c0_127 = arith.constant 0 : index
    %c0_128 = arith.constant 0 : index
    %107 = vector.load %arg16[%c0_125, %c1_126, %c0_127, %c0_128] : memref<1x10x10x128xf32, #tpu.memory_space<vmem>>, vector<1x8x8x128xf32>
    %108 = vector.shape_cast %107 : vector<1x8x8x128xf32> to vector<64x128xf32>
    %109 = arith.truncf %108 : vector<64x128xf32> to vector<64x128xbf16>
    %c3_129 = arith.constant 3 : index
    %c0_130 = arith.constant 0 : index
    %c0_131 = arith.constant 0 : index
    %110 = vector.load %arg4[%c3_129, %c0_130, %c0_131] : memref<9x128x128xbf16, #tpu.memory_space<vmem>>, vector<1x128x128xbf16>
    %111 = vector.shape_cast %110 : vector<1x128x128xbf16> to vector<128x128xbf16>
    %cst_132 = arith.constant dense<0.000000e+00> : vector<64x128xf32>
    %112 = tpu.matmul %109, %111, %cst_132 {dimension_numbers = #tpu.dot_dimension_numbers<[1], [0], [0], [1], [0, 0, 1, 1], [], []>} : vector<64x128xbf16>, vector<128x128xbf16>, vector<64x128xf32> -> vector<64x128xf32>
    %113 = arith.addf %106, %112 : vector<64x128xf32>
    %c0_133 = arith.constant 0 : index
    %c1_134 = arith.constant 1 : index
    %c1_135 = arith.constant 1 : index
    %c0_136 = arith.constant 0 : index
    %114 = vector.load %arg16[%c0_133, %c1_134, %c1_135, %c0_136] : memref<1x10x10x128xf32, #tpu.memory_space<vmem>>, vector<1x8x8x128xf32>
    %115 = vector.shape_cast %114 : vector<1x8x8x128xf32> to vector<64x128xf32>
    %116 = arith.truncf %115 : vector<64x128xf32> to vector<64x128xbf16>
    %c4_137 = arith.constant 4 : index
    %c0_138 = arith.constant 0 : index
    %c0_139 = arith.constant 0 : index
    %117 = vector.load %arg4[%c4_137, %c0_138, %c0_139] : memref<9x128x128xbf16, #tpu.memory_space<vmem>>, vector<1x128x128xbf16>
    %118 = vector.shape_cast %117 : vector<1x128x128xbf16> to vector<128x128xbf16>
    %cst_140 = arith.constant dense<0.000000e+00> : vector<64x128xf32>
    %119 = tpu.matmul %116, %118, %cst_140 {dimension_numbers = #tpu.dot_dimension_numbers<[1], [0], [0], [1], [0, 0, 1, 1], [], []>} : vector<64x128xbf16>, vector<128x128xbf16>, vector<64x128xf32> -> vector<64x128xf32>
    %120 = arith.addf %113, %119 : vector<64x128xf32>
    %c0_141 = arith.constant 0 : index
    %c1_142 = arith.constant 1 : index
    %c2_143 = arith.constant 2 : index
    %c0_144 = arith.constant 0 : index
    %121 = vector.load %arg16[%c0_141, %c1_142, %c2_143, %c0_144] : memref<1x10x10x128xf32, #tpu.memory_space<vmem>>, vector<1x8x8x128xf32>
    %122 = vector.shape_cast %121 : vector<1x8x8x128xf32> to vector<64x128xf32>
    %123 = arith.truncf %122 : vector<64x128xf32> to vector<64x128xbf16>
    %c5_145 = arith.constant 5 : index
    %c0_146 = arith.constant 0 : index
    %c0_147 = arith.constant 0 : index
    %124 = vector.load %arg4[%c5_145, %c0_146, %c0_147] : memref<9x128x128xbf16, #tpu.memory_space<vmem>>, vector<1x128x128xbf16>
    %125 = vector.shape_cast %124 : vector<1x128x128xbf16> to vector<128x128xbf16>
    %cst_148 = arith.constant dense<0.000000e+00> : vector<64x128xf32>
    %126 = tpu.matmul %123, %125, %cst_148 {dimension_numbers = #tpu.dot_dimension_numbers<[1], [0], [0], [1], [0, 0, 1, 1], [], []>} : vector<64x128xbf16>, vector<128x128xbf16>, vector<64x128xf32> -> vector<64x128xf32>
    %127 = arith.addf %120, %126 : vector<64x128xf32>
    %c0_149 = arith.constant 0 : index
    %c2_150 = arith.constant 2 : index
    %c0_151 = arith.constant 0 : index
    %c0_152 = arith.constant 0 : index
    %128 = vector.load %arg16[%c0_149, %c2_150, %c0_151, %c0_152] : memref<1x10x10x128xf32, #tpu.memory_space<vmem>>, vector<1x8x8x128xf32>
    %129 = vector.shape_cast %128 : vector<1x8x8x128xf32> to vector<64x128xf32>
    %130 = arith.truncf %129 : vector<64x128xf32> to vector<64x128xbf16>
    %c6_153 = arith.constant 6 : index
    %c0_154 = arith.constant 0 : index
    %c0_155 = arith.constant 0 : index
    %131 = vector.load %arg4[%c6_153, %c0_154, %c0_155] : memref<9x128x128xbf16, #tpu.memory_space<vmem>>, vector<1x128x128xbf16>
    %132 = vector.shape_cast %131 : vector<1x128x128xbf16> to vector<128x128xbf16>
    %cst_156 = arith.constant dense<0.000000e+00> : vector<64x128xf32>
    %133 = tpu.matmul %130, %132, %cst_156 {dimension_numbers = #tpu.dot_dimension_numbers<[1], [0], [0], [1], [0, 0, 1, 1], [], []>} : vector<64x128xbf16>, vector<128x128xbf16>, vector<64x128xf32> -> vector<64x128xf32>
    %134 = arith.addf %127, %133 : vector<64x128xf32>
    %c0_157 = arith.constant 0 : index
    %c2_158 = arith.constant 2 : index
    %c1_159 = arith.constant 1 : index
    %c0_160 = arith.constant 0 : index
    %135 = vector.load %arg16[%c0_157, %c2_158, %c1_159, %c0_160] : memref<1x10x10x128xf32, #tpu.memory_space<vmem>>, vector<1x8x8x128xf32>
    %136 = vector.shape_cast %135 : vector<1x8x8x128xf32> to vector<64x128xf32>
    %137 = arith.truncf %136 : vector<64x128xf32> to vector<64x128xbf16>
    %c7_161 = arith.constant 7 : index
    %c0_162 = arith.constant 0 : index
    %c0_163 = arith.constant 0 : index
    %138 = vector.load %arg4[%c7_161, %c0_162, %c0_163] : memref<9x128x128xbf16, #tpu.memory_space<vmem>>, vector<1x128x128xbf16>
    %139 = vector.shape_cast %138 : vector<1x128x128xbf16> to vector<128x128xbf16>
    %cst_164 = arith.constant dense<0.000000e+00> : vector<64x128xf32>
    %140 = tpu.matmul %137, %139, %cst_164 {dimension_numbers = #tpu.dot_dimension_numbers<[1], [0], [0], [1], [0, 0, 1, 1], [], []>} : vector<64x128xbf16>, vector<128x128xbf16>, vector<64x128xf32> -> vector<64x128xf32>
    %141 = arith.addf %134, %140 : vector<64x128xf32>
    %c0_165 = arith.constant 0 : index
    %c2_166 = arith.constant 2 : index
    %c2_167 = arith.constant 2 : index
    %c0_168 = arith.constant 0 : index
    %142 = vector.load %arg16[%c0_165, %c2_166, %c2_167, %c0_168] : memref<1x10x10x128xf32, #tpu.memory_space<vmem>>, vector<1x8x8x128xf32>
    %143 = vector.shape_cast %142 : vector<1x8x8x128xf32> to vector<64x128xf32>
    %144 = arith.truncf %143 : vector<64x128xf32> to vector<64x128xbf16>
    %c8_169 = arith.constant 8 : index
    %c0_170 = arith.constant 0 : index
    %c0_171 = arith.constant 0 : index
    %145 = vector.load %arg4[%c8_169, %c0_170, %c0_171] : memref<9x128x128xbf16, #tpu.memory_space<vmem>>, vector<1x128x128xbf16>
    %146 = vector.shape_cast %145 : vector<1x128x128xbf16> to vector<128x128xbf16>
    %cst_172 = arith.constant dense<0.000000e+00> : vector<64x128xf32>
    %147 = tpu.matmul %144, %146, %cst_172 {dimension_numbers = #tpu.dot_dimension_numbers<[1], [0], [0], [1], [0, 0, 1, 1], [], []>} : vector<64x128xbf16>, vector<128x128xbf16>, vector<64x128xf32> -> vector<64x128xf32>
    %148 = arith.addf %141, %147 : vector<64x128xf32>
    %c0_173 = arith.constant 0 : index
    %c0_174 = arith.constant 0 : index
    %149 = vector.load %arg5[%c0_173, %c0_174] : memref<1x128xf32, #tpu.memory_space<vmem>>, vector<1x128xf32>
    %150 = vector.broadcast %149 : vector<1x128xf32> to vector<64x128xf32>
    %151 = arith.addf %148, %150 : vector<64x128xf32>
    %cst_175 = arith.constant 0.000000e+00 : f32
    %152 = vector.broadcast %cst_175 : f32 to vector<64x128xf32>
    %153 = arith.maximumf %151, %152 : vector<64x128xf32>
    %c0_176 = arith.constant 0 : index
    %c0_177 = arith.constant 0 : index
    %154 = vector.load %arg8[%c0_176, %c0_177] : memref<1x128xf32, #tpu.memory_space<vmem>>, vector<1x128xf32>
    %155 = vector.broadcast %154 : vector<1x128xf32> to vector<64x128xf32>
    %156 = arith.mulf %153, %155 : vector<64x128xf32>
    %c0_178 = arith.constant 0 : index
    %c0_179 = arith.constant 0 : index
    %157 = vector.load %arg9[%c0_178, %c0_179] : memref<1x128xf32, #tpu.memory_space<vmem>>, vector<1x128xf32>
    %158 = vector.broadcast %157 : vector<1x128xf32> to vector<64x128xf32>
    %159 = arith.addf %156, %158 : vector<64x128xf32>
    %160 = vector.shape_cast %159 : vector<64x128xf32> to vector<4x2x8x128xf32>
    %cst_180 = arith.constant dense<0xFF800000> : vector<4x8x128xf32>
    %161 = vector.multi_reduction <maximumf>, %160, %cst_180 [1] : vector<4x2x8x128xf32> to vector<4x8x128xf32>
    %c0_181 = arith.constant 0 : index
    %c0_182 = arith.constant 0 : index
    %c0_183 = arith.constant 0 : index
    %162 = vector.load %arg18[%c0_181, %c0_182, %c0_183] : memref<4x8x128xf32, #tpu.memory_space<vmem>>, vector<4x8x128xf32>
    tpu.vector_store %arg18[%c0_181, %c0_182, %c0_183], %161 {strides = array<i32>} : memref<4x8x128xf32, #tpu.memory_space<vmem>>, vector<4x8x128xf32>,
    %c0_184 = arith.constant 0 : index
    %c0_185 = arith.constant 0 : index
    %c0_186 = arith.constant 0 : index
    %163 = tpu.strided_load %arg18[%c0_184, %c0_185, %c0_186] {strides = array<i32: 1, 2, 1>} : memref<4x8x128xf32, #tpu.memory_space<vmem>>, vector<4x4x128xf32>
    %c0_187 = arith.constant 0 : index
    %c1_188 = arith.constant 1 : index
    %c0_189 = arith.constant 0 : index
    %164 = tpu.strided_load %arg18[%c0_187, %c1_188, %c0_189] {strides = array<i32: 1, 2, 1>} : memref<4x8x128xf32, #tpu.memory_space<vmem>>, vector<4x4x128xf32>
    %165 = arith.maximumf %163, %164 : vector<4x4x128xf32>
    %166 = vector.shape_cast %165 : vector<4x4x128xf32> to vector<1x4x4x128xf32>
    %167 = vector.extract_strided_slice %166 {offsets = [0, 0, 0, 0], sizes = [1, 1, 1, 128], strides = [1, 1, 1, 1]} : vector<1x4x4x128xf32> to vector<1x1x1x128xf32>
    %168 = vector.shape_cast %167 : vector<1x1x1x128xf32> to vector<1x128xf32>
    %169 = arith.truncf %168 : vector<1x128xf32> to vector<1x128xbf16>
    %c0_190 = arith.constant 0 : index
    %c0_191 = arith.constant 0 : index
    %c0_192 = arith.constant 0 : index
    %170 = vector.load %arg10[%c0_190, %c0_191, %c0_192] : memref<16x128x128xbf16, #tpu.memory_space<vmem>>, vector<1x128x128xbf16>
    %171 = vector.shape_cast %170 : vector<1x128x128xbf16> to vector<128x128xbf16>
    %cst_193 = arith.constant dense<0.000000e+00> : vector<1x128xf32>
    %172 = tpu.matmul %169, %171, %cst_193 {dimension_numbers = #tpu.dot_dimension_numbers<[1], [0], [0], [1], [0, 0, 1, 1], [], []>} : vector<1x128xbf16>, vector<128x128xbf16>, vector<1x128xf32> -> vector<1x128xf32>
    %173 = vector.extract_strided_slice %166 {offsets = [0, 0, 1, 0], sizes = [1, 1, 1, 128], strides = [1, 1, 1, 1]} : vector<1x4x4x128xf32> to vector<1x1x1x128xf32>
    %174 = vector.shape_cast %173 : vector<1x1x1x128xf32> to vector<1x128xf32>
    %175 = arith.truncf %174 : vector<1x128xf32> to vector<1x128xbf16>
    %c1_194 = arith.constant 1 : index
    %c0_195 = arith.constant 0 : index
    %c0_196 = arith.constant 0 : index
    %176 = vector.load %arg10[%c1_194, %c0_195, %c0_196] : memref<16x128x128xbf16, #tpu.memory_space<vmem>>, vector<1x128x128xbf16>
    %177 = vector.shape_cast %176 : vector<1x128x128xbf16> to vector<128x128xbf16>
    %cst_197 = arith.constant dense<0.000000e+00> : vector<1x128xf32>
    %178 = tpu.matmul %175, %177, %cst_197 {dimension_numbers = #tpu.dot_dimension_numbers<[1], [0], [0], [1], [0, 0, 1, 1], [], []>} : vector<1x128xbf16>, vector<128x128xbf16>, vector<1x128xf32> -> vector<1x128xf32>
    %179 = arith.addf %172, %178 : vector<1x128xf32>
    %180 = vector.extract_strided_slice %166 {offsets = [0, 0, 2, 0], sizes = [1, 1, 1, 128], strides = [1, 1, 1, 1]} : vector<1x4x4x128xf32> to vector<1x1x1x128xf32>
    %181 = vector.shape_cast %180 : vector<1x1x1x128xf32> to vector<1x128xf32>
    %182 = arith.truncf %181 : vector<1x128xf32> to vector<1x128xbf16>
    %c2_198 = arith.constant 2 : index
    %c0_199 = arith.constant 0 : index
    %c0_200 = arith.constant 0 : index
    %183 = vector.load %arg10[%c2_198, %c0_199, %c0_200] : memref<16x128x128xbf16, #tpu.memory_space<vmem>>, vector<1x128x128xbf16>
    %184 = vector.shape_cast %183 : vector<1x128x128xbf16> to vector<128x128xbf16>
    %cst_201 = arith.constant dense<0.000000e+00> : vector<1x128xf32>
    %185 = tpu.matmul %182, %184, %cst_201 {dimension_numbers = #tpu.dot_dimension_numbers<[1], [0], [0], [1], [0, 0, 1, 1], [], []>} : vector<1x128xbf16>, vector<128x128xbf16>, vector<1x128xf32> -> vector<1x128xf32>
    %186 = arith.addf %179, %185 : vector<1x128xf32>
    %187 = vector.extract_strided_slice %166 {offsets = [0, 0, 3, 0], sizes = [1, 1, 1, 128], strides = [1, 1, 1, 1]} : vector<1x4x4x128xf32> to vector<1x1x1x128xf32>
    %188 = vector.shape_cast %187 : vector<1x1x1x128xf32> to vector<1x128xf32>
    %189 = arith.truncf %188 : vector<1x128xf32> to vector<1x128xbf16>
    %c3_202 = arith.constant 3 : index
    %c0_203 = arith.constant 0 : index
    %c0_204 = arith.constant 0 : index
    %190 = vector.load %arg10[%c3_202, %c0_203, %c0_204] : memref<16x128x128xbf16, #tpu.memory_space<vmem>>, vector<1x128x128xbf16>
    %191 = vector.shape_cast %190 : vector<1x128x128xbf16> to vector<128x128xbf16>
    %cst_205 = arith.constant dense<0.000000e+00> : vector<1x128xf32>
    %192 = tpu.matmul %189, %191, %cst_205 {dimension_numbers = #tpu.dot_dimension_numbers<[1], [0], [0], [1], [0, 0, 1, 1], [], []>} : vector<1x128xbf16>, vector<128x128xbf16>, vector<1x128xf32> -> vector<1x128xf32>
    %193 = arith.addf %186, %192 : vector<1x128xf32>
    %194 = vector.extract_strided_slice %166 {offsets = [0, 1, 0, 0], sizes = [1, 1, 1, 128], strides = [1, 1, 1, 1]} : vector<1x4x4x128xf32> to vector<1x1x1x128xf32>
    %195 = vector.shape_cast %194 : vector<1x1x1x128xf32> to vector<1x128xf32>
    %196 = arith.truncf %195 : vector<1x128xf32> to vector<1x128xbf16>
    %c4_206 = arith.constant 4 : index
    %c0_207 = arith.constant 0 : index
    %c0_208 = arith.constant 0 : index
    %197 = vector.load %arg10[%c4_206, %c0_207, %c0_208] : memref<16x128x128xbf16, #tpu.memory_space<vmem>>, vector<1x128x128xbf16>
    %198 = vector.shape_cast %197 : vector<1x128x128xbf16> to vector<128x128xbf16>
    %cst_209 = arith.constant dense<0.000000e+00> : vector<1x128xf32>
    %199 = tpu.matmul %196, %198, %cst_209 {dimension_numbers = #tpu.dot_dimension_numbers<[1], [0], [0], [1], [0, 0, 1, 1], [], []>} : vector<1x128xbf16>, vector<128x128xbf16>, vector<1x128xf32> -> vector<1x128xf32>
    %200 = arith.addf %193, %199 : vector<1x128xf32>
    %201 = vector.extract_strided_slice %166 {offsets = [0, 1, 1, 0], sizes = [1, 1, 1, 128], strides = [1, 1, 1, 1]} : vector<1x4x4x128xf32> to vector<1x1x1x128xf32>
    %202 = vector.shape_cast %201 : vector<1x1x1x128xf32> to vector<1x128xf32>
    %203 = arith.truncf %202 : vector<1x128xf32> to vector<1x128xbf16>
    %c5_210 = arith.constant 5 : index
    %c0_211 = arith.constant 0 : index
    %c0_212 = arith.constant 0 : index
    %204 = vector.load %arg10[%c5_210, %c0_211, %c0_212] : memref<16x128x128xbf16, #tpu.memory_space<vmem>>, vector<1x128x128xbf16>
    %205 = vector.shape_cast %204 : vector<1x128x128xbf16> to vector<128x128xbf16>
    %cst_213 = arith.constant dense<0.000000e+00> : vector<1x128xf32>
    %206 = tpu.matmul %203, %205, %cst_213 {dimension_numbers = #tpu.dot_dimension_numbers<[1], [0], [0], [1], [0, 0, 1, 1], [], []>} : vector<1x128xbf16>, vector<128x128xbf16>, vector<1x128xf32> -> vector<1x128xf32>
    %207 = arith.addf %200, %206 : vector<1x128xf32>
    %208 = vector.extract_strided_slice %166 {offsets = [0, 1, 2, 0], sizes = [1, 1, 1, 128], strides = [1, 1, 1, 1]} : vector<1x4x4x128xf32> to vector<1x1x1x128xf32>
    %209 = vector.shape_cast %208 : vector<1x1x1x128xf32> to vector<1x128xf32>
    %210 = arith.truncf %209 : vector<1x128xf32> to vector<1x128xbf16>
    %c6_214 = arith.constant 6 : index
    %c0_215 = arith.constant 0 : index
    %c0_216 = arith.constant 0 : index
    %211 = vector.load %arg10[%c6_214, %c0_215, %c0_216] : memref<16x128x128xbf16, #tpu.memory_space<vmem>>, vector<1x128x128xbf16>
    %212 = vector.shape_cast %211 : vector<1x128x128xbf16> to vector<128x128xbf16>
    %cst_217 = arith.constant dense<0.000000e+00> : vector<1x128xf32>
    %213 = tpu.matmul %210, %212, %cst_217 {dimension_numbers = #tpu.dot_dimension_numbers<[1], [0], [0], [1], [0, 0, 1, 1], [], []>} : vector<1x128xbf16>, vector<128x128xbf16>, vector<1x128xf32> -> vector<1x128xf32>
    %214 = arith.addf %207, %213 : vector<1x128xf32>
    %215 = vector.extract_strided_slice %166 {offsets = [0, 1, 3, 0], sizes = [1, 1, 1, 128], strides = [1, 1, 1, 1]} : vector<1x4x4x128xf32> to vector<1x1x1x128xf32>
    %216 = vector.shape_cast %215 : vector<1x1x1x128xf32> to vector<1x128xf32>
    %217 = arith.truncf %216 : vector<1x128xf32> to vector<1x128xbf16>
    %c7_218 = arith.constant 7 : index
    %c0_219 = arith.constant 0 : index
    %c0_220 = arith.constant 0 : index
    %218 = vector.load %arg10[%c7_218, %c0_219, %c0_220] : memref<16x128x128xbf16, #tpu.memory_space<vmem>>, vector<1x128x128xbf16>
    %219 = vector.shape_cast %218 : vector<1x128x128xbf16> to vector<128x128xbf16>
    %cst_221 = arith.constant dense<0.000000e+00> : vector<1x128xf32>
    %220 = tpu.matmul %217, %219, %cst_221 {dimension_numbers = #tpu.dot_dimension_numbers<[1], [0], [0], [1], [0, 0, 1, 1], [], []>} : vector<1x128xbf16>, vector<128x128xbf16>, vector<1x128xf32> -> vector<1x128xf32>
    %221 = arith.addf %214, %220 : vector<1x128xf32>
    %222 = vector.extract_strided_slice %166 {offsets = [0, 2, 0, 0], sizes = [1, 1, 1, 128], strides = [1, 1, 1, 1]} : vector<1x4x4x128xf32> to vector<1x1x1x128xf32>
    %223 = vector.shape_cast %222 : vector<1x1x1x128xf32> to vector<1x128xf32>
    %224 = arith.truncf %223 : vector<1x128xf32> to vector<1x128xbf16>
    %c8_222 = arith.constant 8 : index
    %c0_223 = arith.constant 0 : index
    %c0_224 = arith.constant 0 : index
    %225 = vector.load %arg10[%c8_222, %c0_223, %c0_224] : memref<16x128x128xbf16, #tpu.memory_space<vmem>>, vector<1x128x128xbf16>
    %226 = vector.shape_cast %225 : vector<1x128x128xbf16> to vector<128x128xbf16>
    %cst_225 = arith.constant dense<0.000000e+00> : vector<1x128xf32>
    %227 = tpu.matmul %224, %226, %cst_225 {dimension_numbers = #tpu.dot_dimension_numbers<[1], [0], [0], [1], [0, 0, 1, 1], [], []>} : vector<1x128xbf16>, vector<128x128xbf16>, vector<1x128xf32> -> vector<1x128xf32>
    %228 = arith.addf %221, %227 : vector<1x128xf32>
    %229 = vector.extract_strided_slice %166 {offsets = [0, 2, 1, 0], sizes = [1, 1, 1, 128], strides = [1, 1, 1, 1]} : vector<1x4x4x128xf32> to vector<1x1x1x128xf32>
    %230 = vector.shape_cast %229 : vector<1x1x1x128xf32> to vector<1x128xf32>
    %231 = arith.truncf %230 : vector<1x128xf32> to vector<1x128xbf16>
    %c9 = arith.constant 9 : index
    %c0_226 = arith.constant 0 : index
    %c0_227 = arith.constant 0 : index
    %232 = vector.load %arg10[%c9, %c0_226, %c0_227] : memref<16x128x128xbf16, #tpu.memory_space<vmem>>, vector<1x128x128xbf16>
    %233 = vector.shape_cast %232 : vector<1x128x128xbf16> to vector<128x128xbf16>
    %cst_228 = arith.constant dense<0.000000e+00> : vector<1x128xf32>
    %234 = tpu.matmul %231, %233, %cst_228 {dimension_numbers = #tpu.dot_dimension_numbers<[1], [0], [0], [1], [0, 0, 1, 1], [], []>} : vector<1x128xbf16>, vector<128x128xbf16>, vector<1x128xf32> -> vector<1x128xf32>
    %235 = arith.addf %228, %234 : vector<1x128xf32>
    %236 = vector.extract_strided_slice %166 {offsets = [0, 2, 2, 0], sizes = [1, 1, 1, 128], strides = [1, 1, 1, 1]} : vector<1x4x4x128xf32> to vector<1x1x1x128xf32>
    %237 = vector.shape_cast %236 : vector<1x1x1x128xf32> to vector<1x128xf32>
    %238 = arith.truncf %237 : vector<1x128xf32> to vector<1x128xbf16>
    %c10 = arith.constant 10 : index
    %c0_229 = arith.constant 0 : index
    %c0_230 = arith.constant 0 : index
    %239 = vector.load %arg10[%c10, %c0_229, %c0_230] : memref<16x128x128xbf16, #tpu.memory_space<vmem>>, vector<1x128x128xbf16>
    %240 = vector.shape_cast %239 : vector<1x128x128xbf16> to vector<128x128xbf16>
    %cst_231 = arith.constant dense<0.000000e+00> : vector<1x128xf32>
    %241 = tpu.matmul %238, %240, %cst_231 {dimension_numbers = #tpu.dot_dimension_numbers<[1], [0], [0], [1], [0, 0, 1, 1], [], []>} : vector<1x128xbf16>, vector<128x128xbf16>, vector<1x128xf32> -> vector<1x128xf32>
    %242 = arith.addf %235, %241 : vector<1x128xf32>
    %243 = vector.extract_strided_slice %166 {offsets = [0, 2, 3, 0], sizes = [1, 1, 1, 128], strides = [1, 1, 1, 1]} : vector<1x4x4x128xf32> to vector<1x1x1x128xf32>
    %244 = vector.shape_cast %243 : vector<1x1x1x128xf32> to vector<1x128xf32>
    %245 = arith.truncf %244 : vector<1x128xf32> to vector<1x128xbf16>
    %c11 = arith.constant 11 : index
    %c0_232 = arith.constant 0 : index
    %c0_233 = arith.constant 0 : index
    %246 = vector.load %arg10[%c11, %c0_232, %c0_233] : memref<16x128x128xbf16, #tpu.memory_space<vmem>>, vector<1x128x128xbf16>
    %247 = vector.shape_cast %246 : vector<1x128x128xbf16> to vector<128x128xbf16>
    %cst_234 = arith.constant dense<0.000000e+00> : vector<1x128xf32>
    %248 = tpu.matmul %245, %247, %cst_234 {dimension_numbers = #tpu.dot_dimension_numbers<[1], [0], [0], [1], [0, 0, 1, 1], [], []>} : vector<1x128xbf16>, vector<128x128xbf16>, vector<1x128xf32> -> vector<1x128xf32>
    %249 = arith.addf %242, %248 : vector<1x128xf32>
    %250 = vector.extract_strided_slice %166 {offsets = [0, 3, 0, 0], sizes = [1, 1, 1, 128], strides = [1, 1, 1, 1]} : vector<1x4x4x128xf32> to vector<1x1x1x128xf32>
    %251 = vector.shape_cast %250 : vector<1x1x1x128xf32> to vector<1x128xf32>
    %252 = arith.truncf %251 : vector<1x128xf32> to vector<1x128xbf16>
    %c12 = arith.constant 12 : index
    %c0_235 = arith.constant 0 : index
    %c0_236 = arith.constant 0 : index
    %253 = vector.load %arg10[%c12, %c0_235, %c0_236] : memref<16x128x128xbf16, #tpu.memory_space<vmem>>, vector<1x128x128xbf16>
    %254 = vector.shape_cast %253 : vector<1x128x128xbf16> to vector<128x128xbf16>
    %cst_237 = arith.constant dense<0.000000e+00> : vector<1x128xf32>
    %255 = tpu.matmul %252, %254, %cst_237 {dimension_numbers = #tpu.dot_dimension_numbers<[1], [0], [0], [1], [0, 0, 1, 1], [], []>} : vector<1x128xbf16>, vector<128x128xbf16>, vector<1x128xf32> -> vector<1x128xf32>
    %256 = arith.addf %249, %255 : vector<1x128xf32>
    %257 = vector.extract_strided_slice %166 {offsets = [0, 3, 1, 0], sizes = [1, 1, 1, 128], strides = [1, 1, 1, 1]} : vector<1x4x4x128xf32> to vector<1x1x1x128xf32>
    %258 = vector.shape_cast %257 : vector<1x1x1x128xf32> to vector<1x128xf32>
    %259 = arith.truncf %258 : vector<1x128xf32> to vector<1x128xbf16>
    %c13 = arith.constant 13 : index
    %c0_238 = arith.constant 0 : index
    %c0_239 = arith.constant 0 : index
    %260 = vector.load %arg10[%c13, %c0_238, %c0_239] : memref<16x128x128xbf16, #tpu.memory_space<vmem>>, vector<1x128x128xbf16>
    %261 = vector.shape_cast %260 : vector<1x128x128xbf16> to vector<128x128xbf16>
    %cst_240 = arith.constant dense<0.000000e+00> : vector<1x128xf32>
    %262 = tpu.matmul %259, %261, %cst_240 {dimension_numbers = #tpu.dot_dimension_numbers<[1], [0], [0], [1], [0, 0, 1, 1], [], []>} : vector<1x128xbf16>, vector<128x128xbf16>, vector<1x128xf32> -> vector<1x128xf32>
    %263 = arith.addf %256, %262 : vector<1x128xf32>
    %264 = vector.extract_strided_slice %166 {offsets = [0, 3, 2, 0], sizes = [1, 1, 1, 128], strides = [1, 1, 1, 1]} : vector<1x4x4x128xf32> to vector<1x1x1x128xf32>
    %265 = vector.shape_cast %264 : vector<1x1x1x128xf32> to vector<1x128xf32>
    %266 = arith.truncf %265 : vector<1x128xf32> to vector<1x128xbf16>
    %c14 = arith.constant 14 : index
    %c0_241 = arith.constant 0 : index
    %c0_242 = arith.constant 0 : index
    %267 = vector.load %arg10[%c14, %c0_241, %c0_242] : memref<16x128x128xbf16, #tpu.memory_space<vmem>>, vector<1x128x128xbf16>
    %268 = vector.shape_cast %267 : vector<1x128x128xbf16> to vector<128x128xbf16>
    %cst_243 = arith.constant dense<0.000000e+00> : vector<1x128xf32>
    %269 = tpu.matmul %266, %268, %cst_243 {dimension_numbers = #tpu.dot_dimension_numbers<[1], [0], [0], [1], [0, 0, 1, 1], [], []>} : vector<1x128xbf16>, vector<128x128xbf16>, vector<1x128xf32> -> vector<1x128xf32>
    %270 = arith.addf %263, %269 : vector<1x128xf32>
    %271 = vector.extract_strided_slice %166 {offsets = [0, 3, 3, 0], sizes = [1, 1, 1, 128], strides = [1, 1, 1, 1]} : vector<1x4x4x128xf32> to vector<1x1x1x128xf32>
    %272 = vector.shape_cast %271 : vector<1x1x1x128xf32> to vector<1x128xf32>
    %273 = arith.truncf %272 : vector<1x128xf32> to vector<1x128xbf16>
    %c15 = arith.constant 15 : index
    %c0_244 = arith.constant 0 : index
    %c0_245 = arith.constant 0 : index
    %274 = vector.load %arg10[%c15, %c0_244, %c0_245] : memref<16x128x128xbf16, #tpu.memory_space<vmem>>, vector<1x128x128xbf16>
    %275 = vector.shape_cast %274 : vector<1x128x128xbf16> to vector<128x128xbf16>
    %cst_246 = arith.constant dense<0.000000e+00> : vector<1x128xf32>
    %276 = tpu.matmul %273, %275, %cst_246 {dimension_numbers = #tpu.dot_dimension_numbers<[1], [0], [0], [1], [0, 0, 1, 1], [], []>} : vector<1x128xbf16>, vector<128x128xbf16>, vector<1x128xf32> -> vector<1x128xf32>
    %277 = arith.addf %270, %276 : vector<1x128xf32>
    %c0_247 = arith.constant 0 : index
    %c0_248 = arith.constant 0 : index
    %278 = vector.load %arg11[%c0_247, %c0_248] : memref<1x128xf32, #tpu.memory_space<vmem>>, vector<1x128xf32>
    %279 = arith.addf %277, %278 : vector<1x128xf32>
    %cst_249 = arith.constant 0.000000e+00 : f32
    %280 = vector.broadcast %cst_249 : f32 to vector<1x128xf32>
    %281 = arith.maximumf %279, %280 : vector<1x128xf32>
    %282 = arith.truncf %281 : vector<1x128xf32> to vector<1x128xbf16>
    %c0_250 = arith.constant 0 : index
    %c0_251 = arith.constant 0 : index
    %283 = vector.load %arg12[%c0_250, %c0_251] : memref<128x128xbf16, #tpu.memory_space<vmem>>, vector<128x128xbf16>
    %cst_252 = arith.constant dense<0.000000e+00> : vector<1x128xf32>
    %284 = tpu.matmul %282, %283, %cst_252 {dimension_numbers = #tpu.dot_dimension_numbers<[1], [0], [0], [1], [0, 0, 1, 1], [], []>} : vector<1x128xbf16>, vector<128x128xbf16>, vector<1x128xf32> -> vector<1x128xf32>
    %c0_253 = arith.constant 0 : index
    %c0_254 = arith.constant 0 : index
    %285 = vector.load %arg13[%c0_253, %c0_254] : memref<1x128xf32, #tpu.memory_space<vmem>>, vector<1x128xf32>
    %286 = arith.addf %284, %285 : vector<1x128xf32>
    %c0_255 = arith.constant 0 : index
    %c0_256 = arith.constant 0 : index
    %c0_257 = arith.constant 0 : index
    %287 = vector.load %arg14[%c0_255, %c0_256, %c0_257] : memref<1x1x128xf32, #tpu.memory_space<vmem>>, vector<1x1x128xf32>
    %288 = vector.shape_cast %287 : vector<1x1x128xf32> to vector<1x128xf32>
    %289 = vector.shape_cast %286 : vector<1x128xf32> to vector<1x1x128xf32>
    tpu.vector_store %arg14[%c0_255, %c0_256, %c0_257], %289 {strides = array<i32>} : memref<1x1x128xf32, #tpu.memory_space<vmem>>, vector<1x1x128xf32>,
    return
  }
  func.func @transform_0(%arg0: i32) -> (i32, i32, i32, i32) {
    %c0_i32 = arith.constant 0 : i32
    %c0_i32_0 = arith.constant 0 : i32
    %c0_i32_1 = arith.constant 0 : i32
    %c0_i32_2 = arith.constant 0 : i32
    return %arg0, %c0_i32, %c0_i32_0, %c0_i32_1 : i32, i32, i32, i32
  }
  func.func @transform_1(%arg0: i32) -> (i32, i32, i32) {
    %c0_i32 = arith.constant 0 : i32
    %c0_i32_0 = arith.constant 0 : i32
    %c0_i32_1 = arith.constant 0 : i32
    %c0_i32_2 = arith.constant 0 : i32
    return %c0_i32, %c0_i32_0, %c0_i32_1 : i32, i32, i32
  }
  func.func @transform_2(%arg0: i32) -> (i32, i32) {
    %c0_i32 = arith.constant 0 : i32
    %c0_i32_0 = arith.constant 0 : i32
    %c0_i32_1 = arith.constant 0 : i32
    return %c0_i32, %c0_i32_0 : i32, i32
  }
  func.func @transform_3(%arg0: i32) -> (i32, i32, i32) {
    %c0_i32 = arith.constant 0 : i32
    %c0_i32_0 = arith.constant 0 : i32
    %c0_i32_1 = arith.constant 0 : i32
    %c0_i32_2 = arith.constant 0 : i32
    return %c0_i32, %c0_i32_0, %c0_i32_1 : i32, i32, i32
  }
  func.func @transform_4(%arg0: i32) -> (i32, i32) {
    %c0_i32 = arith.constant 0 : i32
    %c0_i32_0 = arith.constant 0 : i32
    %c0_i32_1 = arith.constant 0 : i32
    return %c0_i32, %c0_i32_0 : i32, i32
  }
  func.func @transform_5(%arg0: i32) -> (i32, i32) {
    %c0_i32 = arith.constant 0 : i32
    %c0_i32_0 = arith.constant 0 : i32
    %c0_i32_1 = arith.constant 0 : i32
    return %c0_i32, %c0_i32_0 : i32, i32
  }
  func.func @transform_6(%arg0: i32) -> (i32, i32) {
    %c0_i32 = arith.constant 0 : i32
    %c0_i32_0 = arith.constant 0 : i32
    %c0_i32_1 = arith.constant 0 : i32
    return %c0_i32, %c0_i32_0 : i32, i32
  }
  func.func @transform_7(%arg0: i32) -> (i32, i32) {
    %c0_i32 = arith.constant 0 : i32
    %c0_i32_0 = arith.constant 0 : i32
    %c0_i32_1 = arith.constant 0 : i32
    return %c0_i32, %c0_i32_0 : i32, i32
  }
  func.func @transform_8(%arg0: i32) -> (i32, i32) {
    %c0_i32 = arith.constant 0 : i32
    %c0_i32_0 = arith.constant 0 : i32
    %c0_i32_1 = arith.constant 0 : i32
    return %c0_i32, %c0_i32_0 : i32, i32
  }
  func.func @transform_9(%arg0: i32) -> (i32, i32, i32) {
    %c0_i32 = arith.constant 0 : i32
    %c0_i32_0 = arith.constant 0 : i32
    %c0_i32_1 = arith.constant 0 : i32
    %c0_i32_2 = arith.constant 0 : i32
    return %c0_i32, %c0_i32_0, %c0_i32_1 : i32, i32, i32
  }
  func.func @transform_10(%arg0: i32) -> (i32, i32) {
    %c0_i32 = arith.constant 0 : i32
    %c0_i32_0 = arith.constant 0 : i32
    %c0_i32_1 = arith.constant 0 : i32
    return %c0_i32, %c0_i32_0 : i32, i32
  }
  func.func @transform_11(%arg0: i32) -> (i32, i32) {
    %c0_i32 = arith.constant 0 : i32
    %c0_i32_0 = arith.constant 0 : i32
    %c0_i32_1 = arith.constant 0 : i32
    return %c0_i32, %c0_i32_0 : i32, i32
  }
  func.func @transform_12(%arg0: i32) -> (i32, i32) {
    %c0_i32 = arith.constant 0 : i32
    %c0_i32_0 = arith.constant 0 : i32
    %c0_i32_1 = arith.constant 0 : i32
    return %c0_i32, %c0_i32_0 : i32, i32
  }
  func.func @transform_13(%arg0: i32) -> (i32, i32, i32) {
    %c0_i32 = arith.constant 0 : i32
    %c0_i32_0 = arith.constant 0 : i32
    %c0_i32_1 = arith.constant 0 : i32
    return %arg0, %c0_i32, %c0_i32_0 : i32, i32, i32
  }
}

</mosaic_0001>

<llo_original>
// kernel: your_code_net_forward.1
$region0: #{your_code_net_forward.1}
  #allocation0 [shape = 'u32[]', space=smem, size = 0x4, offset = 0x4, fixed_abs, tag = 'smem constant byte address 0x4 - core index']
  #allocation1 [shape = 'u32[72,128]{1,0:T(1,128)}', space=vmem, size = 0x9000, scoped, tag = 'internal scratch']
  #allocation2 [shape = 'f32[1,18,18,128]{3,2,1,0:T(8,128)}', space=vmem, size = 0x36000, scoped, tag = 'scratch operand']
  #allocation3 [shape = 'f32[1,10,10,128]{3,2,1,0:T(8,128)}', space=vmem, size = 0x14000, scoped, tag = 'scratch operand']
  #allocation4 [shape = 'f32[8,16,128]{2,1,0:T(8,128)}', space=vmem, size = 0x10000, scoped, tag = 'scratch operand']
  #allocation5 [shape = 'f32[4,8,128]{2,1,0:T(8,128)}', space=vmem, size = 0x4000, scoped, tag = 'scratch operand']
  %s0 = inlined_call_operand.vmem [shape: f32[2,16,16,4], index: 0, kind: input, shape index: {}]
  %s1 = inlined_call_operand.vmem [shape: bf16[9,128,128], index: 1, kind: input, shape index: {}]
  %s2 = inlined_call_operand.vmem [shape: f32[1,128], index: 2, kind: input, shape index: {}]
  %s3 = inlined_call_operand.hbm [shape: bf16[9,128,128], index: 3, kind: input, shape index: {}]
  %s4 = inlined_call_operand.vmem [shape: f32[1,128], index: 4, kind: input, shape index: {}]
  %s5 = inlined_call_operand.vmem [shape: f32[1,128], index: 5, kind: input, shape index: {}]
  %s6 = inlined_call_operand.vmem [shape: f32[1,128], index: 6, kind: input, shape index: {}]
  %s7 = inlined_call_operand.vmem [shape: f32[1,128], index: 7, kind: input, shape index: {}]
  %s8 = inlined_call_operand.vmem [shape: f32[1,128], index: 8, kind: input, shape index: {}]
  %s9 = inlined_call_operand.hbm [shape: bf16[16,128,128], index: 9, kind: input, shape index: {}]
  %s10 = inlined_call_operand.vmem [shape: f32[1,128], index: 10, kind: input, shape index: {}]
  %s11 = inlined_call_operand.vmem [shape: bf16[128,128], index: 11, kind: input, shape index: {}]
  %s12 = inlined_call_operand.hbm [shape: f32[1,128], index: 12, kind: input, shape index: {}]
  %s13 = inlined_call_operand.hbm [shape: f32[2,1,128], index: 13, kind: output, shape index: {}]
  %s14 = sld [smem:[#allocation0]]
  $region97: #{your_code_net_forward.1} parent=0
    _
  %s16 = ssub.s32 1, %s14
  %s17 = scalar_select 0, %s16, %s14
  $region1: #{your_code_net_forward.1} parent=0
    #allocation6 [shape = 'u8[294912]{0}', space=vmem, size = 0x48000, scoped, tag = 'input window, operand 3, single buffered']
    #allocation7 [shape = 's32[2]{0}', space=sflag, size = 0x8, scoped, tag = 'scoped memory for your_code_net_forward.1']
    #allocation8 [shape = 's32[2]{0}', space=sflag, size = 0x8, scoped, tag = 'scoped memory for your_code_net_forward.1']
    #allocation9 [shape = 'u8[524288]{0}', space=vmem, size = 0x80000, scoped, tag = 'input window, operand 9, single buffered']
    #allocation10 [shape = 's32[1]{0}', space=sflag, size = 0x4, scoped, tag = 'scoped memory for your_code_net_forward.1']
    #allocation11 [shape = 'u8[512]{0}', space=vmem, size = 0x400, scoped, tag = 'input window, operand 12, single buffered']
    #allocation12 [shape = 'u8[1024]{0}', space=vmem, size = 0x400, scoped, tag = 'output window, operand 0']
    %18 = vsyncpa [#allocation7], 0
    %19 = vsyncpa [#allocation10], 0
    %20 = vsyncpa [#allocation8], 0
    %s21 = scalar_lea.sflag [#allocation8], 1
    %22 = vsyncpa %s21, 0
    loop: start=0, step=1, limit=4
    $region2: #{your_code_net_forward.1} parent=1 // loop_pre_header
      _
    $region3: #{your_code_net_forward.1} parent=1 // loop_header
      %s24 = sphi 0, %s28
      %p25 = scmp.ge.s32.totalorder %s24, 4
      %s34 = sphi 0, %s36
      %s37 = sphi 0, %s34
      %s38 = sphi 0, %s37
      %s54 = sphi 0, %s38
      %s58 = sphi 0, %s58
      %s60 = sphi 0, %s58
      %s61 = sphi 0, %s60
      %s75 = sphi 0, %s61
      %s79 = sphi 0, %s79
      %s81 = sphi 0, %s79
      %s82 = sphi 0, %s81
      %s96 = sphi 0, %s82
      %s100 = sphi 0, %s100
      %s102 = sphi 0, %s100
      %s103 = sphi 0, %s102
      %s117 = sphi 0, %s103
      %s121 = sphi 0, %s121
      %s123 = sphi 0, %s121
      %s124 = sphi 0, %s123
      %s138 = sphi 0, %s124
      %s142 = sphi 0, %s142
      %s144 = sphi 0, %s142
      %s145 = sphi 0, %s144
      %s159 = sphi 0, %s145
      %s163 = sphi 0, %s163
      %s165 = sphi 0, %s163
      %s166 = sphi 0, %s165
      %s180 = sphi 0, %s166
      %s184 = sphi 0, %s184
      %s186 = sphi 0, %s184
      %s187 = sphi 0, %s186
      %s201 = sphi 0, %s187
      %s205 = sphi 0, %s205
      %s207 = sphi 0, %s205
      %s208 = sphi 0, %s207
      %s222 = sphi 0, %s208
      %s226 = sphi 0, %s226
      %s228 = sphi 0, %s226
      %s229 = sphi 0, %s228
      %s243 = sphi 0, %s229
      %s247 = sphi 0, %s247
      %s249 = sphi 0, %s247
      %s250 = sphi 0, %s249
      %s264 = sphi 0, %s250
      %s268 = sphi 0, %s268
      %s270 = sphi 0, %s268
      %s271 = sphi 0, %s270
      %s285 = sphi 0, %s271
      %s289 = sphi 0, %s289
      %s291 = sphi 0, %s289
      %s292 = sphi 0, %s291
      %s306 = sphi 0, %s292
      %s312 = sphi 0, %s314
      %s315 = sphi 0, %s312
      %s316 = sphi 0, %s315
      %s332 = sphi 0, %s316
    $region4: #{your_code_net_forward.1} parent=1 // loop_header_branch
      %27 = sbr.rel (%p25) target = $region8
    $region5: #{your_code_net_forward.1} parent=1 // loop_body
      %s29 = ssub.s32 %s24, 1
      %s30 = ssub.s32 %s24, 2
      %s31 = sadd.s32 %s24, 1
      %s32 = ssub.s32 %s24, %s31
      %p33 = scmp.eq.s32.totalorder %s32, 0
      %s35 = sadd.s32 %s34, 1
      %s36 = scalar_select %p33, %s34, %s35
      %p39 = pneg %p33
      %p40 = scmp.eq.s32.totalorder %s24, 1
      %p41 = por %p39, %p40
      %p42 = scmp.ne.s32.totalorder %s34, %s37
      %p43 = scmp.eq.s32.totalorder %s24, 0
      %p44 = por %p42, %p43
      %p45 = scmp.ne.s32.totalorder %s34, %s37
      %p46 = scmp.eq.s32.totalorder %s29, 1
      %p47 = por %p45, %p46
      %p48 = scmp.ne.s32.totalorder %s37, %s38
      %p49 = scmp.eq.s32.totalorder %s29, 0
      %p50 = por %p48, %p49
      %p51 = scmp.ne.s32.totalorder %s37, %s38
      %p52 = scmp.eq.s32.totalorder %s30, 1
      %p53 = por %p51, %p52
      %p55 = scmp.ne.s32.totalorder %s38, %s54
      %p56 = scmp.eq.s32.totalorder %s30, 0
      %p57 = por %p55, %p56
      %s59 = sadd.s32 %s58, 1
      %p62 = scmp.eq.s32.totalorder %s24, 1
      %p63 = scmp.ne.s32.totalorder %s58, %s60
      %p64 = scmp.eq.s32.totalorder %s24, 0
      %p65 = por %p63, %p64
      %p66 = scmp.ne.s32.totalorder %s58, %s60
      %p67 = scmp.eq.s32.totalorder %s29, 1
      %p68 = por %p66, %p67
      %p69 = scmp.ne.s32.totalorder %s60, %s61
      %p70 = scmp.eq.s32.totalorder %s29, 0
      %p71 = por %p69, %p70
      %p72 = scmp.ne.s32.totalorder %s60, %s61
      %p73 = scmp.eq.s32.totalorder %s30, 1
      %p74 = por %p72, %p73
      %p76 = scmp.ne.s32.totalorder %s61, %s75
      %p77 = scmp.eq.s32.totalorder %s30, 0
      %p78 = por %p76, %p77
      %s80 = sadd.s32 %s79, 1
      %p83 = scmp.eq.s32.totalorder %s24, 1
      %p84 = scmp.ne.s32.totalorder %s79, %s81
      %p85 = scmp.eq.s32.totalorder %s24, 0
      %p86 = por %p84, %p85
      %p87 = scmp.ne.s32.totalorder %s79, %s81
      %p88 = scmp.eq.s32.totalorder %s29, 1
      %p89 = por %p87, %p88
      %p90 = scmp.ne.s32.totalorder %s81, %s82
      %p91 = scmp.eq.s32.totalorder %s29, 0
      %p92 = por %p90, %p91
      %p93 = scmp.ne.s32.totalorder %s81, %s82
      %p94 = scmp.eq.s32.totalorder %s30, 1
      %p95 = por %p93, %p94
      %p97 = scmp.ne.s32.totalorder %s82, %s96
      %p98 = scmp.eq.s32.totalorder %s30, 0
      %p99 = por %p97, %p98
      %s101 = sadd.s32 %s100, 1
      %p104 = scmp.eq.s32.totalorder %s24, 1
      %p105 = scmp.ne.s32.totalorder %s100, %s102
      %p106 = scmp.eq.s32.totalorder %s24, 0
      %p107 = por %p105, %p106
      %p108 = scmp.ne.s32.totalorder %s100, %s102
      %p109 = scmp.eq.s32.totalorder %s29, 1
      %p110 = por %p108, %p109
      %p111 = scmp.ne.s32.totalorder %s102, %s103
      %p112 = scmp.eq.s32.totalorder %s29, 0
      %p113 = por %p111, %p112
      %p114 = scmp.ne.s32.totalorder %s102, %s103
      %p115 = scmp.eq.s32.totalorder %s30, 1
      %p116 = por %p114, %p115
      %p118 = scmp.ne.s32.totalorder %s103, %s117
      %p119 = scmp.eq.s32.totalorder %s30, 0
      %p120 = por %p118, %p119
      %s122 = sadd.s32 %s121, 1
      %p125 = scmp.eq.s32.totalorder %s24, 1
      %p126 = scmp.ne.s32.totalorder %s121, %s123
      %p127 = scmp.eq.s32.totalorder %s24, 0
      %p128 = por %p126, %p127
      %p129 = scmp.ne.s32.totalorder %s121, %s123
      %p130 = scmp.eq.s32.totalorder %s29, 1
      %p131 = por %p129, %p130
      %p132 = scmp.ne.s32.totalorder %s123, %s124
      %p133 = scmp.eq.s32.totalorder %s29, 0
      %p134 = por %p132, %p133
      %p135 = scmp.ne.s32.totalorder %s123, %s124
      %p136 = scmp.eq.s32.totalorder %s30, 1
      %p137 = por %p135, %p136
      %p139 = scmp.ne.s32.totalorder %s124, %s138
      %p140 = scmp.eq.s32.totalorder %s30, 0
      %p141 = por %p139, %p140
      %s143 = sadd.s32 %s142, 1
      %p146 = scmp.eq.s32.totalorder %s24, 1
      %p147 = scmp.ne.s32.totalorder %s142, %s144
      %p148 = scmp.eq.s32.totalorder %s24, 0
      %p149 = por %p147, %p148
      %p150 = scmp.ne.s32.totalorder %s142, %s144
      %p151 = scmp.eq.s32.totalorder %s29, 1
      %p152 = por %p150, %p151
      %p153 = scmp.ne.s32.totalorder %s144, %s145
      %p154 = scmp.eq.s32.totalorder %s29, 0
      %p155 = por %p153, %p154
      %p156 = scmp.ne.s32.totalorder %s144, %s145
      %p157 = scmp.eq.s32.totalorder %s30, 1
      %p158 = por %p156, %p157
      %p160 = scmp.ne.s32.totalorder %s145, %s159
      %p161 = scmp.eq.s32.totalorder %s30, 0
      %p162 = por %p160, %p161
      %s164 = sadd.s32 %s163, 1
      %p167 = scmp.eq.s32.totalorder %s24, 1
      %p168 = scmp.ne.s32.totalorder %s163, %s165
      %p169 = scmp.eq.s32.totalorder %s24, 0
      %p170 = por %p168, %p169
      %p171 = scmp.ne.s32.totalorder %s163, %s165
      %p172 = scmp.eq.s32.totalorder %s29, 1
      %p173 = por %p171, %p172
      %p174 = scmp.ne.s32.totalorder %s165, %s166
      %p175 = scmp.eq.s32.totalorder %s29, 0
      %p176 = por %p174, %p175
      %p177 = scmp.ne.s32.totalorder %s165, %s166
      %p178 = scmp.eq.s32.totalorder %s30, 1
      %p179 = por %p177, %p178
      %p181 = scmp.ne.s32.totalorder %s166, %s180
      %p182 = scmp.eq.s32.totalorder %s30, 0
      %p183 = por %p181, %p182
      %s185 = sadd.s32 %s184, 1
      %p188 = scmp.eq.s32.totalorder %s24, 1
      %p189 = scmp.ne.s32.totalorder %s184, %s186
      %p190 = scmp.eq.s32.totalorder %s24, 0
      %p191 = por %p189, %p190
      %p192 = scmp.ne.s32.totalorder %s184, %s186
      %p193 = scmp.eq.s32.totalorder %s29, 1
      %p194 = por %p192, %p193
      %p195 = scmp.ne.s32.totalorder %s186, %s187
      %p196 = scmp.eq.s32.totalorder %s29, 0
      %p197 = por %p195, %p196
      %p198 = scmp.ne.s32.totalorder %s186, %s187
      %p199 = scmp.eq.s32.totalorder %s30, 1
      %p200 = por %p198, %p199
      %p202 = scmp.ne.s32.totalorder %s187, %s201
      %p203 = scmp.eq.s32.totalorder %s30, 0
      %p204 = por %p202, %p203
      %s206 = sadd.s32 %s205, 1
      %p209 = scmp.eq.s32.totalorder %s24, 1
      %p210 = scmp.ne.s32.totalorder %s205, %s207
      %p211 = scmp.eq.s32.totalorder %s24, 0
      %p212 = por %p210, %p211
      %p213 = scmp.ne.s32.totalorder %s205, %s207
      %p214 = scmp.eq.s32.totalorder %s29, 1
      %p215 = por %p213, %p214
      %p216 = scmp.ne.s32.totalorder %s207, %s208
      %p217 = scmp.eq.s32.totalorder %s29, 0
      %p218 = por %p216, %p217
      %p219 = scmp.ne.s32.totalorder %s207, %s208
      %p220 = scmp.eq.s32.totalorder %s30, 1
      %p221 = por %p219, %p220
      %p223 = scmp.ne.s32.totalorder %s208, %s222
      %p224 = scmp.eq.s32.totalorder %s30, 0
      %p225 = por %p223, %p224
      %s227 = sadd.s32 %s226, 1
      %p230 = scmp.eq.s32.totalorder %s24, 1
      %p231 = scmp.ne.s32.totalorder %s226, %s228
      %p232 = scmp.eq.s32.totalorder %s24, 0
      %p233 = por %p231, %p232
      %p234 = scmp.ne.s32.totalorder %s226, %s228
      %p235 = scmp.eq.s32.totalorder %s29, 1
      %p236 = por %p234, %p235
      %p237 = scmp.ne.s32.totalorder %s228, %s229
      %p238 = scmp.eq.s32.totalorder %s29, 0
      %p239 = por %p237, %p238
      %p240 = scmp.ne.s32.totalorder %s228, %s229
      %p241 = scmp.eq.s32.totalorder %s30, 1
      %p242 = por %p240, %p241
      %p244 = scmp.ne.s32.totalorder %s229, %s243
      %p245 = scmp.eq.s32.totalorder %s30, 0
      %p246 = por %p244, %p245
      %s248 = sadd.s32 %s247, 1
      %p251 = scmp.eq.s32.totalorder %s24, 1
      %p252 = scmp.ne.s32.totalorder %s247, %s249
      %p253 = scmp.eq.s32.totalorder %s24, 0
      %p254 = por %p252, %p253
      %p255 = scmp.ne.s32.totalorder %s247, %s249
      %p256 = scmp.eq.s32.totalorder %s29, 1
      %p257 = por %p255, %p256
      %p258 = scmp.ne.s32.totalorder %s249, %s250
      %p259 = scmp.eq.s32.totalorder %s29, 0
      %p260 = por %p258, %p259
      %p261 = scmp.ne.s32.totalorder %s249, %s250
      %p262 = scmp.eq.s32.totalorder %s30, 1
      %p263 = por %p261, %p262
      %p265 = scmp.ne.s32.totalorder %s250, %s264
      %p266 = scmp.eq.s32.totalorder %s30, 0
      %p267 = por %p265, %p266
      %s269 = sadd.s32 %s268, 1
      %p272 = scmp.eq.s32.totalorder %s24, 1
      %p273 = scmp.ne.s32.totalorder %s268, %s270
      %p274 = scmp.eq.s32.totalorder %s24, 0
      %p275 = por %p273, %p274
      %p276 = scmp.ne.s32.totalorder %s268, %s270
      %p277 = scmp.eq.s32.totalorder %s29, 1
      %p278 = por %p276, %p277
      %p279 = scmp.ne.s32.totalorder %s270, %s271
      %p280 = scmp.eq.s32.totalorder %s29, 0
      %p281 = por %p279, %p280
      %p282 = scmp.ne.s32.totalorder %s270, %s271
      %p283 = scmp.eq.s32.totalorder %s30, 1
      %p284 = por %p282, %p283
      %p286 = scmp.ne.s32.totalorder %s271, %s285
      %p287 = scmp.eq.s32.totalorder %s30, 0
      %p288 = por %p286, %p287
      %s290 = sadd.s32 %s289, 1
      %p293 = scmp.eq.s32.totalorder %s24, 1
      %p294 = scmp.ne.s32.totalorder %s289, %s291
      %p295 = scmp.eq.s32.totalorder %s24, 0
      %p296 = por %p294, %p295
      %p297 = scmp.ne.s32.totalorder %s289, %s291
      %p298 = scmp.eq.s32.totalorder %s29, 1
      %p299 = por %p297, %p298
      %p300 = scmp.ne.s32.totalorder %s291, %s292
      %p301 = scmp.eq.s32.totalorder %s29, 0
      %p302 = por %p300, %p301
      %p303 = scmp.ne.s32.totalorder %s291, %s292
      %p304 = scmp.eq.s32.totalorder %s30, 1
      %p305 = por %p303, %p304
      %p307 = scmp.ne.s32.totalorder %s292, %s306
      %p308 = scmp.eq.s32.totalorder %s30, 0
      %p309 = por %p307, %p308
      %s310 = ssub.s32 %s24, %s31
      %p311 = scmp.eq.s32.totalorder %s310, 0
      %s313 = sadd.s32 %s312, 1
      %s314 = scalar_select %p311, %s312, %s313
      %p317 = pneg %p311
      %p318 = scmp.eq.s32.totalorder %s24, 1
      %p319 = por %p317, %p318
      %p320 = scmp.ne.s32.totalorder %s312, %s315
      %p321 = scmp.eq.s32.totalorder %s24, 0
      %p322 = por %p320, %p321
      %p323 = scmp.ne.s32.totalorder %s312, %s315
      %p324 = scmp.eq.s32.totalorder %s29, 1
      %p325 = por %p323, %p324
      %p326 = scmp.ne.s32.totalorder %s315, %s316
      %p327 = scmp.eq.s32.totalorder %s29, 0
      %p328 = por %p326, %p327
      %p329 = scmp.ne.s32.totalorder %s315, %s316
      %p330 = scmp.eq.s32.totalorder %s30, 1
      %p331 = por %p329, %p330
      %p333 = scmp.ne.s32.totalorder %s316, %s332
      %p334 = scmp.eq.s32.totalorder %s30, 0
      %p335 = por %p333, %p334
      %p336 = scmp.le.s32.totalorder 1, %s24
      %p337 = scmp.lt.s32.totalorder %s24, 3
      %p338 = pnand %p336, %p337
      %p339 = pneg %p338
      // Predicated region
      $region9: #{your_code_net_forward.1} parent=5 // pred_check
        _
      $region10: #{your_code_net_forward.1} parent=5 // pred_check_branch
        %341 = sbr.rel (%p338) target = $region12
      $region11: #{your_code_net_forward.1} parent=5 // pred_region
        %s342 = ssub.s32 %s24, 1
        // Predicated region
        $region13: #{your_code_net_forward.1} parent=11 // pred_check
          %p343 = pneg %p71
        $region14: #{your_code_net_forward.1} parent=11 // pred_check_branch
          %345 = sbr.rel (%p343) target = $region16
        $region15: #{your_code_net_forward.1} parent=11 // pred_region
          _
        $region16: #{your_code_net_forward.1} parent=11 // pred_fallthru
          _
        // Predicated region
        $region17: #{your_code_net_forward.1} parent=11 // pred_check
          %p346 = pneg %p92
        $region18: #{your_code_net_forward.1} parent=11 // pred_check_branch
          %348 = sbr.rel (%p346) target = $region20
        $region19: #{your_code_net_forward.1} parent=11 // pred_region
          _
        $region20: #{your_code_net_forward.1} parent=11 // pred_fallthru
          _
        // Predicated region
        $region21: #{your_code_net_forward.1} parent=11 // pred_check
          %p349 = pneg %p113
        $region22: #{your_code_net_forward.1} parent=11 // pred_check_branch
          %351 = sbr.rel (%p349) target = $region24
        $region23: #{your_code_net_forward.1} parent=11 // pred_region
          %353 = vsyncadd [#allocation7], 0
          %s354 = sshll.u32 %s3, 4
          %s355 = int_to_ptr.hbm [resolvable:$true] %s354
          %s356 = sshll.u32 [#allocation6], 4
          %s357 = int_to_ptr.vmem [resolvable:$true] %s356
          %362 = dma.hbm_to_vmem [thread:$0]  %s355, 9216, %s357, [#allocation7], 64, 64, 4
        $region24: #{your_code_net_forward.1} parent=11 // pred_fallthru
          _
        // Predicated region
        $region25: #{your_code_net_forward.1} parent=11 // pred_check
          %p363 = pneg %p134
        $region26: #{your_code_net_forward.1} parent=11 // pred_check_branch
          %365 = sbr.rel (%p363) target = $region28
        $region27: #{your_code_net_forward.1} parent=11 // pred_region
          _
        $region28: #{your_code_net_forward.1} parent=11 // pred_fallthru
          _
        // Predicated region
        $region29: #{your_code_net_forward.1} parent=11 // pred_check
          %p366 = pneg %p155
        $region30: #{your_code_net_forward.1} parent=11 // pred_check_branch
          %368 = sbr.rel (%p366) target = $region32
        $region31: #{your_code_net_forward.1} parent=11 // pred_region
          _
        $region32: #{your_code_net_forward.1} parent=11 // pred_fallthru
          _
        // Predicated region
        $region33: #{your_code_net_forward.1} parent=11 // pred_check
          %p369 = pneg %p176
        $region34: #{your_code_net_forward.1} parent=11 // pred_check_branch
          %371 = sbr.rel (%p369) target = $region36
        $region35: #{your_code_net_forward.1} parent=11 // pred_region
          _
        $region36: #{your_code_net_forward.1} parent=11 // pred_fallthru
          _
        // Predicated region
        $region37: #{your_code_net_forward.1} parent=11 // pred_check
          %p372 = pneg %p197
        $region38: #{your_code_net_forward.1} parent=11 // pred_check_branch
          %374 = sbr.rel (%p372) target = $region40
        $region39: #{your_code_net_forward.1} parent=11 // pred_region
          _
        $region40: #{your_code_net_forward.1} parent=11 // pred_fallthru
          _
        // Predicated region
        $region41: #{your_code_net_forward.1} parent=11 // pred_check
          %p375 = pneg %p218
        $region42: #{your_code_net_forward.1} parent=11 // pred_check_branch
          %377 = sbr.rel (%p375) target = $region44
        $region43: #{your_code_net_forward.1} parent=11 // pred_region
          _
        $region44: #{your_code_net_forward.1} parent=11 // pred_fallthru
          _
        // Predicated region
        $region45: #{your_code_net_forward.1} parent=11 // pred_check
          %p378 = pneg %p239
        $region46: #{your_code_net_forward.1} parent=11 // pred_check_branch
          %380 = sbr.rel (%p378) target = $region48
        $region47: #{your_code_net_forward.1} parent=11 // pred_region
          %382 = vsyncadd [#allocation10], 0
          %s383 = sshll.u32 %s9, 4
          %s384 = int_to_ptr.hbm [resolvable:$true] %s383
          %s385 = sshll.u32 [#allocation9], 4
          %s386 = int_to_ptr.vmem [resolvable:$true] %s385
          %391 = dma.hbm_to_vmem [thread:$0]  %s384, 16384, %s386, [#allocation10], 64, 64, 4
        $region48: #{your_code_net_forward.1} parent=11 // pred_fallthru
          _
        // Predicated region
        $region49: #{your_code_net_forward.1} parent=11 // pred_check
          %p392 = pneg %p260
        $region50: #{your_code_net_forward.1} parent=11 // pred_check_branch
          %394 = sbr.rel (%p392) target = $region52
        $region51: #{your_code_net_forward.1} parent=11 // pred_region
          _
        $region52: #{your_code_net_forward.1} parent=11 // pred_fallthru
          _
        // Predicated region
        $region53: #{your_code_net_forward.1} parent=11 // pred_check
          %p395 = pneg %p281
        $region54: #{your_code_net_forward.1} parent=11 // pred_check_branch
          %397 = sbr.rel (%p395) target = $region56
        $region55: #{your_code_net_forward.1} parent=11 // pred_region
          _
        $region56: #{your_code_net_forward.1} parent=11 // pred_fallthru
          _
        // Predicated region
        $region57: #{your_code_net_forward.1} parent=11 // pred_check
          %p398 = pneg %p302
        $region58: #{your_code_net_forward.1} parent=11 // pred_check_branch
          %400 = sbr.rel (%p398) target = $region60
        $region59: #{your_code_net_forward.1} parent=11 // pred_region
          %402 = vsyncadd [#allocation10], 0
          %s404 = sshll.u32 %s12, 4
          %s405 = int_to_ptr.hbm [resolvable:$true] %s404
          %s406 = sshll.u32 [#allocation11], 4
          %s407 = int_to_ptr.vmem [resolvable:$true] %s406
          %409 = dma.hbm_to_vmem [thread:$0]  %s405, 16, %s407, [#allocation10]
        $region60: #{your_code_net_forward.1} parent=11 // pred_fallthru
          _
      $region12: #{your_code_net_forward.1} parent=5 // pred_fallthru
        _
      %p410 = scmp.lt.s32.totalorder %s24, 2
      // Predicated region
      $region61: #{your_code_net_forward.1} parent=5 // pred_check
        %p411 = pneg %p410
      $region62: #{your_code_net_forward.1} parent=5 // pred_check_branch
        %413 = sbr.rel (%p411) target = $region64
      $region63: #{your_code_net_forward.1} parent=5 // pred_region
        // Predicated region
        $region65: #{your_code_net_forward.1} parent=63 // pred_check
          %p414 = pneg %p44
        $region66: #{your_code_net_forward.1} parent=63 // pred_check_branch
          %416 = sbr.rel (%p414) target = $region68
        $region67: #{your_code_net_forward.1} parent=63 // pred_region
          %p417 = scmp.lt.s32.totalorder %s24, 1
          %s418 = scalar_select %p417, %s24, 1
          %s419 = smul.addr %s418, 32
          %s420 = smul.addr %s419, 8
          %s421 = scalar_lea.vmem %s0, %s420
        $region68: #{your_code_net_forward.1} parent=63 // pred_fallthru
          _
      $region64: #{your_code_net_forward.1} parent=5 // pred_fallthru
        _
      %p422 = scmp.le.s32.totalorder 1, %s24
      %p423 = scmp.lt.s32.totalorder %s24, 3
      %p424 = pnand %p422, %p423
      %p425 = pneg %p424
      // Predicated region
      $region69: #{your_code_net_forward.1} parent=5 // pred_check
        _
      $region70: #{your_code_net_forward.1} parent=5 // pred_check_branch
        %427 = sbr.rel (%p424) target = $region72
      $region71: #{your_code_net_forward.1} parent=5 // pred_region
        %s428 = ssub.s32 %s24, 1
        // Predicated region
        $region73: #{your_code_net_forward.1} parent=71 // pred_check
          %p429 = pneg %p113
        $region74: #{your_code_net_forward.1} parent=71 // pred_check_branch
          %431 = sbr.rel (%p429) target = $region76
        $region75: #{your_code_net_forward.1} parent=71 // pred_region
          %433 = dma.done [#allocation7], 9216
        $region76: #{your_code_net_forward.1} parent=71 // pred_fallthru
          _
        // Predicated region
        $region77: #{your_code_net_forward.1} parent=71 // pred_check
          %p434 = pneg %p239
        $region78: #{your_code_net_forward.1} parent=71 // pred_check_branch
          %436 = sbr.rel (%p434) target = $region80
        $region79: #{your_code_net_forward.1} parent=71 // pred_region
          %438 = dma.done [#allocation10], 16384
        $region80: #{your_code_net_forward.1} parent=71 // pred_fallthru
          _
        // Predicated region
        $region81: #{your_code_net_forward.1} parent=71 // pred_check
          %p439 = pneg %p302
        $region82: #{your_code_net_forward.1} parent=71 // pred_check_branch
          %441 = sbr.rel (%p439) target = $region84
        $region83: #{your_code_net_forward.1} parent=71 // pred_region
          %443 = dma.done [#allocation10], 16
        $region84: #{your_code_net_forward.1} parent=71 // pred_fallthru
          _
        %p444 = scmp.lt.s32.totalorder %s29, 1
        %s445 = scalar_select %p444, %s29, 1
        %s446 = smul.addr %s445, 32
        %s447 = smul.addr %s446, 8
        %s448 = scalar_lea.vmem %s0, %s447
        %p449 = pneg %p50
        %p450 = pneg %p47
        %p451 = pneg %p71
        %p452 = pneg %p68
        %p453 = pneg %p92
        %p454 = pneg %p89
        %p455 = pneg %p113
        %p456 = pneg %p110
        %p457 = pneg %p134
        %p458 = pneg %p131
        %p459 = pneg %p155
        %p460 = pneg %p152
        %p461 = pneg %p176
        %p462 = pneg %p173
        %p463 = pneg %p197
        %p464 = pneg %p194
        %p465 = pneg %p218
        %p466 = pneg %p215
        %p467 = pneg %p239
        %p468 = pneg %p236
        %p469 = pneg %p260
        %p470 = pneg %p257
        %p471 = pneg %p281
        %p472 = pneg %p278
        %p473 = pneg %p302
        %p474 = pneg %p299
        %p475 = pneg %p328
        %p476 = pneg %p325
        %s477 = sand.u32 %s315, 1
        %s478 = scalar_lea.sflag [#allocation8], %s477
        %s479 = sand.u32 %s315, 1
        %s480 = scalar_lea.vmem [#allocation12], %s479
        %p481 = scmp.lt.s32.totalorder %s29, 1
        %s482 = scalar_select %p481, %s29, 1
        %s483 = smul.addr %s482, 32
        %s484 = smul.addr %s483, 8
        %s485 = scalar_lea.vmem %s0, %s484
        %486 = vst [vmem:[#allocation2] sm:$0xff] 0.0
        %487 = vst [vmem:[#allocation2 + $0x8] sm:$0xff] 0.0
        %488 = vst [vmem:[#allocation2 + $0x10] sm:$0x3] 0.0
        %489 = vst [vmem:[#allocation2 + $0x18] sm:$0xff] 0.0
        %490 = vst [vmem:[#allocation2 + $0x20] sm:$0xff] 0.0
        %491 = vst [vmem:[#allocation2 + $0x28] sm:$0x3] 0.0
        %492 = vst [vmem:[#allocation2 + $0x30] sm:$0xff] 0.0
        %493 = vst [vmem:[#allocation2 + $0x38] sm:$0xff] 0.0
        %494 = vst [vmem:[#allocation2 + $0x40] sm:$0x3] 0.0
        %495 = vst [vmem:[#allocation2 + $0x48] sm:$0xff] 0.0
        %496 = vst [vmem:[#allocation2 + $0x50] sm:$0xff] 0.0
        %497 = vst [vmem:[#allocation2 + $0x58] sm:$0x3] 0.0
        %498 = vst [vmem:[#allocation2 + $0x60] sm:$0xff] 0.0
        %499 = vst [vmem:[#allocation2 + $0x68] sm:$0xff] 0.0
        %500 = vst [vmem:[#allocation2 + $0x70] sm:$0x3] 0.0
        %501 = vst [vmem:[#allocation2 + $0x78] sm:$0xff] 0.0
        %502 = vst [vmem:[#allocation2 + $0x80] sm:$0xff] 0.0
        %503 = vst [vmem:[#allocation2 + $0x88] sm:$0x3] 0.0
        %504 = vst [vmem:[#allocation2 + $0x90] sm:$0xff] 0.0
        %505 = vst [vmem:[#allocation2 + $0x98] sm:$0xff] 0.0
        %506 = vst [vmem:[#allocation2 + $0xa0] sm:$0x3] 0.0
        %507 = vst [vmem:[#allocation2 + $0xa8] sm:$0xff] 0.0
        %508 = vst [vmem:[#allocation2 + $0xb0] sm:$0xff] 0.0
        %509 = vst [vmem:[#allocation2 + $0xb8] sm:$0x3] 0.0
        %510 = vst [vmem:[#allocation2 + $0xc0] sm:$0xff] 0.0
        %511 = vst [vmem:[#allocation2 + $0xc8] sm:$0xff] 0.0
        %512 = vst [vmem:[#allocation2 + $0xd0] sm:$0x3] 0.0
        %513 = vst [vmem:[#allocation2 + $0xd8] sm:$0xff] 0.0
        %514 = vst [vmem:[#allocation2 + $0xe0] sm:$0xff] 0.0
        %515 = vst [vmem:[#allocation2 + $0xe8] sm:$0x3] 0.0
        %516 = vst [vmem:[#allocation2 + $0xf0] sm:$0xff] 0.0
        %517 = vst [vmem:[#allocation2 + $0xf8] sm:$0xff] 0.0
        %518 = vst [vmem:[#allocation2 + $0x100] sm:$0x3] 0.0
        %519 = vst [vmem:[#allocation2 + $0x108] sm:$0xff] 0.0
        %520 = vst [vmem:[#allocation2 + $0x110] sm:$0xff] 0.0
        %521 = vst [vmem:[#allocation2 + $0x118] sm:$0x3] 0.0
        %522 = vst [vmem:[#allocation2 + $0x120] sm:$0xff] 0.0
        %523 = vst [vmem:[#allocation2 + $0x128] sm:$0xff] 0.0
        %524 = vst [vmem:[#allocation2 + $0x130] sm:$0x3] 0.0
        %525 = vst [vmem:[#allocation2 + $0x138] sm:$0xff] 0.0
        %526 = vst [vmem:[#allocation2 + $0x140] sm:$0xff] 0.0
        %527 = vst [vmem:[#allocation2 + $0x148] sm:$0x3] 0.0
        %528 = vst [vmem:[#allocation2 + $0x150] sm:$0xff] 0.0
        %529 = vst [vmem:[#allocation2 + $0x158] sm:$0xff] 0.0
        %530 = vst [vmem:[#allocation2 + $0x160] sm:$0x3] 0.0
        %531 = vst [vmem:[#allocation2 + $0x168] sm:$0xff] 0.0
        %532 = vst [vmem:[#allocation2 + $0x170] sm:$0xff] 0.0
        %533 = vst [vmem:[#allocation2 + $0x178] sm:$0x3] 0.0
        %534 = vst [vmem:[#allocation2 + $0x180] sm:$0xff] 0.0
        %535 = vst [vmem:[#allocation2 + $0x188] sm:$0xff] 0.0
        %536 = vst [vmem:[#allocation2 + $0x190] sm:$0x3] 0.0
        %537 = vst [vmem:[#allocation2 + $0x198] sm:$0xff] 0.0
        %538 = vst [vmem:[#allocation2 + $0x1a0] sm:$0xff] 0.0
        %539 = vst [vmem:[#allocation2 + $0x1a8] sm:$0x3] 0.0
        %540 = vst [vmem:[#allocation3] sm:$0xff] 0.0
        %541 = vst [vmem:[#allocation3 + $0x8] sm:$0x3] 0.0
        %542 = vst [vmem:[#allocation3 + $0x10] sm:$0xff] 0.0
        %543 = vst [vmem:[#allocation3 + $0x18] sm:$0x3] 0.0
        %544 = vst [vmem:[#allocation3 + $0x20] sm:$0xff] 0.0
        %545 = vst [vmem:[#allocation3 + $0x28] sm:$0x3] 0.0
        %546 = vst [vmem:[#allocation3 + $0x30] sm:$0xff] 0.0
        %547 = vst [vmem:[#allocation3 + $0x38] sm:$0x3] 0.0
        %548 = vst [vmem:[#allocation3 + $0x40] sm:$0xff] 0.0
        %549 = vst [vmem:[#allocation3 + $0x48] sm:$0x3] 0.0
        %550 = vst [vmem:[#allocation3 + $0x50] sm:$0xff] 0.0
        %551 = vst [vmem:[#allocation3 + $0x58] sm:$0x3] 0.0
        %552 = vst [vmem:[#allocation3 + $0x60] sm:$0xff] 0.0
        %553 = vst [vmem:[#allocation3 + $0x68] sm:$0x3] 0.0
        %554 = vst [vmem:[#allocation3 + $0x70] sm:$0xff] 0.0
        %555 = vst [vmem:[#allocation3 + $0x78] sm:$0x3] 0.0
        %556 = vst [vmem:[#allocation3 + $0x80] sm:$0xff] 0.0
        %557 = vst [vmem:[#allocation3 + $0x88] sm:$0x3] 0.0
        %558 = vst [vmem:[#allocation3 + $0x90] sm:$0xff] 0.0
        %559 = vst [vmem:[#allocation3 + $0x98] sm:$0x3] 0.0
        %v560 = vld [vmem:[%s485] sm:$0xff]
        %v561 = vld [vmem:[%s485 + $0x8] sm:$0xff]
        %v562 = vld [vmem:[%s485 + $0x10] sm:$0xff]
        %v563 = vld [vmem:[%s485 + $0x18] sm:$0xff]
        %v564 = vld [vmem:[%s485 + $0x20] sm:$0xff]
        %v565 = vld [vmem:[%s485 + $0x28] sm:$0xff]
        %v566 = vld [vmem:[%s485 + $0x30] sm:$0xff]
        %v567 = vld [vmem:[%s485 + $0x38] sm:$0xff]
        %v568 = vld [vmem:[%s485 + $0x40] sm:$0xff]
        %v569 = vld [vmem:[%s485 + $0x48] sm:$0xff]
        %v570 = vld [vmem:[%s485 + $0x50] sm:$0xff]
        %v571 = vld [vmem:[%s485 + $0x58] sm:$0xff]
        %v572 = vld [vmem:[%s485 + $0x60] sm:$0xff]
        %v573 = vld [vmem:[%s485 + $0x68] sm:$0xff]
        %v574 = vld [vmem:[%s485 + $0x70] sm:$0xff]
        %v575 = vld [vmem:[%s485 + $0x78] sm:$0xff]
        %v576 = vld [vmem:[%s485 + $0x80] sm:$0xff]
        %v577 = vld [vmem:[%s485 + $0x88] sm:$0xff]
        %v578 = vld [vmem:[%s485 + $0x90] sm:$0xff]
        %v579 = vld [vmem:[%s485 + $0x98] sm:$0xff]
        %v580 = vld [vmem:[%s485 + $0xa0] sm:$0xff]
        %v581 = vld [vmem:[%s485 + $0xa8] sm:$0xff]
        %v582 = vld [vmem:[%s485 + $0xb0] sm:$0xff]
        %v583 = vld [vmem:[%s485 + $0xb8] sm:$0xff]
        %v584 = vld [vmem:[%s485 + $0xc0] sm:$0xff]
        %v585 = vld [vmem:[%s485 + $0xc8] sm:$0xff]
        %v586 = vld [vmem:[%s485 + $0xd0] sm:$0xff]
        %v587 = vld [vmem:[%s485 + $0xd8] sm:$0xff]
        %v588 = vld [vmem:[%s485 + $0xe0] sm:$0xff]
        %v589 = vld [vmem:[%s485 + $0xe8] sm:$0xff]
        %v590 = vld [vmem:[%s485 + $0xf0] sm:$0xff]
        %v591 = vld [vmem:[%s485 + $0xf8] sm:$0xff]
        %s592 = scalar_lea.vmem [#allocation2], 24
        %vm593 = vcmask 31744
        %594 = vst.msk [vmem:[%s592 + $0x1] sm:$0xff] %vm593, %v560
        %595 = vst.msk [vmem:[%s592 + $0x9] sm:$0xff] %vm593, %v561
        %596 = vst.msk [vmem:[%s592 + $0x19] sm:$0xff] %vm593, %v562
        %597 = vst.msk [vmem:[%s592 + $0x21] sm:$0xff] %vm593, %v563
        %598 = vst.msk [vmem:[%s592 + $0x31] sm:$0xff] %vm593, %v564
        %599 = vst.msk [vmem:[%s592 + $0x39] sm:$0xff] %vm593, %v565
        %600 = vst.msk [vmem:[%s592 + $0x49] sm:$0xff] %vm593, %v566
        %601 = vst.msk [vmem:[%s592 + $0x51] sm:$0xff] %vm593, %v567
        %602 = vst.msk [vmem:[%s592 + $0x61] sm:$0xff] %vm593, %v568
        %603 = vst.msk [vmem:[%s592 + $0x69] sm:$0xff] %vm593, %v569
        %604 = vst.msk [vmem:[%s592 + $0x79] sm:$0xff] %vm593, %v570
        %605 = vst.msk [vmem:[%s592 + $0x81] sm:$0xff] %vm593, %v571
        %606 = vst.msk [vmem:[%s592 + $0x91] sm:$0xff] %vm593, %v572
        %607 = vst.msk [vmem:[%s592 + $0x99] sm:$0xff] %vm593, %v573
        %608 = vst.msk [vmem:[%s592 + $0xa9] sm:$0xff] %vm593, %v574
        %609 = vst.msk [vmem:[%s592 + $0xb1] sm:$0xff] %vm593, %v575
        %610 = vst.msk [vmem:[%s592 + $0xc1] sm:$0xff] %vm593, %v576
        %611 = vst.msk [vmem:[%s592 + $0xc9] sm:$0xff] %vm593, %v577
        %612 = vst.msk [vmem:[%s592 + $0xd9] sm:$0xff] %vm593, %v578
        %613 = vst.msk [vmem:[%s592 + $0xe1] sm:$0xff] %vm593, %v579
        %614 = vst.msk [vmem:[%s592 + $0xf1] sm:$0xff] %vm593, %v580
        %615 = vst.msk [vmem:[%s592 + $0xf9] sm:$0xff] %vm593, %v581
        %616 = vst.msk [vmem:[%s592 + $0x109] sm:$0xff] %vm593, %v582
        %617 = vst.msk [vmem:[%s592 + $0x111] sm:$0xff] %vm593, %v583
        %618 = vst.msk [vmem:[%s592 + $0x121] sm:$0xff] %vm593, %v584
        %619 = vst.msk [vmem:[%s592 + $0x129] sm:$0xff] %vm593, %v585
        %620 = vst.msk [vmem:[%s592 + $0x139] sm:$0xff] %vm593, %v586
        %621 = vst.msk [vmem:[%s592 + $0x141] sm:$0xff] %vm593, %v587
        %622 = vst.msk [vmem:[%s592 + $0x151] sm:$0xff] %vm593, %v588
        %623 = vst.msk [vmem:[%s592 + $0x159] sm:$0xff] %vm593, %v589
        %624 = vst.msk [vmem:[%s592 + $0x169] sm:$0xff] %vm593, %v590
        %625 = vst.msk [vmem:[%s592 + $0x171] sm:$0xff] %vm593, %v591
        %v626 = vld [vmem:[#allocation2] sm:$0xff]
        %v627 = vld [vmem:[#allocation2 + $0x8] sm:$0xff]
        %v628 = vld [vmem:[#allocation2 + $0x18] sm:$0xff]
        %v629 = vld [vmem:[#allocation2 + $0x20] sm:$0xff]
        %v630 = vld [vmem:[#allocation2 + $0x30] sm:$0xff]
        %v631 = vld [vmem:[#allocation2 + $0x38] sm:$0xff]
        %v632 = vld [vmem:[#allocation2 + $0x48] sm:$0xff]
        %v633 = vld [vmem:[#allocation2 + $0x50] sm:$0xff]
        %v634 = vld [vmem:[#allocation2 + $0x60] sm:$0xff]
        %v635 = vld [vmem:[#allocation2 + $0x68] sm:$0xff]
        %v636 = vld [vmem:[#allocation2 + $0x78] sm:$0xff]
        %v637 = vld [vmem:[#allocation2 + $0x80] sm:$0xff]
        %v638 = vld [vmem:[#allocation2 + $0x90] sm:$0xff]
        %v639 = vld [vmem:[#allocation2 + $0x98] sm:$0xff]
        %v640 = vld [vmem:[#allocation2 + $0xa8] sm:$0xff]
        %v641 = vld [vmem:[#allocation2 + $0xb0] sm:$0xff]
        %v642 = vld [vmem:[#allocation2 + $0xc0] sm:$0xff]
        %v643 = vld [vmem:[#allocation2 + $0xc8] sm:$0xff]
        %v644 = vld [vmem:[#allocation2 + $0xd8] sm:$0xff]
        %v645 = vld [vmem:[#allocation2 + $0xe0] sm:$0xff]
        %v646 = vld [vmem:[#allocation2 + $0xf0] sm:$0xff]
        %v647 = vld [vmem:[#allocation2 + $0xf8] sm:$0xff]
        %v648 = vld [vmem:[#allocation2 + $0x108] sm:$0xff]
        %v649 = vld [vmem:[#allocation2 + $0x110] sm:$0xff]
        %v650 = vld [vmem:[#allocation2 + $0x120] sm:$0xff]
        %v651 = vld [vmem:[#allocation2 + $0x128] sm:$0xff]
        %v652 = vld [vmem:[#allocation2 + $0x138] sm:$0xff]
        %v653 = vld [vmem:[#allocation2 + $0x140] sm:$0xff]
        %v654 = vld [vmem:[#allocation2 + $0x150] sm:$0xff]
        %v655 = vld [vmem:[#allocation2 + $0x158] sm:$0xff]
        %v656 = vld [vmem:[#allocation2 + $0x168] sm:$0xff]
        %v657 = vld [vmem:[#allocation2 + $0x170] sm:$0xff]
        %v658 = vpack.c.bf16 %v627, %v626
        %v659 = vpack.c.bf16 %v629, %v628
        %v660 = vpack.c.bf16 %v631, %v630
        %v661 = vpack.c.bf16 %v633, %v632
        %v662 = vpack.c.bf16 %v635, %v634
        %v663 = vpack.c.bf16 %v637, %v636
        %v664 = vpack.c.bf16 %v639, %v638
        %v665 = vpack.c.bf16 %v641, %v640
        %v666 = vpack.c.bf16 %v643, %v642
        %v667 = vpack.c.bf16 %v645, %v644
        %v668 = vpack.c.bf16 %v647, %v646
        %v669 = vpack.c.bf16 %v649, %v648
        %v670 = vpack.c.bf16 %v651, %v650
        %v671 = vpack.c.bf16 %v653, %v652
        %v672 = vpack.c.bf16 %v655, %v654
        %v673 = vpack.c.bf16 %v657, %v656
        %v674 = vld [vmem:[%s1] sm:$0xf]
        %v675 = vld [vmem:[%s1 + $0x4] sm:$0xf]
        %v676 = vld [vmem:[%s1 + $0x8] sm:$0xf]
        %v677 = vld [vmem:[%s1 + $0xc] sm:$0xf]
        %v678 = vld [vmem:[%s1 + $0x10] sm:$0xf]
        %v679 = vld [vmem:[%s1 + $0x14] sm:$0xf]
        %v680 = vld [vmem:[%s1 + $0x18] sm:$0xf]
        %v681 = vld [vmem:[%s1 + $0x1c] sm:$0xf]
        %v682 = vld [vmem:[%s1 + $0x20] sm:$0xf]
        %v683 = vld [vmem:[%s1 + $0x24] sm:$0xf]
        %v684 = vld [vmem:[%s1 + $0x28] sm:$0xf]
        %v685 = vld [vmem:[%s1 + $0x2c] sm:$0xf]
        %v686 = vld [vmem:[%s1 + $0x30] sm:$0xf]
        %v687 = vld [vmem:[%s1 + $0x34] sm:$0xf]
        %v688 = vld [vmem:[%s1 + $0x38] sm:$0xf]
        %v689 = vld [vmem:[%s1 + $0x3c] sm:$0xf]
        %v690 = vld [vmem:[#allocation2 + $0x1] sm:$0xff]
        %v691 = vld [vmem:[#allocation2 + $0x9] sm:$0xff]
        %v692 = vld [vmem:[#allocation2 + $0x19] sm:$0xff]
        %v693 = vld [vmem:[#allocation2 + $0x21] sm:$0xff]
        %v694 = vld [vmem:[#allocation2 + $0x31] sm:$0xff]
        %v695 = vld [vmem:[#allocation2 + $0x39] sm:$0xff]
        %v696 = vld [vmem:[#allocation2 + $0x49] sm:$0xff]
        %v697 = vld [vmem:[#allocation2 + $0x51] sm:$0xff]
        %v698 = vld [vmem:[#allocation2 + $0x61] sm:$0xff]
        %v699 = vld [vmem:[#allocation2 + $0x69] sm:$0xff]
        %v700 = vld [vmem:[#allocation2 + $0x79] sm:$0xff]
        %v701 = vld [vmem:[#allocation2 + $0x81] sm:$0xff]
        %v702 = vld [vmem:[#allocation2 + $0x91] sm:$0xff]
        %v703 = vld [vmem:[#allocation2 + $0x99] sm:$0xff]
        %v704 = vld [vmem:[#allocation2 + $0xa9] sm:$0xff]
        %v705 = vld [vmem:[#allocation2 + $0xb1] sm:$0xff]
        %v706 = vld [vmem:[#allocation2 + $0xc1] sm:$0xff]
        %v707 = vld [vmem:[#allocation2 + $0xc9] sm:$0xff]
        %v708 = vld [vmem:[#allocation2 + $0xd9] sm:$0xff]
        %v709 = vld [vmem:[#allocation2 + $0xe1] sm:$0xff]
        %v710 = vld [vmem:[#allocation2 + $0xf1] sm:$0xff]
        %v711 = vld [vmem:[#allocation2 + $0xf9] sm:$0xff]
        %v712 = vld [vmem:[#allocation2 + $0x109] sm:$0xff]
        %v713 = vld [vmem:[#allocation2 + $0x111] sm:$0xff]
        %v714 = vld [vmem:[#allocation2 + $0x121] sm:$0xff]
        %v715 = vld [vmem:[#allocation2 + $0x129] sm:$0xff]
        %v716 = vld [vmem:[#allocation2 + $0x139] sm:$0xff]
        %v717 = vld [vmem:[#allocation2 + $0x141] sm:$0xff]
        %v718 = vld [vmem:[#allocation2 + $0x151] sm:$0xff]
        %v719 = vld [vmem:[#allocation2 + $0x159] sm:$0xff]
        %v720 = vld [vmem:[#allocation2 + $0x169] sm:$0xff]
        %v721 = vld [vmem:[#allocation2 + $0x171] sm:$0xff]
        %v722 = vpack.c.bf16 %v691, %v690
        %v723 = vpack.c.bf16 %v693, %v692
        %v724 = vpack.c.bf16 %v695, %v694
        %v725 = vpack.c.bf16 %v697, %v696
        %v726 = vpack.c.bf16 %v699, %v698
        %v727 = vpack.c.bf16 %v701, %v700
        %v728 = vpack.c.bf16 %v703, %v702
        %v729 = vpack.c.bf16 %v705, %v704
        %v730 = vpack.c.bf16 %v707, %v706
        %v731 = vpack.c.bf16 %v709, %v708
        %v732 = vpack.c.bf16 %v711, %v710
        %v733 = vpack.c.bf16 %v713, %v712
        %v734 = vpack.c.bf16 %v715, %v714
        %v735 = vpack.c.bf16 %v717, %v716
        %v736 = vpack.c.bf16 %v719, %v718
        %v737 = vpack.c.bf16 %v721, %v720
        %s738 = scalar_lea.vmem %s1, 64
        %v739 = vld [vmem:[%s738] sm:$0xf]
        %v740 = vld [vmem:[%s738 + $0x4] sm:$0xf]
        %v741 = vld [vmem:[%s738 + $0x8] sm:$0xf]
        %v742 = vld [vmem:[%s738 + $0xc] sm:$0xf]
        %v743 = vld [vmem:[%s738 + $0x10] sm:$0xf]
        %v744 = vld [vmem:[%s738 + $0x14] sm:$0xf]
        %v745 = vld [vmem:[%s738 + $0x18] sm:$0xf]
        %v746 = vld [vmem:[%s738 + $0x1c] sm:$0xf]
        %v747 = vld [vmem:[%s738 + $0x20] sm:$0xf]
        %v748 = vld [vmem:[%s738 + $0x24] sm:$0xf]
        %v749 = vld [vmem:[%s738 + $0x28] sm:$0xf]
        %v750 = vld [vmem:[%s738 + $0x2c] sm:$0xf]
        %v751 = vld [vmem:[%s738 + $0x30] sm:$0xf]
        %v752 = vld [vmem:[%s738 + $0x34] sm:$0xf]
        %v753 = vld [vmem:[%s738 + $0x38] sm:$0xf]
        %v754 = vld [vmem:[%s738 + $0x3c] sm:$0xf]
        %v771 = vunpack.c.l.b16 %v739
        %v772 = vunpack.c.l.b16 %v740
        %v773 = vunpack.c.l.b16 %v741
        %v774 = vunpack.c.l.b16 %v742
        %v775 = vunpack.c.l.b16 %v743
        %v776 = vunpack.c.l.b16 %v744
        %v777 = vunpack.c.l.b16 %v745
        %v778 = vunpack.c.l.b16 %v746
        %v779 = vunpack.c.l.b16 %v747
        %v780 = vunpack.c.l.b16 %v748
        %v781 = vunpack.c.l.b16 %v749
        %v782 = vunpack.c.l.b16 %v750
        %v783 = vunpack.c.l.b16 %v751
        %v784 = vunpack.c.l.b16 %v752
        %v785 = vunpack.c.l.b16 %v753
        %v786 = vunpack.c.l.b16 %v754
        %v787 = vpack.c.b16 %v772, %v771
        %v788 = vpack.c.b16 %v774, %v773
        %v789 = vpack.c.b16 %v776, %v775
        %v790 = vpack.c.b16 %v778, %v777
        %v791 = vpack.c.b16 %v780, %v779
        %v792 = vpack.c.b16 %v782, %v781
        %v793 = vpack.c.b16 %v784, %v783
        %v794 = vpack.c.b16 %v786, %v785
        %803 = vmatpush.bf16.msra.mxu0 %v794
        %804 = vmatpush.bf16.msra.mxu0 %v793
        %805 = vmatpush.bf16.msra.mxu0 %v792
        %806 = vmatpush.bf16.msra.mxu0 %v791
        %807 = vmatpush.bf16.msra.mxu0 %v790
        %808 = vmatpush.bf16.msra.mxu0 %v789
        %809 = vmatpush.bf16.msra.mxu0 %v788
        %810 = vmatpush.bf16.msra.mxu0 %v787
        %811 = vmatmul.bf16.gmra.mxu0 %v722
        %v812 = vpop.f32.mrf.mxu0
        %v813 = vadd.f32 0.0, %v812
        %v814 = vpop.f32.mrf.mxu0
        %v815 = vadd.f32 0.0, %v814
        %816 = vmatmul.bf16.gmra.mxu0 %v723
        %v817 = vpop.f32.mrf.mxu0
        %v818 = vadd.f32 0.0, %v817
        %v819 = vpop.f32.mrf.mxu0
        %v820 = vadd.f32 0.0, %v819
        %821 = vmatmul.bf16.gmra.mxu0 %v724
        %v822 = vpop.f32.mrf.mxu0
        %v823 = vadd.f32 0.0, %v822
        %v824 = vpop.f32.mrf.mxu0
        %v825 = vadd.f32 0.0, %v824
        %826 = vmatmul.bf16.gmra.mxu0 %v725
        %v827 = vpop.f32.mrf.mxu0
        %v828 = vadd.f32 0.0, %v827
        %v829 = vpop.f32.mrf.mxu0
        %v830 = vadd.f32 0.0, %v829
        %831 = vmatmul.bf16.gmra.mxu0 %v726
        %v832 = vpop.f32.mrf.mxu0
        %v833 = vadd.f32 0.0, %v832
        %v834 = vpop.f32.mrf.mxu0
        %v835 = vadd.f32 0.0, %v834
        %836 = vmatmul.bf16.gmra.mxu0 %v727
        %v837 = vpop.f32.mrf.mxu0
        %v838 = vadd.f32 0.0, %v837
        %v839 = vpop.f32.mrf.mxu0
        %v840 = vadd.f32 0.0, %v839
        %841 = vmatmul.bf16.gmra.mxu0 %v728
        %v842 = vpop.f32.mrf.mxu0
        %v843 = vadd.f32 0.0, %v842
        %v844 = vpop.f32.mrf.mxu0
        %v845 = vadd.f32 0.0, %v844
        %846 = vmatmul.bf16.gmra.mxu0 %v729
        %v847 = vpop.f32.mrf.mxu0
        %v848 = vadd.f32 0.0, %v847
        %v849 = vpop.f32.mrf.mxu0
        %v850 = vadd.f32 0.0, %v849
        %851 = vmatmul.bf16.gmra.mxu0 %v730
        %v852 = vpop.f32.mrf.mxu0
        %v853 = vadd.f32 0.0, %v852
        %v854 = vpop.f32.mrf.mxu0
        %v855 = vadd.f32 0.0, %v854
        %856 = vmatmul.bf16.gmra.mxu0 %v731
        %v857 = vpop.f32.mrf.mxu0
        %v858 = vadd.f32 0.0, %v857
        %v859 = vpop.f32.mrf.mxu0
        %v860 = vadd.f32 0.0, %v859
        %861 = vmatmul.bf16.gmra.mxu0 %v732
        %v862 = vpop.f32.mrf.mxu0
        %v863 = vadd.f32 0.0, %v862
        %v864 = vpop.f32.mrf.mxu0
        %v865 = vadd.f32 0.0, %v864
        %866 = vmatmul.bf16.gmra.mxu0 %v733
        %v867 = vpop.f32.mrf.mxu0
        %v868 = vadd.f32 0.0, %v867
        %v869 = vpop.f32.mrf.mxu0
        %v870 = vadd.f32 0.0, %v869
        %871 = vmatmul.bf16.gmra.mxu0 %v734
        %v872 = vpop.f32.mrf.mxu0
        %v873 = vadd.f32 0.0, %v872
        %v874 = vpop.f32.mrf.mxu0
        %v875 = vadd.f32 0.0, %v874
        %876 = vmatmul.bf16.gmra.mxu0 %v735
        %v877 = vpop.f32.mrf.mxu0
        %v878 = vadd.f32 0.0, %v877
        %v879 = vpop.f32.mrf.mxu0
        %v880 = vadd.f32 0.0, %v879
        %881 = vmatmul.bf16.gmra.mxu0 %v736
        %v882 = vpop.f32.mrf.mxu0
        %v883 = vadd.f32 0.0, %v882
        %v884 = vpop.f32.mrf.mxu0
        %v885 = vadd.f32 0.0, %v884
        %886 = vmatmul.bf16.gmra.mxu0 %v737
        %v887 = vpop.f32.mrf.mxu0
        %v888 = vadd.f32 0.0, %v887
        %v889 = vpop.f32.mrf.mxu0
        %v890 = vadd.f32 0.0, %v889
        %891 = vdwg.mxu0
        %v908 = vunpack.c.l.b16 %v674
        %v909 = vunpack.c.l.b16 %v675
        %v910 = vunpack.c.l.b16 %v676
        %v911 = vunpack.c.l.b16 %v677
        %v912 = vunpack.c.l.b16 %v678
        %v913 = vunpack.c.l.b16 %v679
        %v914 = vunpack.c.l.b16 %v680
        %v915 = vunpack.c.l.b16 %v681
        %v916 = vunpack.c.l.b16 %v682
        %v917 = vunpack.c.l.b16 %v683
        %v918 = vunpack.c.l.b16 %v684
        %v919 = vunpack.c.l.b16 %v685
        %v920 = vunpack.c.l.b16 %v686
        %v921 = vunpack.c.l.b16 %v687
        %v922 = vunpack.c.l.b16 %v688
        %v923 = vunpack.c.l.b16 %v689
        %v924 = vpack.c.b16 %v909, %v908
        %v925 = vpack.c.b16 %v911, %v910
        %v926 = vpack.c.b16 %v913, %v912
        %v927 = vpack.c.b16 %v915, %v914
        %v928 = vpack.c.b16 %v917, %v916
        %v929 = vpack.c.b16 %v919, %v918
        %v930 = vpack.c.b16 %v921, %v920
        %v931 = vpack.c.b16 %v923, %v922
        %940 = vmatpush.bf16.msra.mxu0 %v931
        %941 = vmatpush.bf16.msra.mxu0 %v930
        %942 = vmatpush.bf16.msra.mxu0 %v929
        %943 = vmatpush.bf16.msra.mxu0 %v928
        %944 = vmatpush.bf16.msra.mxu0 %v927
        %945 = vmatpush.bf16.msra.mxu0 %v926
        %946 = vmatpush.bf16.msra.mxu0 %v925
        %947 = vmatpush.bf16.msra.mxu0 %v924
        %948 = vmatmul.bf16.gmra.mxu0 %v658
        %v949 = vpop.f32.mrf.mxu0
        %v950 = vadd.f32 %v813, %v949
        %v951 = vpop.f32.mrf.mxu0
        %v952 = vadd.f32 %v815, %v951
        %953 = vmatmul.bf16.gmra.mxu0 %v659
        %v954 = vpop.f32.mrf.mxu0
        %v955 = vadd.f32 %v818, %v954
        %v956 = vpop.f32.mrf.mxu0
        %v957 = vadd.f32 %v820, %v956
        %958 = vmatmul.bf16.gmra.mxu0 %v660
        %v959 = vpop.f32.mrf.mxu0
        %v960 = vadd.f32 %v823, %v959
        %v961 = vpop.f32.mrf.mxu0
        %v962 = vadd.f32 %v825, %v961
        %963 = vmatmul.bf16.gmra.mxu0 %v661
        %v964 = vpop.f32.mrf.mxu0
        %v965 = vadd.f32 %v828, %v964
        %v966 = vpop.f32.mrf.mxu0
        %v967 = vadd.f32 %v830, %v966
        %968 = vmatmul.bf16.gmra.mxu0 %v662
        %v969 = vpop.f32.mrf.mxu0
        %v970 = vadd.f32 %v833, %v969
        %v971 = vpop.f32.mrf.mxu0
        %v972 = vadd.f32 %v835, %v971
        %973 = vmatmul.bf16.gmra.mxu0 %v663
        %v974 = vpop.f32.mrf.mxu0
        %v975 = vadd.f32 %v838, %v974
        %v976 = vpop.f32.mrf.mxu0
        %v977 = vadd.f32 %v840, %v976
        %978 = vmatmul.bf16.gmra.mxu0 %v664
        %v979 = vpop.f32.mrf.mxu0
        %v980 = vadd.f32 %v843, %v979
        %v981 = vpop.f32.mrf.mxu0
        %v982 = vadd.f32 %v845, %v981
        %983 = vmatmul.bf16.gmra.mxu0 %v665
        %v984 = vpop.f32.mrf.mxu0
        %v985 = vadd.f32 %v848, %v984
        %v986 = vpop.f32.mrf.mxu0
        %v987 = vadd.f32 %v850, %v986
        %988 = vmatmul.bf16.gmra.mxu0 %v666
        %v989 = vpop.f32.mrf.mxu0
        %v990 = vadd.f32 %v853, %v989
        %v991 = vpop.f32.mrf.mxu0
        %v992 = vadd.f32 %v855, %v991
        %993 = vmatmul.bf16.gmra.mxu0 %v667
        %v994 = vpop.f32.mrf.mxu0
        %v995 = vadd.f32 %v858, %v994
        %v996 = vpop.f32.mrf.mxu0
        %v997 = vadd.f32 %v860, %v996
        %998 = vmatmul.bf16.gmra.mxu0 %v668
        %v999 = vpop.f32.mrf.mxu0
        %v1000 = vadd.f32 %v863, %v999
        %v1001 = vpop.f32.mrf.mxu0
        %v1002 = vadd.f32 %v865, %v1001
        %1003 = vmatmul.bf16.gmra.mxu0 %v669
        %v1004 = vpop.f32.mrf.mxu0
        %v1005 = vadd.f32 %v868, %v1004
        %v1006 = vpop.f32.mrf.mxu0
        %v1007 = vadd.f32 %v870, %v1006
        %1008 = vmatmul.bf16.gmra.mxu0 %v670
        %v1009 = vpop.f32.mrf.mxu0
        %v1010 = vadd.f32 %v873, %v1009
        %v1011 = vpop.f32.mrf.mxu0
        %v1012 = vadd.f32 %v875, %v1011
        %1013 = vmatmul.bf16.gmra.mxu0 %v671
        %v1014 = vpop.f32.mrf.mxu0
        %v1015 = vadd.f32 %v878, %v1014
        %v1016 = vpop.f32.mrf.mxu0
        %v1017 = vadd.f32 %v880, %v1016
        %1018 = vmatmul.bf16.gmra.mxu0 %v672
        %v1019 = vpop.f32.mrf.mxu0
        %v1020 = vadd.f32 %v883, %v1019
        %v1021 = vpop.f32.mrf.mxu0
        %v1022 = vadd.f32 %v885, %v1021
        %1023 = vmatmul.bf16.gmra.mxu0 %v673
        %v1024 = vpop.f32.mrf.mxu0
        %v1025 = vadd.f32 %v888, %v1024
        %v1026 = vpop.f32.mrf.mxu0
        %v1027 = vadd.f32 %v890, %v1026
        %1028 = vdwg.mxu0
        %v1029 = vld [vmem:[#allocation2 + $0x2] sm:$0xff]
        %v1030 = vld [vmem:[#allocation2 + $0xa] sm:$0xff]
        %v1031 = vld [vmem:[#allocation2 + $0x1a] sm:$0xff]
        %v1032 = vld [vmem:[#allocation2 + $0x22] sm:$0xff]
        %v1033 = vld [vmem:[#allocation2 + $0x32] sm:$0xff]
        %v1034 = vld [vmem:[#allocation2 + $0x3a] sm:$0xff]
        %v1035 = vld [vmem:[#allocation2 + $0x4a] sm:$0xff]
        %v1036 = vld [vmem:[#allocation2 + $0x52] sm:$0xff]
        %v1037 = vld [vmem:[#allocation2 + $0x62] sm:$0xff]
        %v1038 = vld [vmem:[#allocation2 + $0x6a] sm:$0xff]
        %v1039 = vld [vmem:[#allocation2 + $0x7a] sm:$0xff]
        %v1040 = vld [vmem:[#allocation2 + $0x82] sm:$0xff]
        %v1041 = vld [vmem:[#allocation2 + $0x92] sm:$0xff]
        %v1042 = vld [vmem:[#allocation2 + $0x9a] sm:$0xff]
        %v1043 = vld [vmem:[#allocation2 + $0xaa] sm:$0xff]
        %v1044 = vld [vmem:[#allocation2 + $0xb2] sm:$0xff]
        %v1045 = vld [vmem:[#allocation2 + $0xc2] sm:$0xff]
        %v1046 = vld [vmem:[#allocation2 + $0xca] sm:$0xff]
        %v1047 = vld [vmem:[#allocation2 + $0xda] sm:$0xff]
        %v1048 = vld [vmem:[#allocation2 + $0xe2] sm:$0xff]
        %v1049 = vld [vmem:[#allocation2 + $0xf2] sm:$0xff]
        %v1050 = vld [vmem:[#allocation2 + $0xfa] sm:$0xff]
        %v1051 = vld [vmem:[#allocation2 + $0x10a] sm:$0xff]
        %v1052 = vld [vmem:[#allocation2 + $0x112] sm:$0xff]
        %v1053 = vld [vmem:[#allocation2 + $0x122] sm:$0xff]
        %v1054 = vld [vmem:[#allocation2 + $0x12a] sm:$0xff]
        %v1055 = vld [vmem:[#allocation2 + $0x13a] sm:$0xff]
        %v1056 = vld [vmem:[#allocation2 + $0x142] sm:$0xff]
        %v1057 = vld [vmem:[#allocation2 + $0x152] sm:$0xff]
        %v1058 = vld [vmem:[#allocation2 + $0x15a] sm:$0xff]
        %v1059 = vld [vmem:[#allocation2 + $0x16a] sm:$0xff]
        %v1060 = vld [vmem:[#allocation2 + $0x172] sm:$0xff]
        %v1061 = vpack.c.bf16 %v1030, %v1029
        %v1062 = vpack.c.bf16 %v1032, %v1031
        %v1063 = vpack.c.bf16 %v1034, %v1033
        %v1064 = vpack.c.bf16 %v1036, %v1035
        %v1065 = vpack.c.bf16 %v1038, %v1037
        %v1066 = vpack.c.bf16 %v1040, %v1039
        %v1067 = vpack.c.bf16 %v1042, %v1041
        %v1068 = vpack.c.bf16 %v1044, %v1043
        %v1069 = vpack.c.bf16 %v1046, %v1045
        %v1070 = vpack.c.bf16 %v1048, %v1047
        %v1071 = vpack.c.bf16 %v1050, %v1049
        %v1072 = vpack.c.bf16 %v1052, %v1051
        %v1073 = vpack.c.bf16 %v1054, %v1053
        %v1074 = vpack.c.bf16 %v1056, %v1055
        %v1075 = vpack.c.bf16 %v1058, %v1057
        %v1076 = vpack.c.bf16 %v1060, %v1059
        %s1077 = scalar_lea.vmem %s1, 128
        %v1078 = vld [vmem:[%s1077] sm:$0xf]
        %v1079 = vld [vmem:[%s1077 + $0x4] sm:$0xf]
        %v1080 = vld [vmem:[%s1077 + $0x8] sm:$0xf]
        %v1081 = vld [vmem:[%s1077 + $0xc] sm:$0xf]
        %v1082 = vld [vmem:[%s1077 + $0x10] sm:$0xf]
        %v1083 = vld [vmem:[%s1077 + $0x14] sm:$0xf]
        %v1084 = vld [vmem:[%s1077 + $0x18] sm:$0xf]
        %v1085 = vld [vmem:[%s1077 + $0x1c] sm:$0xf]
        %v1086 = vld [vmem:[%s1077 + $0x20] sm:$0xf]
        %v1087 = vld [vmem:[%s1077 + $0x24] sm:$0xf]
        %v1088 = vld [vmem:[%s1077 + $0x28] sm:$0xf]
        %v1089 = vld [vmem:[%s1077 + $0x2c] sm:$0xf]
        %v1090 = vld [vmem:[%s1077 + $0x30] sm:$0xf]
        %v1091 = vld [vmem:[%s1077 + $0x34] sm:$0xf]
        %v1092 = vld [vmem:[%s1077 + $0x38] sm:$0xf]
        %v1093 = vld [vmem:[%s1077 + $0x3c] sm:$0xf]
        %v1110 = vunpack.c.l.b16 %v1078
        %v1111 = vunpack.c.l.b16 %v1079
        %v1112 = vunpack.c.l.b16 %v1080
        %v1113 = vunpack.c.l.b16 %v1081
        %v1114 = vunpack.c.l.b16 %v1082
        %v1115 = vunpack.c.l.b16 %v1083
        %v1116 = vunpack.c.l.b16 %v1084
        %v1117 = vunpack.c.l.b16 %v1085
        %v1118 = vunpack.c.l.b16 %v1086
        %v1119 = vunpack.c.l.b16 %v1087
        %v1120 = vunpack.c.l.b16 %v1088
        %v1121 = vunpack.c.l.b16 %v1089
        %v1122 = vunpack.c.l.b16 %v1090
        %v1123 = vunpack.c.l.b16 %v1091
        %v1124 = vunpack.c.l.b16 %v1092
        %v1125 = vunpack.c.l.b16 %v1093
        %v1126 = vpack.c.b16 %v1111, %v1110
        %v1127 = vpack.c.b16 %v1113, %v1112
        %v1128 = vpack.c.b16 %v1115, %v1114
        %v1129 = vpack.c.b16 %v1117, %v1116
        %v1130 = vpack.c.b16 %v1119, %v1118
        %v1131 = vpack.c.b16 %v1121, %v1120
        %v1132 = vpack.c.b16 %v1123, %v1122
        %v1133 = vpack.c.b16 %v1125, %v1124
        %1142 = vmatpush.bf16.msra.mxu0 %v1133
        %1143 = vmatpush.bf16.msra.mxu0 %v1132
        %1144 = vmatpush.bf16.msra.mxu0 %v1131
        %1145 = vmatpush.bf16.msra.mxu0 %v1130
        %1146 = vmatpush.bf16.msra.mxu0 %v1129
        %1147 = vmatpush.bf16.msra.mxu0 %v1128
        %1148 = vmatpush.bf16.msra.mxu0 %v1127
        %1149 = vmatpush.bf16.msra.mxu0 %v1126
        %1150 = vmatmul.bf16.gmra.mxu0 %v1061
        %v1151 = vpop.f32.mrf.mxu0
        %v1152 = vadd.f32 0.0, %v1151
        %v1153 = vpop.f32.mrf.mxu0
        %v1154 = vadd.f32 0.0, %v1153
        %1155 = vmatmul.bf16.gmra.mxu0 %v1062
        %v1156 = vpop.f32.mrf.mxu0
        %v1157 = vadd.f32 0.0, %v1156
        %v1158 = vpop.f32.mrf.mxu0
        %v1159 = vadd.f32 0.0, %v1158
        %1160 = vmatmul.bf16.gmra.mxu0 %v1063
        %v1161 = vpop.f32.mrf.mxu0
        %v1162 = vadd.f32 0.0, %v1161
        %v1163 = vpop.f32.mrf.mxu0
        %v1164 = vadd.f32 0.0, %v1163
        %1165 = vmatmul.bf16.gmra.mxu0 %v1064
        %v1166 = vpop.f32.mrf.mxu0
        %v1167 = vadd.f32 0.0, %v1166
        %v1168 = vpop.f32.mrf.mxu0
        %v1169 = vadd.f32 0.0, %v1168
        %1170 = vmatmul.bf16.gmra.mxu0 %v1065
        %v1171 = vpop.f32.mrf.mxu0
        %v1172 = vadd.f32 0.0, %v1171
        %v1173 = vpop.f32.mrf.mxu0
        %v1174 = vadd.f32 0.0, %v1173
        %1175 = vmatmul.bf16.gmra.mxu0 %v1066
        %v1176 = vpop.f32.mrf.mxu0
        %v1177 = vadd.f32 0.0, %v1176
        %v1178 = vpop.f32.mrf.mxu0
        %v1179 = vadd.f32 0.0, %v1178
        %1180 = vmatmul.bf16.gmra.mxu0 %v1067
        %v1181 = vpop.f32.mrf.mxu0
        %v1182 = vadd.f32 0.0, %v1181
        %v1183 = vpop.f32.mrf.mxu0
        %v1184 = vadd.f32 0.0, %v1183
        %1185 = vmatmul.bf16.gmra.mxu0 %v1068
        %v1186 = vpop.f32.mrf.mxu0
        %v1187 = vadd.f32 0.0, %v1186
        %v1188 = vpop.f32.mrf.mxu0
        %v1189 = vadd.f32 0.0, %v1188
        %1190 = vmatmul.bf16.gmra.mxu0 %v1069
        %v1191 = vpop.f32.mrf.mxu0
        %v1192 = vadd.f32 0.0, %v1191
        %v1193 = vpop.f32.mrf.mxu0
        %v1194 = vadd.f32 0.0, %v1193
        %1195 = vmatmul.bf16.gmra.mxu0 %v1070
        %v1196 = vpop.f32.mrf.mxu0
        %v1197 = vadd.f32 0.0, %v1196
        %v1198 = vpop.f32.mrf.mxu0
        %v1199 = vadd.f32 0.0, %v1198
        %1200 = vmatmul.bf16.gmra.mxu0 %v1071
        %v1201 = vpop.f32.mrf.mxu0
        %v1202 = vadd.f32 0.0, %v1201
        %v1203 = vpop.f32.mrf.mxu0
        %v1204 = vadd.f32 0.0, %v1203
        %1205 = vmatmul.bf16.gmra.mxu0 %v1072
        %v1206 = vpop.f32.mrf.mxu0
        %v1207 = vadd.f32 0.0, %v1206
        %v1208 = vpop.f32.mrf.mxu0
        %v1209 = vadd.f32 0.0, %v1208
        %1210 = vmatmul.bf16.gmra.mxu0 %v1073
        %v1211 = vpop.f32.mrf.mxu0
        %v1212 = vadd.f32 0.0, %v1211
        %v1213 = vpop.f32.mrf.mxu0
        %v1214 = vadd.f32 0.0, %v1213
        %1215 = vmatmul.bf16.gmra.mxu0 %v1074
        %v1216 = vpop.f32.mrf.mxu0
        %v1217 = vadd.f32 0.0, %v1216
        %v1218 = vpop.f32.mrf.mxu0
        %v1219 = vadd.f32 0.0, %v1218
        %1220 = vmatmul.bf16.gmra.mxu0 %v1075
        %v1221 = vpop.f32.mrf.mxu0
        %v1222 = vadd.f32 0.0, %v1221
        %v1223 = vpop.f32.mrf.mxu0
        %v1224 = vadd.f32 0.0, %v1223
        %1225 = vmatmul.bf16.gmra.mxu0 %v1076
        %v1226 = vpop.f32.mrf.mxu0
        %v1227 = vadd.f32 0.0, %v1226
        %v1228 = vpop.f32.mrf.mxu0
        %v1229 = vadd.f32 0.0, %v1228
        %1230 = vdwg.mxu0
        %v1231 = vadd.f32 %v950, %v1152
        %v1232 = vadd.f32 %v952, %v1154
        %v1233 = vadd.f32 %v955, %v1157
        %v1234 = vadd.f32 %v957, %v1159
        %v1235 = vadd.f32 %v960, %v1162
        %v1236 = vadd.f32 %v962, %v1164
        %v1237 = vadd.f32 %v965, %v1167
        %v1238 = vadd.f32 %v967, %v1169
        %v1239 = vadd.f32 %v970, %v1172
        %v1240 = vadd.f32 %v972, %v1174
        %v1241 = vadd.f32 %v975, %v1177
        %v1242 = vadd.f32 %v977, %v1179
        %v1243 = vadd.f32 %v980, %v1182
        %v1244 = vadd.f32 %v982, %v1184
        %v1245 = vadd.f32 %v985, %v1187
        %v1246 = vadd.f32 %v987, %v1189
        %v1247 = vadd.f32 %v990, %v1192
        %v1248 = vadd.f32 %v992, %v1194
        %v1249 = vadd.f32 %v995, %v1197
        %v1250 = vadd.f32 %v997, %v1199
        %v1251 = vadd.f32 %v1000, %v1202
        %v1252 = vadd.f32 %v1002, %v1204
        %v1253 = vadd.f32 %v1005, %v1207
        %v1254 = vadd.f32 %v1007, %v1209
        %v1255 = vadd.f32 %v1010, %v1212
        %v1256 = vadd.f32 %v1012, %v1214
        %v1257 = vadd.f32 %v1015, %v1217
        %v1258 = vadd.f32 %v1017, %v1219
        %v1259 = vadd.f32 %v1020, %v1222
        %v1260 = vadd.f32 %v1022, %v1224
        %v1261 = vadd.f32 %v1025, %v1227
        %v1262 = vadd.f32 %v1027, %v1229
        %v1263 = vld [vmem:[%s592] sm:$0xff]
        %v1264 = vld [vmem:[%s592 + $0x8] sm:$0xff]
        %v1265 = vld [vmem:[%s592 + $0x18] sm:$0xff]
        %v1266 = vld [vmem:[%s592 + $0x20] sm:$0xff]
        %v1267 = vld [vmem:[%s592 + $0x30] sm:$0xff]
        %v1268 = vld [vmem:[%s592 + $0x38] sm:$0xff]
        %v1269 = vld [vmem:[%s592 + $0x48] sm:$0xff]
        %v1270 = vld [vmem:[%s592 + $0x50] sm:$0xff]
        %v1271 = vld [vmem:[%s592 + $0x60] sm:$0xff]
        %v1272 = vld [vmem:[%s592 + $0x68] sm:$0xff]
        %v1273 = vld [vmem:[%s592 + $0x78] sm:$0xff]
        %v1274 = vld [vmem:[%s592 + $0x80] sm:$0xff]
        %v1275 = vld [vmem:[%s592 + $0x90] sm:$0xff]
        %v1276 = vld [vmem:[%s592 + $0x98] sm:$0xff]
        %v1277 = vld [vmem:[%s592 + $0xa8] sm:$0xff]
        %v1278 = vld [vmem:[%s592 + $0xb0] sm:$0xff]
        %v1279 = vld [vmem:[%s592 + $0xc0] sm:$0xff]
        %v1280 = vld [vmem:[%s592 + $0xc8] sm:$0xff]
        %v1281 = vld [vmem:[%s592 + $0xd8] sm:$0xff]
        %v1282 = vld [vmem:[%s592 + $0xe0] sm:$0xff]
        %v1283 = vld [vmem:[%s592 + $0xf0] sm:$0xff]
        %v1284 = vld [vmem:[%s592 + $0xf8] sm:$0xff]
        %v1285 = vld [vmem:[%s592 + $0x108] sm:$0xff]
        %v1286 = vld [vmem:[%s592 + $0x110] sm:$0xff]
        %v1287 = vld [vmem:[%s592 + $0x120] sm:$0xff]
        %v1288 = vld [vmem:[%s592 + $0x128] sm:$0xff]
        %v1289 = vld [vmem:[%s592 + $0x138] sm:$0xff]
        %v1290 = vld [vmem:[%s592 + $0x140] sm:$0xff]
        %v1291 = vld [vmem:[%s592 + $0x150] sm:$0xff]
        %v1292 = vld [vmem:[%s592 + $0x158] sm:$0xff]
        %v1293 = vld [vmem:[%s592 + $0x168] sm:$0xff]
        %v1294 = vld [vmem:[%s592 + $0x170] sm:$0xff]
        %v1295 = vpack.c.bf16 %v1264, %v1263
        %v1296 = vpack.c.bf16 %v1266, %v1265
        %v1297 = vpack.c.bf16 %v1268, %v1267
        %v1298 = vpack.c.bf16 %v1270, %v1269
        %v1299 = vpack.c.bf16 %v1272, %v1271
        %v1300 = vpack.c.bf16 %v1274, %v1273
        %v1301 = vpack.c.bf16 %v1276, %v1275
        %v1302 = vpack.c.bf16 %v1278, %v1277
        %v1303 = vpack.c.bf16 %v1280, %v1279
        %v1304 = vpack.c.bf16 %v1282, %v1281
        %v1305 = vpack.c.bf16 %v1284, %v1283
        %v1306 = vpack.c.bf16 %v1286, %v1285
        %v1307 = vpack.c.bf16 %v1288, %v1287
        %v1308 = vpack.c.bf16 %v1290, %v1289
        %v1309 = vpack.c.bf16 %v1292, %v1291
        %v1310 = vpack.c.bf16 %v1294, %v1293
        %s1311 = scalar_lea.vmem %s1, 192
        %v1312 = vld [vmem:[%s1311] sm:$0xf]
        %v1313 = vld [vmem:[%s1311 + $0x4] sm:$0xf]
        %v1314 = vld [vmem:[%s1311 + $0x8] sm:$0xf]
        %v1315 = vld [vmem:[%s1311 + $0xc] sm:$0xf]
        %v1316 = vld [vmem:[%s1311 + $0x10] sm:$0xf]
        %v1317 = vld [vmem:[%s1311 + $0x14] sm:$0xf]
        %v1318 = vld [vmem:[%s1311 + $0x18] sm:$0xf]
        %v1319 = vld [vmem:[%s1311 + $0x1c] sm:$0xf]
        %v1320 = vld [vmem:[%s1311 + $0x20] sm:$0xf]
        %v1321 = vld [vmem:[%s1311 + $0x24] sm:$0xf]
        %v1322 = vld [vmem:[%s1311 + $0x28] sm:$0xf]
        %v1323 = vld [vmem:[%s1311 + $0x2c] sm:$0xf]
        %v1324 = vld [vmem:[%s1311 + $0x30] sm:$0xf]
        %v1325 = vld [vmem:[%s1311 + $0x34] sm:$0xf]
        %v1326 = vld [vmem:[%s1311 + $0x38] sm:$0xf]
        %v1327 = vld [vmem:[%s1311 + $0x3c] sm:$0xf]
        %v1344 = vunpack.c.l.b16 %v1312
        %v1345 = vunpack.c.l.b16 %v1313
        %v1346 = vunpack.c.l.b16 %v1314
        %v1347 = vunpack.c.l.b16 %v1315
        %v1348 = vunpack.c.l.b16 %v1316
        %v1349 = vunpack.c.l.b16 %v1317
        %v1350 = vunpack.c.l.b16 %v1318
        %v1351 = vunpack.c.l.b16 %v1319
        %v1352 = vunpack.c.l.b16 %v1320
        %v1353 = vunpack.c.l.b16 %v1321
        %v1354 = vunpack.c.l.b16 %v1322
        %v1355 = vunpack.c.l.b16 %v1323
        %v1356 = vunpack.c.l.b16 %v1324
        %v1357 = vunpack.c.l.b16 %v1325
        %v1358 = vunpack.c.l.b16 %v1326
        %v1359 = vunpack.c.l.b16 %v1327
        %v1360 = vpack.c.b16 %v1345, %v1344
        %v1361 = vpack.c.b16 %v1347, %v1346
        %v1362 = vpack.c.b16 %v1349, %v1348
        %v1363 = vpack.c.b16 %v1351, %v1350
        %v1364 = vpack.c.b16 %v1353, %v1352
        %v1365 = vpack.c.b16 %v1355, %v1354
        %v1366 = vpack.c.b16 %v1357, %v1356
        %v1367 = vpack.c.b16 %v1359, %v1358
        %1376 = vmatpush.bf16.msra.mxu0 %v1367
        %1377 = vmatpush.bf16.msra.mxu0 %v1366
        %1378 = vmatpush.bf16.msra.mxu0 %v1365
        %1379 = vmatpush.bf16.msra.mxu0 %v1364
        %1380 = vmatpush.bf16.msra.mxu0 %v1363
        %1381 = vmatpush.bf16.msra.mxu0 %v1362
        %1382 = vmatpush.bf16.msra.mxu0 %v1361
        %1383 = vmatpush.bf16.msra.mxu0 %v1360
        %1384 = vmatmul.bf16.gmra.mxu0 %v1295
        %v1385 = vpop.f32.mrf.mxu0
        %v1386 = vadd.f32 0.0, %v1385
        %v1387 = vpop.f32.mrf.mxu0
        %v1388 = vadd.f32 0.0, %v1387
        %1389 = vmatmul.bf16.gmra.mxu0 %v1296
        %v1390 = vpop.f32.mrf.mxu0
        %v1391 = vadd.f32 0.0, %v1390
        %v1392 = vpop.f32.mrf.mxu0
        %v1393 = vadd.f32 0.0, %v1392
        %1394 = vmatmul.bf16.gmra.mxu0 %v1297
        %v1395 = vpop.f32.mrf.mxu0
        %v1396 = vadd.f32 0.0, %v1395
        %v1397 = vpop.f32.mrf.mxu0
        %v1398 = vadd.f32 0.0, %v1397
        %1399 = vmatmul.bf16.gmra.mxu0 %v1298
        %v1400 = vpop.f32.mrf.mxu0
        %v1401 = vadd.f32 0.0, %v1400
        %v1402 = vpop.f32.mrf.mxu0
        %v1403 = vadd.f32 0.0, %v1402
        %1404 = vmatmul.bf16.gmra.mxu0 %v1299
        %v1405 = vpop.f32.mrf.mxu0
        %v1406 = vadd.f32 0.0, %v1405
        %v1407 = vpop.f32.mrf.mxu0
        %v1408 = vadd.f32 0.0, %v1407
        %1409 = vmatmul.bf16.gmra.mxu0 %v1300
        %v1410 = vpop.f32.mrf.mxu0
        %v1411 = vadd.f32 0.0, %v1410
        %v1412 = vpop.f32.mrf.mxu0
        %v1413 = vadd.f32 0.0, %v1412
        %1414 = vmatmul.bf16.gmra.mxu0 %v1301
        %v1415 = vpop.f32.mrf.mxu0
        %v1416 = vadd.f32 0.0, %v1415
        %v1417 = vpop.f32.mrf.mxu0
        %v1418 = vadd.f32 0.0, %v1417
        %1419 = vmatmul.bf16.gmra.mxu0 %v1302
        %v1420 = vpop.f32.mrf.mxu0
        %v1421 = vadd.f32 0.0, %v1420
        %v1422 = vpop.f32.mrf.mxu0
        %v1423 = vadd.f32 0.0, %v1422
        %1424 = vmatmul.bf16.gmra.mxu0 %v1303
        %v1425 = vpop.f32.mrf.mxu0
        %v1426 = vadd.f32 0.0, %v1425
        %v1427 = vpop.f32.mrf.mxu0
        %v1428 = vadd.f32 0.0, %v1427
        %1429 = vmatmul.bf16.gmra.mxu0 %v1304
        %v1430 = vpop.f32.mrf.mxu0
        %v1431 = vadd.f32 0.0, %v1430
        %v1432 = vpop.f32.mrf.mxu0
        %v1433 = vadd.f32 0.0, %v1432
        %1434 = vmatmul.bf16.gmra.mxu0 %v1305
        %v1435 = vpop.f32.mrf.mxu0
        %v1436 = vadd.f32 0.0, %v1435
        %v1437 = vpop.f32.mrf.mxu0
        %v1438 = vadd.f32 0.0, %v1437
        %1439 = vmatmul.bf16.gmra.mxu0 %v1306
        %v1440 = vpop.f32.mrf.mxu0
        %v1441 = vadd.f32 0.0, %v1440
        %v1442 = vpop.f32.mrf.mxu0
        %v1443 = vadd.f32 0.0, %v1442
        %1444 = vmatmul.bf16.gmra.mxu0 %v1307
        %v1445 = vpop.f32.mrf.mxu0
        %v1446 = vadd.f32 0.0, %v1445
        %v1447 = vpop.f32.mrf.mxu0
        %v1448 = vadd.f32 0.0, %v1447
        %1449 = vmatmul.bf16.gmra.mxu0 %v1308
        %v1450 = vpop.f32.mrf.mxu0
        %v1451 = vadd.f32 0.0, %v1450
        %v1452 = vpop.f32.mrf.mxu0
        %v1453 = vadd.f32 0.0, %v1452
        %1454 = vmatmul.bf16.gmra.mxu0 %v1309
        %v1455 = vpop.f32.mrf.mxu0
        %v1456 = vadd.f32 0.0, %v1455
        %v1457 = vpop.f32.mrf.mxu0
        %v1458 = vadd.f32 0.0, %v1457
        %1459 = vmatmul.bf16.gmra.mxu0 %v1310
        %v1460 = vpop.f32.mrf.mxu0
        %v1461 = vadd.f32 0.0, %v1460
        %v1462 = vpop.f32.mrf.mxu0
        %v1463 = vadd.f32 0.0, %v1462
        %1464 = vdwg.mxu0
        %v1465 = vadd.f32 %v1231, %v1386
        %v1466 = vadd.f32 %v1232, %v1388
        %v1467 = vadd.f32 %v1233, %v1391
        %v1468 = vadd.f32 %v1234, %v1393
        %v1469 = vadd.f32 %v1235, %v1396
        %v1470 = vadd.f32 %v1236, %v1398
        %v1471 = vadd.f32 %v1237, %v1401
        %v1472 = vadd.f32 %v1238, %v1403
        %v1473 = vadd.f32 %v1239, %v1406
        %v1474 = vadd.f32 %v1240, %v1408
        %v1475 = vadd.f32 %v1241, %v1411
        %v1476 = vadd.f32 %v1242, %v1413
        %v1477 = vadd.f32 %v1243, %v1416
        %v1478 = vadd.f32 %v1244, %v1418
        %v1479 = vadd.f32 %v1245, %v1421
        %v1480 = vadd.f32 %v1246, %v1423
        %v1481 = vadd.f32 %v1247, %v1426
        %v1482 = vadd.f32 %v1248, %v1428
        %v1483 = vadd.f32 %v1249, %v1431
        %v1484 = vadd.f32 %v1250, %v1433
        %v1485 = vadd.f32 %v1251, %v1436
        %v1486 = vadd.f32 %v1252, %v1438
        %v1487 = vadd.f32 %v1253, %v1441
        %v1488 = vadd.f32 %v1254, %v1443
        %v1489 = vadd.f32 %v1255, %v1446
        %v1490 = vadd.f32 %v1256, %v1448
        %v1491 = vadd.f32 %v1257, %v1451
        %v1492 = vadd.f32 %v1258, %v1453
        %v1493 = vadd.f32 %v1259, %v1456
        %v1494 = vadd.f32 %v1260, %v1458
        %v1495 = vadd.f32 %v1261, %v1461
        %v1496 = vadd.f32 %v1262, %v1463
        %v1497 = vld [vmem:[%s592 + $0x1] sm:$0xff]
        %v1498 = vld [vmem:[%s592 + $0x9] sm:$0xff]
        %v1499 = vld [vmem:[%s592 + $0x19] sm:$0xff]
        %v1500 = vld [vmem:[%s592 + $0x21] sm:$0xff]
        %v1501 = vld [vmem:[%s592 + $0x31] sm:$0xff]
        %v1502 = vld [vmem:[%s592 + $0x39] sm:$0xff]
        %v1503 = vld [vmem:[%s592 + $0x49] sm:$0xff]
        %v1504 = vld [vmem:[%s592 + $0x51] sm:$0xff]
        %v1505 = vld [vmem:[%s592 + $0x61] sm:$0xff]
        %v1506 = vld [vmem:[%s592 + $0x69] sm:$0xff]
        %v1507 = vld [vmem:[%s592 + $0x79] sm:$0xff]
        %v1508 = vld [vmem:[%s592 + $0x81] sm:$0xff]
        %v1509 = vld [vmem:[%s592 + $0x91] sm:$0xff]
        %v1510 = vld [vmem:[%s592 + $0x99] sm:$0xff]
        %v1511 = vld [vmem:[%s592 + $0xa9] sm:$0xff]
        %v1512 = vld [vmem:[%s592 + $0xb1] sm:$0xff]
        %v1513 = vld [vmem:[%s592 + $0xc1] sm:$0xff]
        %v1514 = vld [vmem:[%s592 + $0xc9] sm:$0xff]
        %v1515 = vld [vmem:[%s592 + $0xd9] sm:$0xff]
        %v1516 = vld [vmem:[%s592 + $0xe1] sm:$0xff]
        %v1517 = vld [vmem:[%s592 + $0xf1] sm:$0xff]
        %v1518 = vld [vmem:[%s592 + $0xf9] sm:$0xff]
        %v1519 = vld [vmem:[%s592 + $0x109] sm:$0xff]
        %v1520 = vld [vmem:[%s592 + $0x111] sm:$0xff]
        %v1521 = vld [vmem:[%s592 + $0x121] sm:$0xff]
        %v1522 = vld [vmem:[%s592 + $0x129] sm:$0xff]
        %v1523 = vld [vmem:[%s592 + $0x139] sm:$0xff]
        %v1524 = vld [vmem:[%s592 + $0x141] sm:$0xff]
        %v1525 = vld [vmem:[%s592 + $0x151] sm:$0xff]
        %v1526 = vld [vmem:[%s592 + $0x159] sm:$0xff]
        %v1527 = vld [vmem:[%s592 + $0x169] sm:$0xff]
        %v1528 = vld [vmem:[%s592 + $0x171] sm:$0xff]
        %v1529 = vpack.c.bf16 %v1498, %v1497
        %v1530 = vpack.c.bf16 %v1500, %v1499
        %v1531 = vpack.c.bf16 %v1502, %v1501
        %v1532 = vpack.c.bf16 %v1504, %v1503
        %v1533 = vpack.c.bf16 %v1506, %v1505
        %v1534 = vpack.c.bf16 %v1508, %v1507
        %v1535 = vpack.c.bf16 %v1510, %v1509
        %v1536 = vpack.c.bf16 %v1512, %v1511
        %v1537 = vpack.c.bf16 %v1514, %v1513
        %v1538 = vpack.c.bf16 %v1516, %v1515
        %v1539 = vpack.c.bf16 %v1518, %v1517
        %v1540 = vpack.c.bf16 %v1520, %v1519
        %v1541 = vpack.c.bf16 %v1522, %v1521
        %v1542 = vpack.c.bf16 %v1524, %v1523
        %v1543 = vpack.c.bf16 %v1526, %v1525
        %v1544 = vpack.c.bf16 %v1528, %v1527
        %s1545 = scalar_lea.vmem %s1, 256
        %v1546 = vld [vmem:[%s1545] sm:$0xf]
        %v1547 = vld [vmem:[%s1545 + $0x4] sm:$0xf]
        %v1548 = vld [vmem:[%s1545 + $0x8] sm:$0xf]
        %v1549 = vld [vmem:[%s1545 + $0xc] sm:$0xf]
        %v1550 = vld [vmem:[%s1545 + $0x10] sm:$0xf]
        %v1551 = vld [vmem:[%s1545 + $0x14] sm:$0xf]
        %v1552 = vld [vmem:[%s1545 + $0x18] sm:$0xf]
        %v1553 = vld [vmem:[%s1545 + $0x1c] sm:$0xf]
        %v1554 = vld [vmem:[%s1545 + $0x20] sm:$0xf]
        %v1555 = vld [vmem:[%s1545 + $0x24] sm:$0xf]
        %v1556 = vld [vmem:[%s1545 + $0x28] sm:$0xf]
        %v1557 = vld [vmem:[%s1545 + $0x2c] sm:$0xf]
        %v1558 = vld [vmem:[%s1545 + $0x30] sm:$0xf]
        %v1559 = vld [vmem:[%s1545 + $0x34] sm:$0xf]
        %v1560 = vld [vmem:[%s1545 + $0x38] sm:$0xf]
        %v1561 = vld [vmem:[%s1545 + $0x3c] sm:$0xf]
        %v1578 = vunpack.c.l.b16 %v1546
        %v1579 = vunpack.c.l.b16 %v1547
        %v1580 = vunpack.c.l.b16 %v1548
        %v1581 = vunpack.c.l.b16 %v1549
        %v1582 = vunpack.c.l.b16 %v1550
        %v1583 = vunpack.c.l.b16 %v1551
        %v1584 = vunpack.c.l.b16 %v1552
        %v1585 = vunpack.c.l.b16 %v1553
        %v1586 = vunpack.c.l.b16 %v1554
        %v1587 = vunpack.c.l.b16 %v1555
        %v1588 = vunpack.c.l.b16 %v1556
        %v1589 = vunpack.c.l.b16 %v1557
        %v1590 = vunpack.c.l.b16 %v1558
        %v1591 = vunpack.c.l.b16 %v1559
        %v1592 = vunpack.c.l.b16 %v1560
        %v1593 = vunpack.c.l.b16 %v1561
        %v1594 = vpack.c.b16 %v1579, %v1578
        %v1595 = vpack.c.b16 %v1581, %v1580
        %v1596 = vpack.c.b16 %v1583, %v1582
        %v1597 = vpack.c.b16 %v1585, %v1584
        %v1598 = vpack.c.b16 %v1587, %v1586
        %v1599 = vpack.c.b16 %v1589, %v1588
        %v1600 = vpack.c.b16 %v1591, %v1590
        %v1601 = vpack.c.b16 %v1593, %v1592
        %1610 = vmatpush.bf16.msra.mxu0 %v1601
        %1611 = vmatpush.bf16.msra.mxu0 %v1600
        %1612 = vmatpush.bf16.msra.mxu0 %v1599
        %1613 = vmatpush.bf16.msra.mxu0 %v1598
        %1614 = vmatpush.bf16.msra.mxu0 %v1597
        %1615 = vmatpush.bf16.msra.mxu0 %v1596
        %1616 = vmatpush.bf16.msra.mxu0 %v1595
        %1617 = vmatpush.bf16.msra.mxu0 %v1594
        %1618 = vmatmul.bf16.gmra.mxu0 %v1529
        %v1619 = vpop.f32.mrf.mxu0
        %v1620 = vadd.f32 0.0, %v1619
        %v1621 = vpop.f32.mrf.mxu0
        %v1622 = vadd.f32 0.0, %v1621
        %1623 = vmatmul.bf16.gmra.mxu0 %v1530
        %v1624 = vpop.f32.mrf.mxu0
        %v1625 = vadd.f32 0.0, %v1624
        %v1626 = vpop.f32.mrf.mxu0
        %v1627 = vadd.f32 0.0, %v1626
        %1628 = vmatmul.bf16.gmra.mxu0 %v1531
        %v1629 = vpop.f32.mrf.mxu0
        %v1630 = vadd.f32 0.0, %v1629
        %v1631 = vpop.f32.mrf.mxu0
        %v1632 = vadd.f32 0.0, %v1631
        %1633 = vmatmul.bf16.gmra.mxu0 %v1532
        %v1634 = vpop.f32.mrf.mxu0
        %v1635 = vadd.f32 0.0, %v1634
        %v1636 = vpop.f32.mrf.mxu0
        %v1637 = vadd.f32 0.0, %v1636
        %1638 = vmatmul.bf16.gmra.mxu0 %v1533
        %v1639 = vpop.f32.mrf.mxu0
        %v1640 = vadd.f32 0.0, %v1639
        %v1641 = vpop.f32.mrf.mxu0
        %v1642 = vadd.f32 0.0, %v1641
        %1643 = vmatmul.bf16.gmra.mxu0 %v1534
        %v1644 = vpop.f32.mrf.mxu0
        %v1645 = vadd.f32 0.0, %v1644
        %v1646 = vpop.f32.mrf.mxu0
        %v1647 = vadd.f32 0.0, %v1646
        %1648 = vmatmul.bf16.gmra.mxu0 %v1535
        %v1649 = vpop.f32.mrf.mxu0
        %v1650 = vadd.f32 0.0, %v1649
        %v1651 = vpop.f32.mrf.mxu0
        %v1652 = vadd.f32 0.0, %v1651
        %1653 = vmatmul.bf16.gmra.mxu0 %v1536
        %v1654 = vpop.f32.mrf.mxu0
        %v1655 = vadd.f32 0.0, %v1654
        %v1656 = vpop.f32.mrf.mxu0
        %v1657 = vadd.f32 0.0, %v1656
        %1658 = vmatmul.bf16.gmra.mxu0 %v1537
        %v1659 = vpop.f32.mrf.mxu0
        %v1660 = vadd.f32 0.0, %v1659
        %v1661 = vpop.f32.mrf.mxu0
        %v1662 = vadd.f32 0.0, %v1661
        %1663 = vmatmul.bf16.gmra.mxu0 %v1538
        %v1664 = vpop.f32.mrf.mxu0
        %v1665 = vadd.f32 0.0, %v1664
        %v1666 = vpop.f32.mrf.mxu0
        %v1667 = vadd.f32 0.0, %v1666
        %1668 = vmatmul.bf16.gmra.mxu0 %v1539
        %v1669 = vpop.f32.mrf.mxu0
        %v1670 = vadd.f32 0.0, %v1669
        %v1671 = vpop.f32.mrf.mxu0
        %v1672 = vadd.f32 0.0, %v1671
        %1673 = vmatmul.bf16.gmra.mxu0 %v1540
        %v1674 = vpop.f32.mrf.mxu0
        %v1675 = vadd.f32 0.0, %v1674
        %v1676 = vpop.f32.mrf.mxu0
        %v1677 = vadd.f32 0.0, %v1676
        %1678 = vmatmul.bf16.gmra.mxu0 %v1541
        %v1679 = vpop.f32.mrf.mxu0
        %v1680 = vadd.f32 0.0, %v1679
        %v1681 = vpop.f32.mrf.mxu0
        %v1682 = vadd.f32 0.0, %v1681
        %1683 = vmatmul.bf16.gmra.mxu0 %v1542
        %v1684 = vpop.f32.mrf.mxu0
        %v1685 = vadd.f32 0.0, %v1684
        %v1686 = vpop.f32.mrf.mxu0
        %v1687 = vadd.f32 0.0, %v1686
        %1688 = vmatmul.bf16.gmra.mxu0 %v1543
        %v1689 = vpop.f32.mrf.mxu0
        %v1690 = vadd.f32 0.0, %v1689
        %v1691 = vpop.f32.mrf.mxu0
        %v1692 = vadd.f32 0.0, %v1691
        %1693 = vmatmul.bf16.gmra.mxu0 %v1544
        %v1694 = vpop.f32.mrf.mxu0
        %v1695 = vadd.f32 0.0, %v1694
        %v1696 = vpop.f32.mrf.mxu0
        %v1697 = vadd.f32 0.0, %v1696
        %1698 = vdwg.mxu0
        %v1699 = vadd.f32 %v1465, %v1620
        %v1700 = vadd.f32 %v1466, %v1622
        %v1701 = vadd.f32 %v1467, %v1625
        %v1702 = vadd.f32 %v1468, %v1627
        %v1703 = vadd.f32 %v1469, %v1630
        %v1704 = vadd.f32 %v1470, %v1632
        %v1705 = vadd.f32 %v1471, %v1635
        %v1706 = vadd.f32 %v1472, %v1637
        %v1707 = vadd.f32 %v1473, %v1640
        %v1708 = vadd.f32 %v1474, %v1642
        %v1709 = vadd.f32 %v1475, %v1645
        %v1710 = vadd.f32 %v1476, %v1647
        %v1711 = vadd.f32 %v1477, %v1650
        %v1712 = vadd.f32 %v1478, %v1652
        %v1713 = vadd.f32 %v1479, %v1655
        %v1714 = vadd.f32 %v1480, %v1657
        %v1715 = vadd.f32 %v1481, %v1660
        %v1716 = vadd.f32 %v1482, %v1662
        %v1717 = vadd.f32 %v1483, %v1665
        %v1718 = vadd.f32 %v1484, %v1667
        %v1719 = vadd.f32 %v1485, %v1670
        %v1720 = vadd.f32 %v1486, %v1672
        %v1721 = vadd.f32 %v1487, %v1675
        %v1722 = vadd.f32 %v1488, %v1677
        %v1723 = vadd.f32 %v1489, %v1680
        %v1724 = vadd.f32 %v1490, %v1682
        %v1725 = vadd.f32 %v1491, %v1685
        %v1726 = vadd.f32 %v1492, %v1687
        %v1727 = vadd.f32 %v1493, %v1690
        %v1728 = vadd.f32 %v1494, %v1692
        %v1729 = vadd.f32 %v1495, %v1695
        %v1730 = vadd.f32 %v1496, %v1697
        %v1731 = vld [vmem:[%s592 + $0x2] sm:$0xff]
        %v1732 = vld [vmem:[%s592 + $0xa] sm:$0xff]
        %v1733 = vld [vmem:[%s592 + $0x1a] sm:$0xff]
        %v1734 = vld [vmem:[%s592 + $0x22] sm:$0xff]
        %v1735 = vld [vmem:[%s592 + $0x32] sm:$0xff]
        %v1736 = vld [vmem:[%s592 + $0x3a] sm:$0xff]
        %v1737 = vld [vmem:[%s592 + $0x4a] sm:$0xff]
        %v1738 = vld [vmem:[%s592 + $0x52] sm:$0xff]
        %v1739 = vld [vmem:[%s592 + $0x62] sm:$0xff]
        %v1740 = vld [vmem:[%s592 + $0x6a] sm:$0xff]
        %v1741 = vld [vmem:[%s592 + $0x7a] sm:$0xff]
        %v1742 = vld [vmem:[%s592 + $0x82] sm:$0xff]
        %v1743 = vld [vmem:[%s592 + $0x92] sm:$0xff]
        %v1744 = vld [vmem:[%s592 + $0x9a] sm:$0xff]
        %v1745 = vld [vmem:[%s592 + $0xaa] sm:$0xff]
        %v1746 = vld [vmem:[%s592 + $0xb2] sm:$0xff]
        %v1747 = vld [vmem:[%s592 + $0xc2] sm:$0xff]
        %v1748 = vld [vmem:[%s592 + $0xca] sm:$0xff]
        %v1749 = vld [vmem:[%s592 + $0xda] sm:$0xff]
        %v1750 = vld [vmem:[%s592 + $0xe2] sm:$0xff]
        %v1751 = vld [vmem:[%s592 + $0xf2] sm:$0xff]
        %v1752 = vld [vmem:[%s592 + $0xfa] sm:$0xff]
        %v1753 = vld [vmem:[%s592 + $0x10a] sm:$0xff]
        %v1754 = vld [vmem:[%s592 + $0x112] sm:$0xff]
        %v1755 = vld [vmem:[%s592 + $0x122] sm:$0xff]
        %v1756 = vld [vmem:[%s592 + $0x12a] sm:$0xff]
        %v1757 = vld [vmem:[%s592 + $0x13a] sm:$0xff]
        %v1758 = vld [vmem:[%s592 + $0x142] sm:$0xff]
        %v1759 = vld [vmem:[%s592 + $0x152] sm:$0xff]
        %v1760 = vld [vmem:[%s592 + $0x15a] sm:$0xff]
        %v1761 = vld [vmem:[%s592 + $0x16a] sm:$0xff]
        %v1762 = vld [vmem:[%s592 + $0x172] sm:$0xff]
        %v1763 = vpack.c.bf16 %v1732, %v1731
        %v1764 = vpack.c.bf16 %v1734, %v1733
        %v1765 = vpack.c.bf16 %v1736, %v1735
        %v1766 = vpack.c.bf16 %v1738, %v1737
        %v1767 = vpack.c.bf16 %v1740, %v1739
        %v1768 = vpack.c.bf16 %v1742, %v1741
        %v1769 = vpack.c.bf16 %v1744, %v1743
        %v1770 = vpack.c.bf16 %v1746, %v1745
        %v1771 = vpack.c.bf16 %v1748, %v1747
        %v1772 = vpack.c.bf16 %v1750, %v1749
        %v1773 = vpack.c.bf16 %v1752, %v1751
        %v1774 = vpack.c.bf16 %v1754, %v1753
        %v1775 = vpack.c.bf16 %v1756, %v1755
        %v1776 = vpack.c.bf16 %v1758, %v1757
        %v1777 = vpack.c.bf16 %v1760, %v1759
        %v1778 = vpack.c.bf16 %v1762, %v1761
        %s1779 = scalar_lea.vmem %s1, 320
        %v1780 = vld [vmem:[%s1779] sm:$0xf]
        %v1781 = vld [vmem:[%s1779 + $0x4] sm:$0xf]
        %v1782 = vld [vmem:[%s1779 + $0x8] sm:$0xf]
        %v1783 = vld [vmem:[%s1779 + $0xc] sm:$0xf]
        %v1784 = vld [vmem:[%s1779 + $0x10] sm:$0xf]
        %v1785 = vld [vmem:[%s1779 + $0x14] sm:$0xf]
        %v1786 = vld [vmem:[%s1779 + $0x18] sm:$0xf]
        %v1787 = vld [vmem:[%s1779 + $0x1c] sm:$0xf]
        %v1788 = vld [vmem:[%s1779 + $0x20] sm:$0xf]
        %v1789 = vld [vmem:[%s1779 + $0x24] sm:$0xf]
        %v1790 = vld [vmem:[%s1779 + $0x28] sm:$0xf]
        %v1791 = vld [vmem:[%s1779 + $0x2c] sm:$0xf]
        %v1792 = vld [vmem:[%s1779 + $0x30] sm:$0xf]
        %v1793 = vld [vmem:[%s1779 + $0x34] sm:$0xf]
        %v1794 = vld [vmem:[%s1779 + $0x38] sm:$0xf]
        %v1795 = vld [vmem:[%s1779 + $0x3c] sm:$0xf]
        %v1812 = vunpack.c.l.b16 %v1780
        %v1813 = vunpack.c.l.b16 %v1781
        %v1814 = vunpack.c.l.b16 %v1782
        %v1815 = vunpack.c.l.b16 %v1783
        %v1816 = vunpack.c.l.b16 %v1784
        %v1817 = vunpack.c.l.b16 %v1785
        %v1818 = vunpack.c.l.b16 %v1786
        %v1819 = vunpack.c.l.b16 %v1787
        %v1820 = vunpack.c.l.b16 %v1788
        %v1821 = vunpack.c.l.b16 %v1789
        %v1822 = vunpack.c.l.b16 %v1790
        %v1823 = vunpack.c.l.b16 %v1791
        %v1824 = vunpack.c.l.b16 %v1792
        %v1825 = vunpack.c.l.b16 %v1793
        %v1826 = vunpack.c.l.b16 %v1794
        %v1827 = vunpack.c.l.b16 %v1795
        %v1828 = vpack.c.b16 %v1813, %v1812
        %v1829 = vpack.c.b16 %v1815, %v1814
        %v1830 = vpack.c.b16 %v1817, %v1816
        %v1831 = vpack.c.b16 %v1819, %v1818
        %v1832 = vpack.c.b16 %v1821, %v1820
        %v1833 = vpack.c.b16 %v1823, %v1822
        %v1834 = vpack.c.b16 %v1825, %v1824
        %v1835 = vpack.c.b16 %v1827, %v1826
        %1844 = vmatpush.bf16.msra.mxu0 %v1835
        %1845 = vmatpush.bf16.msra.mxu0 %v1834
        %1846 = vmatpush.bf16.msra.mxu0 %v1833
        %1847 = vmatpush.bf16.msra.mxu0 %v1832
        %1848 = vmatpush.bf16.msra.mxu0 %v1831
        %1849 = vmatpush.bf16.msra.mxu0 %v1830
        %1850 = vmatpush.bf16.msra.mxu0 %v1829
        %1851 = vmatpush.bf16.msra.mxu0 %v1828
        %1852 = vmatmul.bf16.gmra.mxu0 %v1763
        %v1853 = vpop.f32.mrf.mxu0
        %v1854 = vadd.f32 0.0, %v1853
        %v1855 = vpop.f32.mrf.mxu0
        %v1856 = vadd.f32 0.0, %v1855
        %1857 = vmatmul.bf16.gmra.mxu0 %v1764
        %v1858 = vpop.f32.mrf.mxu0
        %v1859 = vadd.f32 0.0, %v1858
        %v1860 = vpop.f32.mrf.mxu0
        %v1861 = vadd.f32 0.0, %v1860
        %1862 = vmatmul.bf16.gmra.mxu0 %v1765
        %v1863 = vpop.f32.mrf.mxu0
        %v1864 = vadd.f32 0.0, %v1863
        %v1865 = vpop.f32.mrf.mxu0
        %v1866 = vadd.f32 0.0, %v1865
        %1867 = vmatmul.bf16.gmra.mxu0 %v1766
        %v1868 = vpop.f32.mrf.mxu0
        %v1869 = vadd.f32 0.0, %v1868
        %v1870 = vpop.f32.mrf.mxu0
        %v1871 = vadd.f32 0.0, %v1870
        %1872 = vmatmul.bf16.gmra.mxu0 %v1767
        %v1873 = vpop.f32.mrf.mxu0
        %v1874 = vadd.f32 0.0, %v1873
        %v1875 = vpop.f32.mrf.mxu0
        %v1876 = vadd.f32 0.0, %v1875
        %1877 = vmatmul.bf16.gmra.mxu0 %v1768
        %v1878 = vpop.f32.mrf.mxu0
        %v1879 = vadd.f32 0.0, %v1878
        %v1880 = vpop.f32.mrf.mxu0
        %v1881 = vadd.f32 0.0, %v1880
        %1882 = vmatmul.bf16.gmra.mxu0 %v1769
        %v1883 = vpop.f32.mrf.mxu0
        %v1884 = vadd.f32 0.0, %v1883
        %v1885 = vpop.f32.mrf.mxu0
        %v1886 = vadd.f32 0.0, %v1885
        %1887 = vmatmul.bf16.gmra.mxu0 %v1770
        %v1888 = vpop.f32.mrf.mxu0
        %v1889 = vadd.f32 0.0, %v1888
        %v1890 = vpop.f32.mrf.mxu0
        %v1891 = vadd.f32 0.0, %v1890
        %1892 = vmatmul.bf16.gmra.mxu0 %v1771
        %v1893 = vpop.f32.mrf.mxu0
        %v1894 = vadd.f32 0.0, %v1893
        %v1895 = vpop.f32.mrf.mxu0
        %v1896 = vadd.f32 0.0, %v1895
        %1897 = vmatmul.bf16.gmra.mxu0 %v1772
        %v1898 = vpop.f32.mrf.mxu0
        %v1899 = vadd.f32 0.0, %v1898
        %v1900 = vpop.f32.mrf.mxu0
        %v1901 = vadd.f32 0.0, %v1900
        %1902 = vmatmul.bf16.gmra.mxu0 %v1773
        %v1903 = vpop.f32.mrf.mxu0
        %v1904 = vadd.f32 0.0, %v1903
        %v1905 = vpop.f32.mrf.mxu0
        %v1906 = vadd.f32 0.0, %v1905
        %1907 = vmatmul.bf16.gmra.mxu0 %v1774
        %v1908 = vpop.f32.mrf.mxu0
        %v1909 = vadd.f32 0.0, %v1908
        %v1910 = vpop.f32.mrf.mxu0
        %v1911 = vadd.f32 0.0, %v1910
        %1912 = vmatmul.bf16.gmra.mxu0 %v1775
        %v1913 = vpop.f32.mrf.mxu0
        %v1914 = vadd.f32 0.0, %v1913
        %v1915 = vpop.f32.mrf.mxu0
        %v1916 = vadd.f32 0.0, %v1915
        %1917 = vmatmul.bf16.gmra.mxu0 %v1776
        %v1918 = vpop.f32.mrf.mxu0
        %v1919 = vadd.f32 0.0, %v1918
        %v1920 = vpop.f32.mrf.mxu0
        %v1921 = vadd.f32 0.0, %v1920
        %1922 = vmatmul.bf16.gmra.mxu0 %v1777
        %v1923 = vpop.f32.mrf.mxu0
        %v1924 = vadd.f32 0.0, %v1923
        %v1925 = vpop.f32.mrf.mxu0
        %v1926 = vadd.f32 0.0, %v1925
        %1927 = vmatmul.bf16.gmra.mxu0 %v1778
        %v1928 = vpop.f32.mrf.mxu0
        %v1929 = vadd.f32 0.0, %v1928
        %v1930 = vpop.f32.mrf.mxu0
        %v1931 = vadd.f32 0.0, %v1930
        %1932 = vdwg.mxu0
        %v1933 = vadd.f32 %v1699, %v1854
        %v1934 = vadd.f32 %v1700, %v1856
        %v1935 = vadd.f32 %v1701, %v1859
        %v1936 = vadd.f32 %v1702, %v1861
        %v1937 = vadd.f32 %v1703, %v1864
        %v1938 = vadd.f32 %v1704, %v1866
        %v1939 = vadd.f32 %v1705, %v1869
        %v1940 = vadd.f32 %v1706, %v1871
        %v1941 = vadd.f32 %v1707, %v1874
        %v1942 = vadd.f32 %v1708, %v1876
        %v1943 = vadd.f32 %v1709, %v1879
        %v1944 = vadd.f32 %v1710, %v1881
        %v1945 = vadd.f32 %v1711, %v1884
        %v1946 = vadd.f32 %v1712, %v1886
        %v1947 = vadd.f32 %v1713, %v1889
        %v1948 = vadd.f32 %v1714, %v1891
        %v1949 = vadd.f32 %v1715, %v1894
        %v1950 = vadd.f32 %v1716, %v1896
        %v1951 = vadd.f32 %v1717, %v1899
        %v1952 = vadd.f32 %v1718, %v1901
        %v1953 = vadd.f32 %v1719, %v1904
        %v1954 = vadd.f32 %v1720, %v1906
        %v1955 = vadd.f32 %v1721, %v1909
        %v1956 = vadd.f32 %v1722, %v1911
        %v1957 = vadd.f32 %v1723, %v1914
        %v1958 = vadd.f32 %v1724, %v1916
        %v1959 = vadd.f32 %v1725, %v1919
        %v1960 = vadd.f32 %v1726, %v1921
        %v1961 = vadd.f32 %v1727, %v1924
        %v1962 = vadd.f32 %v1728, %v1926
        %v1963 = vadd.f32 %v1729, %v1929
        %v1964 = vadd.f32 %v1730, %v1931
        %s1965 = scalar_lea.vmem [#allocation2], 48
        %v1966 = vld [vmem:[%s1965] sm:$0xff]
        %v1967 = vld [vmem:[%s1965 + $0x8] sm:$0xff]
        %v1968 = vld [vmem:[%s1965 + $0x18] sm:$0xff]
        %v1969 = vld [vmem:[%s1965 + $0x20] sm:$0xff]
        %v1970 = vld [vmem:[%s1965 + $0x30] sm:$0xff]
        %v1971 = vld [vmem:[%s1965 + $0x38] sm:$0xff]
        %v1972 = vld [vmem:[%s1965 + $0x48] sm:$0xff]
        %v1973 = vld [vmem:[%s1965 + $0x50] sm:$0xff]
        %v1974 = vld [vmem:[%s1965 + $0x60] sm:$0xff]
        %v1975 = vld [vmem:[%s1965 + $0x68] sm:$0xff]
        %v1976 = vld [vmem:[%s1965 + $0x78] sm:$0xff]
        %v1977 = vld [vmem:[%s1965 + $0x80] sm:$0xff]
        %v1978 = vld [vmem:[%s1965 + $0x90] sm:$0xff]
        %v1979 = vld [vmem:[%s1965 + $0x98] sm:$0xff]
        %v1980 = vld [vmem:[%s1965 + $0xa8] sm:$0xff]
        %v1981 = vld [vmem:[%s1965 + $0xb0] sm:$0xff]
        %v1982 = vld [vmem:[%s1965 + $0xc0] sm:$0xff]
        %v1983 = vld [vmem:[%s1965 + $0xc8] sm:$0xff]
        %v1984 = vld [vmem:[%s1965 + $0xd8] sm:$0xff]
        %v1985 = vld [vmem:[%s1965 + $0xe0] sm:$0xff]
        %v1986 = vld [vmem:[%s1965 + $0xf0] sm:$0xff]
        %v1987 = vld [vmem:[%s1965 + $0xf8] sm:$0xff]
        %v1988 = vld [vmem:[%s1965 + $0x108] sm:$0xff]
        %v1989 = vld [vmem:[%s1965 + $0x110] sm:$0xff]
        %v1990 = vld [vmem:[%s1965 + $0x120] sm:$0xff]
        %v1991 = vld [vmem:[%s1965 + $0x128] sm:$0xff]
        %v1992 = vld [vmem:[%s1965 + $0x138] sm:$0xff]
        %v1993 = vld [vmem:[%s1965 + $0x140] sm:$0xff]
        %v1994 = vld [vmem:[%s1965 + $0x150] sm:$0xff]
        %v1995 = vld [vmem:[%s1965 + $0x158] sm:$0xff]
        %v1996 = vld [vmem:[%s1965 + $0x168] sm:$0xff]
        %v1997 = vld [vmem:[%s1965 + $0x170] sm:$0xff]
        %v1998 = vpack.c.bf16 %v1967, %v1966
        %v1999 = vpack.c.bf16 %v1969, %v1968
        %v2000 = vpack.c.bf16 %v1971, %v1970
        %v2001 = vpack.c.bf16 %v1973, %v1972
        %v2002 = vpack.c.bf16 %v1975, %v1974
        %v2003 = vpack.c.bf16 %v1977, %v1976
        %v2004 = vpack.c.bf16 %v1979, %v1978
        %v2005 = vpack.c.bf16 %v1981, %v1980
        %v2006 = vpack.c.bf16 %v1983, %v1982
        %v2007 = vpack.c.bf16 %v1985, %v1984
        %v2008 = vpack.c.bf16 %v1987, %v1986
        %v2009 = vpack.c.bf16 %v1989, %v1988
        %v2010 = vpack.c.bf16 %v1991, %v1990
        %v2011 = vpack.c.bf16 %v1993, %v1992
        %v2012 = vpack.c.bf16 %v1995, %v1994
        %v2013 = vpack.c.bf16 %v1997, %v1996
        %s2014 = scalar_lea.vmem %s1, 384
        %v2015 = vld [vmem:[%s2014] sm:$0xf]
        %v2016 = vld [vmem:[%s2014 + $0x4] sm:$0xf]
        %v2017 = vld [vmem:[%s2014 + $0x8] sm:$0xf]
        %v2018 = vld [vmem:[%s2014 + $0xc] sm:$0xf]
        %v2019 = vld [vmem:[%s2014 + $0x10] sm:$0xf]
        %v2020 = vld [vmem:[%s2014 + $0x14] sm:$0xf]
        %v2021 = vld [vmem:[%s2014 + $0x18] sm:$0xf]
        %v2022 = vld [vmem:[%s2014 + $0x1c] sm:$0xf]
        %v2023 = vld [vmem:[%s2014 + $0x20] sm:$0xf]
        %v2024 = vld [vmem:[%s2014 + $0x24] sm:$0xf]
        %v2025 = vld [vmem:[%s2014 + $0x28] sm:$0xf]
        %v2026 = vld [vmem:[%s2014 + $0x2c] sm:$0xf]
        %v2027 = vld [vmem:[%s2014 + $0x30] sm:$0xf]
        %v2028 = vld [vmem:[%s2014 + $0x34] sm:$0xf]
        %v2029 = vld [vmem:[%s2014 + $0x38] sm:$0xf]
        %v2030 = vld [vmem:[%s2014 + $0x3c] sm:$0xf]
        %v2047 = vunpack.c.l.b16 %v2015
        %v2048 = vunpack.c.l.b16 %v2016
        %v2049 = vunpack.c.l.b16 %v2017
        %v2050 = vunpack.c.l.b16 %v2018
        %v2051 = vunpack.c.l.b16 %v2019
        %v2052 = vunpack.c.l.b16 %v2020
        %v2053 = vunpack.c.l.b16 %v2021
        %v2054 = vunpack.c.l.b16 %v2022
        %v2055 = vunpack.c.l.b16 %v2023
        %v2056 = vunpack.c.l.b16 %v2024
        %v2057 = vunpack.c.l.b16 %v2025
        %v2058 = vunpack.c.l.b16 %v2026
        %v2059 = vunpack.c.l.b16 %v2027
        %v2060 = vunpack.c.l.b16 %v2028
        %v2061 = vunpack.c.l.b16 %v2029
        %v2062 = vunpack.c.l.b16 %v2030
        %v2063 = vpack.c.b16 %v2048, %v2047
        %v2064 = vpack.c.b16 %v2050, %v2049
        %v2065 = vpack.c.b16 %v2052, %v2051
        %v2066 = vpack.c.b16 %v2054, %v2053
        %v2067 = vpack.c.b16 %v2056, %v2055
        %v2068 = vpack.c.b16 %v2058, %v2057
        %v2069 = vpack.c.b16 %v2060, %v2059
        %v2070 = vpack.c.b16 %v2062, %v2061
        %2079 = vmatpush.bf16.msra.mxu0 %v2070
        %2080 = vmatpush.bf16.msra.mxu0 %v2069
        %2081 = vmatpush.bf16.msra.mxu0 %v2068
        %2082 = vmatpush.bf16.msra.mxu0 %v2067
        %2083 = vmatpush.bf16.msra.mxu0 %v2066
        %2084 = vmatpush.bf16.msra.mxu0 %v2065
        %2085 = vmatpush.bf16.msra.mxu0 %v2064
        %2086 = vmatpush.bf16.msra.mxu0 %v2063
        %2087 = vmatmul.bf16.gmra.mxu0 %v1998
        %v2088 = vpop.f32.mrf.mxu0
        %v2089 = vadd.f32 0.0, %v2088
        %v2090 = vpop.f32.mrf.mxu0
        %v2091 = vadd.f32 0.0, %v2090
        %2092 = vmatmul.bf16.gmra.mxu0 %v1999
        %v2093 = vpop.f32.mrf.mxu0
        %v2094 = vadd.f32 0.0, %v2093
        %v2095 = vpop.f32.mrf.mxu0
        %v2096 = vadd.f32 0.0, %v2095
        %2097 = vmatmul.bf16.gmra.mxu0 %v2000
        %v2098 = vpop.f32.mrf.mxu0
        %v2099 = vadd.f32 0.0, %v2098
        %v2100 = vpop.f32.mrf.mxu0
        %v2101 = vadd.f32 0.0, %v2100
        %2102 = vmatmul.bf16.gmra.mxu0 %v2001
        %v2103 = vpop.f32.mrf.mxu0
        %v2104 = vadd.f32 0.0, %v2103
        %v2105 = vpop.f32.mrf.mxu0
        %v2106 = vadd.f32 0.0, %v2105
        %2107 = vmatmul.bf16.gmra.mxu0 %v2002
        %v2108 = vpop.f32.mrf.mxu0
        %v2109 = vadd.f32 0.0, %v2108
        %v2110 = vpop.f32.mrf.mxu0
        %v2111 = vadd.f32 0.0, %v2110
        %2112 = vmatmul.bf16.gmra.mxu0 %v2003
        %v2113 = vpop.f32.mrf.mxu0
        %v2114 = vadd.f32 0.0, %v2113
        %v2115 = vpop.f32.mrf.mxu0
        %v2116 = vadd.f32 0.0, %v2115
        %2117 = vmatmul.bf16.gmra.mxu0 %v2004
        %v2118 = vpop.f32.mrf.mxu0
        %v2119 = vadd.f32 0.0, %v2118
        %v2120 = vpop.f32.mrf.mxu0
        %v2121 = vadd.f32 0.0, %v2120
        %2122 = vmatmul.bf16.gmra.mxu0 %v2005
        %v2123 = vpop.f32.mrf.mxu0
        %v2124 = vadd.f32 0.0, %v2123
        %v2125 = vpop.f32.mrf.mxu0
        %v2126 = vadd.f32 0.0, %v2125
        %2127 = vmatmul.bf16.gmra.mxu0 %v2006
        %v2128 = vpop.f32.mrf.mxu0
        %v2129 = vadd.f32 0.0, %v2128
        %v2130 = vpop.f32.mrf.mxu0
        %v2131 = vadd.f32 0.0, %v2130
        %2132 = vmatmul.bf16.gmra.mxu0 %v2007
        %v2133 = vpop.f32.mrf.mxu0
        %v2134 = vadd.f32 0.0, %v2133
        %v2135 = vpop.f32.mrf.mxu0
        %v2136 = vadd.f32 0.0, %v2135
        %2137 = vmatmul.bf16.gmra.mxu0 %v2008
        %v2138 = vpop.f32.mrf.mxu0
        %v2139 = vadd.f32 0.0, %v2138
        %v2140 = vpop.f32.mrf.mxu0
        %v2141 = vadd.f32 0.0, %v2140
        %2142 = vmatmul.bf16.gmra.mxu0 %v2009
        %v2143 = vpop.f32.mrf.mxu0
        %v2144 = vadd.f32 0.0, %v2143
        %v2145 = vpop.f32.mrf.mxu0
        %v2146 = vadd.f32 0.0, %v2145
        %2147 = vmatmul.bf16.gmra.mxu0 %v2010
        %v2148 = vpop.f32.mrf.mxu0
        %v2149 = vadd.f32 0.0, %v2148
        %v2150 = vpop.f32.mrf.mxu0
        %v2151 = vadd.f32 0.0, %v2150
        %2152 = vmatmul.bf16.gmra.mxu0 %v2011
        %v2153 = vpop.f32.mrf.mxu0
        %v2154 = vadd.f32 0.0, %v2153
        %v2155 = vpop.f32.mrf.mxu0
        %v2156 = vadd.f32 0.0, %v2155
        %2157 = vmatmul.bf16.gmra.mxu0 %v2012
        %v2158 = vpop.f32.mrf.mxu0
        %v2159 = vadd.f32 0.0, %v2158
        %v2160 = vpop.f32.mrf.mxu0
        %v2161 = vadd.f32 0.0, %v2160
        %2162 = vmatmul.bf16.gmra.mxu0 %v2013
        %v2163 = vpop.f32.mrf.mxu0
        %v2164 = vadd.f32 0.0, %v2163
        %v2165 = vpop.f32.mrf.mxu0
        %v2166 = vadd.f32 0.0, %v2165
        %2167 = vdwg.mxu0
        %v2168 = vadd.f32 %v1933, %v2089
        %v2169 = vadd.f32 %v1934, %v2091
        %v2170 = vadd.f32 %v1935, %v2094
        %v2171 = vadd.f32 %v1936, %v2096
        %v2172 = vadd.f32 %v1937, %v2099
        %v2173 = vadd.f32 %v1938, %v2101
        %v2174 = vadd.f32 %v1939, %v2104
        %v2175 = vadd.f32 %v1940, %v2106
        %v2176 = vadd.f32 %v1941, %v2109
        %v2177 = vadd.f32 %v1942, %v2111
        %v2178 = vadd.f32 %v1943, %v2114
        %v2179 = vadd.f32 %v1944, %v2116
        %v2180 = vadd.f32 %v1945, %v2119
        %v2181 = vadd.f32 %v1946, %v2121
        %v2182 = vadd.f32 %v1947, %v2124
        %v2183 = vadd.f32 %v1948, %v2126
        %v2184 = vadd.f32 %v1949, %v2129
        %v2185 = vadd.f32 %v1950, %v2131
        %v2186 = vadd.f32 %v1951, %v2134
        %v2187 = vadd.f32 %v1952, %v2136
        %v2188 = vadd.f32 %v1953, %v2139
        %v2189 = vadd.f32 %v1954, %v2141
        %v2190 = vadd.f32 %v1955, %v2144
        %v2191 = vadd.f32 %v1956, %v2146
        %v2192 = vadd.f32 %v1957, %v2149
        %v2193 = vadd.f32 %v1958, %v2151
        %v2194 = vadd.f32 %v1959, %v2154
        %v2195 = vadd.f32 %v1960, %v2156
        %v2196 = vadd.f32 %v1961, %v2159
        %v2197 = vadd.f32 %v1962, %v2161
        %v2198 = vadd.f32 %v1963, %v2164
        %v2199 = vadd.f32 %v1964, %v2166
        %v2200 = vld [vmem:[%s1965 + $0x1] sm:$0xff]
        %v2201 = vld [vmem:[%s1965 + $0x9] sm:$0xff]
        %v2202 = vld [vmem:[%s1965 + $0x19] sm:$0xff]
        %v2203 = vld [vmem:[%s1965 + $0x21] sm:$0xff]
        %v2204 = vld [vmem:[%s1965 + $0x31] sm:$0xff]
        %v2205 = vld [vmem:[%s1965 + $0x39] sm:$0xff]
        %v2206 = vld [vmem:[%s1965 + $0x49] sm:$0xff]
        %v2207 = vld [vmem:[%s1965 + $0x51] sm:$0xff]
        %v2208 = vld [vmem:[%s1965 + $0x61] sm:$0xff]
        %v2209 = vld [vmem:[%s1965 + $0x69] sm:$0xff]
        %v2210 = vld [vmem:[%s1965 + $0x79] sm:$0xff]
        %v2211 = vld [vmem:[%s1965 + $0x81] sm:$0xff]
        %v2212 = vld [vmem:[%s1965 + $0x91] sm:$0xff]
        %v2213 = vld [vmem:[%s1965 + $0x99] sm:$0xff]
        %v2214 = vld [vmem:[%s1965 + $0xa9] sm:$0xff]
        %v2215 = vld [vmem:[%s1965 + $0xb1] sm:$0xff]
        %v2216 = vld [vmem:[%s1965 + $0xc1] sm:$0xff]
        %v2217 = vld [vmem:[%s1965 + $0xc9] sm:$0xff]
        %v2218 = vld [vmem:[%s1965 + $0xd9] sm:$0xff]
        %v2219 = vld [vmem:[%s1965 + $0xe1] sm:$0xff]
        %v2220 = vld [vmem:[%s1965 + $0xf1] sm:$0xff]
        %v2221 = vld [vmem:[%s1965 + $0xf9] sm:$0xff]
        %v2222 = vld [vmem:[%s1965 + $0x109] sm:$0xff]
        %v2223 = vld [vmem:[%s1965 + $0x111] sm:$0xff]
        %v2224 = vld [vmem:[%s1965 + $0x121] sm:$0xff]
        %v2225 = vld [vmem:[%s1965 + $0x129] sm:$0xff]
        %v2226 = vld [vmem:[%s1965 + $0x139] sm:$0xff]
        %v2227 = vld [vmem:[%s1965 + $0x141] sm:$0xff]
        %v2228 = vld [vmem:[%s1965 + $0x151] sm:$0xff]
        %v2229 = vld [vmem:[%s1965 + $0x159] sm:$0xff]
        %v2230 = vld [vmem:[%s1965 + $0x169] sm:$0xff]
        %v2231 = vld [vmem:[%s1965 + $0x171] sm:$0xff]
        %v2232 = vpack.c.bf16 %v2201, %v2200
        %v2233 = vpack.c.bf16 %v2203, %v2202
        %v2234 = vpack.c.bf16 %v2205, %v2204
        %v2235 = vpack.c.bf16 %v2207, %v2206
        %v2236 = vpack.c.bf16 %v2209, %v2208
        %v2237 = vpack.c.bf16 %v2211, %v2210
        %v2238 = vpack.c.bf16 %v2213, %v2212
        %v2239 = vpack.c.bf16 %v2215, %v2214
        %v2240 = vpack.c.bf16 %v2217, %v2216
        %v2241 = vpack.c.bf16 %v2219, %v2218
        %v2242 = vpack.c.bf16 %v2221, %v2220
        %v2243 = vpack.c.bf16 %v2223, %v2222
        %v2244 = vpack.c.bf16 %v2225, %v2224
        %v2245 = vpack.c.bf16 %v2227, %v2226
        %v2246 = vpack.c.bf16 %v2229, %v2228
        %v2247 = vpack.c.bf16 %v2231, %v2230
        %s2248 = scalar_lea.vmem %s1, 448
        %v2249 = vld [vmem:[%s2248] sm:$0xf]
        %v2250 = vld [vmem:[%s2248 + $0x4] sm:$0xf]
        %v2251 = vld [vmem:[%s2248 + $0x8] sm:$0xf]
        %v2252 = vld [vmem:[%s2248 + $0xc] sm:$0xf]
        %v2253 = vld [vmem:[%s2248 + $0x10] sm:$0xf]
        %v2254 = vld [vmem:[%s2248 + $0x14] sm:$0xf]
        %v2255 = vld [vmem:[%s2248 + $0x18] sm:$0xf]
        %v2256 = vld [vmem:[%s2248 + $0x1c] sm:$0xf]
        %v2257 = vld [vmem:[%s2248 + $0x20] sm:$0xf]
        %v2258 = vld [vmem:[%s2248 + $0x24] sm:$0xf]
        %v2259 = vld [vmem:[%s2248 + $0x28] sm:$0xf]
        %v2260 = vld [vmem:[%s2248 + $0x2c] sm:$0xf]
        %v2261 = vld [vmem:[%s2248 + $0x30] sm:$0xf]
        %v2262 = vld [vmem:[%s2248 + $0x34] sm:$0xf]
        %v2263 = vld [vmem:[%s2248 + $0x38] sm:$0xf]
        %v2264 = vld [vmem:[%s2248 + $0x3c] sm:$0xf]
        %v2281 = vunpack.c.l.b16 %v2249
        %v2282 = vunpack.c.l.b16 %v2250
        %v2283 = vunpack.c.l.b16 %v2251
        %v2284 = vunpack.c.l.b16 %v2252
        %v2285 = vunpack.c.l.b16 %v2253
        %v2286 = vunpack.c.l.b16 %v2254
        %v2287 = vunpack.c.l.b16 %v2255
        %v2288 = vunpack.c.l.b16 %v2256
        %v2289 = vunpack.c.l.b16 %v2257
        %v2290 = vunpack.c.l.b16 %v2258
        %v2291 = vunpack.c.l.b16 %v2259
        %v2292 = vunpack.c.l.b16 %v2260
        %v2293 = vunpack.c.l.b16 %v2261
        %v2294 = vunpack.c.l.b16 %v2262
        %v2295 = vunpack.c.l.b16 %v2263
        %v2296 = vunpack.c.l.b16 %v2264
        %v2297 = vpack.c.b16 %v2282, %v2281
        %v2298 = vpack.c.b16 %v2284, %v2283
        %v2299 = vpack.c.b16 %v2286, %v2285
        %v2300 = vpack.c.b16 %v2288, %v2287
        %v2301 = vpack.c.b16 %v2290, %v2289
        %v2302 = vpack.c.b16 %v2292, %v2291
        %v2303 = vpack.c.b16 %v2294, %v2293
        %v2304 = vpack.c.b16 %v2296, %v2295
        %2313 = vmatpush.bf16.msra.mxu0 %v2304
        %2314 = vmatpush.bf16.msra.mxu0 %v2303
        %2315 = vmatpush.bf16.msra.mxu0 %v2302
        %2316 = vmatpush.bf16.msra.mxu0 %v2301
        %2317 = vmatpush.bf16.msra.mxu0 %v2300
        %2318 = vmatpush.bf16.msra.mxu0 %v2299
        %2319 = vmatpush.bf16.msra.mxu0 %v2298
        %2320 = vmatpush.bf16.msra.mxu0 %v2297
        %2321 = vmatmul.bf16.gmra.mxu0 %v2232
        %v2322 = vpop.f32.mrf.mxu0
        %v2323 = vadd.f32 0.0, %v2322
        %v2324 = vpop.f32.mrf.mxu0
        %v2325 = vadd.f32 0.0, %v2324
        %2326 = vmatmul.bf16.gmra.mxu0 %v2233
        %v2327 = vpop.f32.mrf.mxu0
        %v2328 = vadd.f32 0.0, %v2327
        %v2329 = vpop.f32.mrf.mxu0
        %v2330 = vadd.f32 0.0, %v2329
        %2331 = vmatmul.bf16.gmra.mxu0 %v2234
        %v2332 = vpop.f32.mrf.mxu0
        %v2333 = vadd.f32 0.0, %v2332
        %v2334 = vpop.f32.mrf.mxu0
        %v2335 = vadd.f32 0.0, %v2334
        %2336 = vmatmul.bf16.gmra.mxu0 %v2235
        %v2337 = vpop.f32.mrf.mxu0
        %v2338 = vadd.f32 0.0, %v2337
        %v2339 = vpop.f32.mrf.mxu0
        %v2340 = vadd.f32 0.0, %v2339
        %2341 = vmatmul.bf16.gmra.mxu0 %v2236
        %v2342 = vpop.f32.mrf.mxu0
        %v2343 = vadd.f32 0.0, %v2342
        %v2344 = vpop.f32.mrf.mxu0
        %v2345 = vadd.f32 0.0, %v2344
        %2346 = vmatmul.bf16.gmra.mxu0 %v2237
        %v2347 = vpop.f32.mrf.mxu0
        %v2348 = vadd.f32 0.0, %v2347
        %v2349 = vpop.f32.mrf.mxu0
        %v2350 = vadd.f32 0.0, %v2349
        %2351 = vmatmul.bf16.gmra.mxu0 %v2238
        %v2352 = vpop.f32.mrf.mxu0
        %v2353 = vadd.f32 0.0, %v2352
        %v2354 = vpop.f32.mrf.mxu0
        %v2355 = vadd.f32 0.0, %v2354
        %2356 = vmatmul.bf16.gmra.mxu0 %v2239
        %v2357 = vpop.f32.mrf.mxu0
        %v2358 = vadd.f32 0.0, %v2357
        %v2359 = vpop.f32.mrf.mxu0
        %v2360 = vadd.f32 0.0, %v2359
        %2361 = vmatmul.bf16.gmra.mxu0 %v2240
        %v2362 = vpop.f32.mrf.mxu0
        %v2363 = vadd.f32 0.0, %v2362
        %v2364 = vpop.f32.mrf.mxu0
        %v2365 = vadd.f32 0.0, %v2364
        %2366 = vmatmul.bf16.gmra.mxu0 %v2241
        %v2367 = vpop.f32.mrf.mxu0
        %v2368 = vadd.f32 0.0, %v2367
        %v2369 = vpop.f32.mrf.mxu0
        %v2370 = vadd.f32 0.0, %v2369
        %2371 = vmatmul.bf16.gmra.mxu0 %v2242
        %v2372 = vpop.f32.mrf.mxu0
        %v2373 = vadd.f32 0.0, %v2372
        %v2374 = vpop.f32.mrf.mxu0
        %v2375 = vadd.f32 0.0, %v2374
        %2376 = vmatmul.bf16.gmra.mxu0 %v2243
        %v2377 = vpop.f32.mrf.mxu0
        %v2378 = vadd.f32 0.0, %v2377
        %v2379 = vpop.f32.mrf.mxu0
        %v2380 = vadd.f32 0.0, %v2379
        %2381 = vmatmul.bf16.gmra.mxu0 %v2244
        %v2382 = vpop.f32.mrf.mxu0
        %v2383 = vadd.f32 0.0, %v2382
        %v2384 = vpop.f32.mrf.mxu0
        %v2385 = vadd.f32 0.0, %v2384
        %2386 = vmatmul.bf16.gmra.mxu0 %v2245
        %v2387 = vpop.f32.mrf.mxu0
        %v2388 = vadd.f32 0.0, %v2387
        %v2389 = vpop.f32.mrf.mxu0
        %v2390 = vadd.f32 0.0, %v2389
        %2391 = vmatmul.bf16.gmra.mxu0 %v2246
        %v2392 = vpop.f32.mrf.mxu0
        %v2393 = vadd.f32 0.0, %v2392
        %v2394 = vpop.f32.mrf.mxu0
        %v2395 = vadd.f32 0.0, %v2394
        %2396 = vmatmul.bf16.gmra.mxu0 %v2247
        %v2397 = vpop.f32.mrf.mxu0
        %v2398 = vadd.f32 0.0, %v2397
        %v2399 = vpop.f32.mrf.mxu0
        %v2400 = vadd.f32 0.0, %v2399
        %2401 = vdwg.mxu0
        %v2402 = vadd.f32 %v2168, %v2323
        %v2403 = vadd.f32 %v2169, %v2325
        %v2404 = vadd.f32 %v2170, %v2328
        %v2405 = vadd.f32 %v2171, %v2330
        %v2406 = vadd.f32 %v2172, %v2333
        %v2407 = vadd.f32 %v2173, %v2335
        %v2408 = vadd.f32 %v2174, %v2338
        %v2409 = vadd.f32 %v2175, %v2340
        %v2410 = vadd.f32 %v2176, %v2343
        %v2411 = vadd.f32 %v2177, %v2345
        %v2412 = vadd.f32 %v2178, %v2348
        %v2413 = vadd.f32 %v2179, %v2350
        %v2414 = vadd.f32 %v2180, %v2353
        %v2415 = vadd.f32 %v2181, %v2355
        %v2416 = vadd.f32 %v2182, %v2358
        %v2417 = vadd.f32 %v2183, %v2360
        %v2418 = vadd.f32 %v2184, %v2363
        %v2419 = vadd.f32 %v2185, %v2365
        %v2420 = vadd.f32 %v2186, %v2368
        %v2421 = vadd.f32 %v2187, %v2370
        %v2422 = vadd.f32 %v2188, %v2373
        %v2423 = vadd.f32 %v2189, %v2375
        %v2424 = vadd.f32 %v2190, %v2378
        %v2425 = vadd.f32 %v2191, %v2380
        %v2426 = vadd.f32 %v2192, %v2383
        %v2427 = vadd.f32 %v2193, %v2385
        %v2428 = vadd.f32 %v2194, %v2388
        %v2429 = vadd.f32 %v2195, %v2390
        %v2430 = vadd.f32 %v2196, %v2393
        %v2431 = vadd.f32 %v2197, %v2395
        %v2432 = vadd.f32 %v2198, %v2398
        %v2433 = vadd.f32 %v2199, %v2400
        %v2434 = vld [vmem:[%s1965 + $0x2] sm:$0xff]
        %v2435 = vld [vmem:[%s1965 + $0xa] sm:$0xff]
        %v2436 = vld [vmem:[%s1965 + $0x1a] sm:$0xff]
        %v2437 = vld [vmem:[%s1965 + $0x22] sm:$0xff]
        %v2438 = vld [vmem:[%s1965 + $0x32] sm:$0xff]
        %v2439 = vld [vmem:[%s1965 + $0x3a] sm:$0xff]
        %v2440 = vld [vmem:[%s1965 + $0x4a] sm:$0xff]
        %v2441 = vld [vmem:[%s1965 + $0x52] sm:$0xff]
        %v2442 = vld [vmem:[%s1965 + $0x62] sm:$0xff]
        %v2443 = vld [vmem:[%s1965 + $0x6a] sm:$0xff]
        %v2444 = vld [vmem:[%s1965 + $0x7a] sm:$0xff]
        %v2445 = vld [vmem:[%s1965 + $0x82] sm:$0xff]
        %v2446 = vld [vmem:[%s1965 + $0x92] sm:$0xff]
        %v2447 = vld [vmem:[%s1965 + $0x9a] sm:$0xff]
        %v2448 = vld [vmem:[%s1965 + $0xaa] sm:$0xff]
        %v2449 = vld [vmem:[%s1965 + $0xb2] sm:$0xff]
        %v2450 = vld [vmem:[%s1965 + $0xc2] sm:$0xff]
        %v2451 = vld [vmem:[%s1965 + $0xca] sm:$0xff]
        %v2452 = vld [vmem:[%s1965 + $0xda] sm:$0xff]
        %v2453 = vld [vmem:[%s1965 + $0xe2] sm:$0xff]
        %v2454 = vld [vmem:[%s1965 + $0xf2] sm:$0xff]
        %v2455 = vld [vmem:[%s1965 + $0xfa] sm:$0xff]
        %v2456 = vld [vmem:[%s1965 + $0x10a] sm:$0xff]
        %v2457 = vld [vmem:[%s1965 + $0x112] sm:$0xff]
        %v2458 = vld [vmem:[%s1965 + $0x122] sm:$0xff]
        %v2459 = vld [vmem:[%s1965 + $0x12a] sm:$0xff]
        %v2460 = vld [vmem:[%s1965 + $0x13a] sm:$0xff]
        %v2461 = vld [vmem:[%s1965 + $0x142] sm:$0xff]
        %v2462 = vld [vmem:[%s1965 + $0x152] sm:$0xff]
        %v2463 = vld [vmem:[%s1965 + $0x15a] sm:$0xff]
        %v2464 = vld [vmem:[%s1965 + $0x16a] sm:$0xff]
        %v2465 = vld [vmem:[%s1965 + $0x172] sm:$0xff]
        %v2466 = vpack.c.bf16 %v2435, %v2434
        %v2467 = vpack.c.bf16 %v2437, %v2436
        %v2468 = vpack.c.bf16 %v2439, %v2438
        %v2469 = vpack.c.bf16 %v2441, %v2440
        %v2470 = vpack.c.bf16 %v2443, %v2442
        %v2471 = vpack.c.bf16 %v2445, %v2444
        %v2472 = vpack.c.bf16 %v2447, %v2446
        %v2473 = vpack.c.bf16 %v2449, %v2448
        %v2474 = vpack.c.bf16 %v2451, %v2450
        %v2475 = vpack.c.bf16 %v2453, %v2452
        %v2476 = vpack.c.bf16 %v2455, %v2454
        %v2477 = vpack.c.bf16 %v2457, %v2456
        %v2478 = vpack.c.bf16 %v2459, %v2458
        %v2479 = vpack.c.bf16 %v2461, %v2460
        %v2480 = vpack.c.bf16 %v2463, %v2462
        %v2481 = vpack.c.bf16 %v2465, %v2464
        %s2482 = scalar_lea.vmem %s1, 512
        %v2483 = vld [vmem:[%s2482] sm:$0xf]
        %v2484 = vld [vmem:[%s2482 + $0x4] sm:$0xf]
        %v2485 = vld [vmem:[%s2482 + $0x8] sm:$0xf]
        %v2486 = vld [vmem:[%s2482 + $0xc] sm:$0xf]
        %v2487 = vld [vmem:[%s2482 + $0x10] sm:$0xf]
        %v2488 = vld [vmem:[%s2482 + $0x14] sm:$0xf]
        %v2489 = vld [vmem:[%s2482 + $0x18] sm:$0xf]
        %v2490 = vld [vmem:[%s2482 + $0x1c] sm:$0xf]
        %v2491 = vld [vmem:[%s2482 + $0x20] sm:$0xf]
        %v2492 = vld [vmem:[%s2482 + $0x24] sm:$0xf]
        %v2493 = vld [vmem:[%s2482 + $0x28] sm:$0xf]
        %v2494 = vld [vmem:[%s2482 + $0x2c] sm:$0xf]
        %v2495 = vld [vmem:[%s2482 + $0x30] sm:$0xf]
        %v2496 = vld [vmem:[%s2482 + $0x34] sm:$0xf]
        %v2497 = vld [vmem:[%s2482 + $0x38] sm:$0xf]
        %v2498 = vld [vmem:[%s2482 + $0x3c] sm:$0xf]
        %v2515 = vunpack.c.l.b16 %v2483
        %v2516 = vunpack.c.l.b16 %v2484
        %v2517 = vunpack.c.l.b16 %v2485
        %v2518 = vunpack.c.l.b16 %v2486
        %v2519 = vunpack.c.l.b16 %v2487
        %v2520 = vunpack.c.l.b16 %v2488
        %v2521 = vunpack.c.l.b16 %v2489
        %v2522 = vunpack.c.l.b16 %v2490
        %v2523 = vunpack.c.l.b16 %v2491
        %v2524 = vunpack.c.l.b16 %v2492
        %v2525 = vunpack.c.l.b16 %v2493
        %v2526 = vunpack.c.l.b16 %v2494
        %v2527 = vunpack.c.l.b16 %v2495
        %v2528 = vunpack.c.l.b16 %v2496
        %v2529 = vunpack.c.l.b16 %v2497
        %v2530 = vunpack.c.l.b16 %v2498
        %v2531 = vpack.c.b16 %v2516, %v2515
        %v2532 = vpack.c.b16 %v2518, %v2517
        %v2533 = vpack.c.b16 %v2520, %v2519
        %v2534 = vpack.c.b16 %v2522, %v2521
        %v2535 = vpack.c.b16 %v2524, %v2523
        %v2536 = vpack.c.b16 %v2526, %v2525
        %v2537 = vpack.c.b16 %v2528, %v2527
        %v2538 = vpack.c.b16 %v2530, %v2529
        %2547 = vmatpush.bf16.msra.mxu0 %v2538
        %2548 = vmatpush.bf16.msra.mxu0 %v2537
        %2549 = vmatpush.bf16.msra.mxu0 %v2536
        %2550 = vmatpush.bf16.msra.mxu0 %v2535
        %2551 = vmatpush.bf16.msra.mxu0 %v2534
        %2552 = vmatpush.bf16.msra.mxu0 %v2533
        %2553 = vmatpush.bf16.msra.mxu0 %v2532
        %2554 = vmatpush.bf16.msra.mxu0 %v2531
        %2555 = vmatmul.bf16.gmra.mxu0 %v2466
        %v2556 = vpop.f32.mrf.mxu0
        %v2557 = vadd.f32 0.0, %v2556
        %v2558 = vpop.f32.mrf.mxu0
        %v2559 = vadd.f32 0.0, %v2558
        %2560 = vmatmul.bf16.gmra.mxu0 %v2467
        %v2561 = vpop.f32.mrf.mxu0
        %v2562 = vadd.f32 0.0, %v2561
        %v2563 = vpop.f32.mrf.mxu0
        %v2564 = vadd.f32 0.0, %v2563
        %2565 = vmatmul.bf16.gmra.mxu0 %v2468
        %v2566 = vpop.f32.mrf.mxu0
        %v2567 = vadd.f32 0.0, %v2566
        %v2568 = vpop.f32.mrf.mxu0
        %v2569 = vadd.f32 0.0, %v2568
        %2570 = vmatmul.bf16.gmra.mxu0 %v2469
        %v2571 = vpop.f32.mrf.mxu0
        %v2572 = vadd.f32 0.0, %v2571
        %v2573 = vpop.f32.mrf.mxu0
        %v2574 = vadd.f32 0.0, %v2573
        %2575 = vmatmul.bf16.gmra.mxu0 %v2470
        %v2576 = vpop.f32.mrf.mxu0
        %v2577 = vadd.f32 0.0, %v2576
        %v2578 = vpop.f32.mrf.mxu0
        %v2579 = vadd.f32 0.0, %v2578
        %2580 = vmatmul.bf16.gmra.mxu0 %v2471
        %v2581 = vpop.f32.mrf.mxu0
        %v2582 = vadd.f32 0.0, %v2581
        %v2583 = vpop.f32.mrf.mxu0
        %v2584 = vadd.f32 0.0, %v2583
        %2585 = vmatmul.bf16.gmra.mxu0 %v2472
        %v2586 = vpop.f32.mrf.mxu0
        %v2587 = vadd.f32 0.0, %v2586
        %v2588 = vpop.f32.mrf.mxu0
        %v2589 = vadd.f32 0.0, %v2588
        %2590 = vmatmul.bf16.gmra.mxu0 %v2473
        %v2591 = vpop.f32.mrf.mxu0
        %v2592 = vadd.f32 0.0, %v2591
        %v2593 = vpop.f32.mrf.mxu0
        %v2594 = vadd.f32 0.0, %v2593
        %2595 = vmatmul.bf16.gmra.mxu0 %v2474
        %v2596 = vpop.f32.mrf.mxu0
        %v2597 = vadd.f32 0.0, %v2596
        %v2598 = vpop.f32.mrf.mxu0
        %v2599 = vadd.f32 0.0, %v2598
        %2600 = vmatmul.bf16.gmra.mxu0 %v2475
        %v2601 = vpop.f32.mrf.mxu0
        %v2602 = vadd.f32 0.0, %v2601
        %v2603 = vpop.f32.mrf.mxu0
        %v2604 = vadd.f32 0.0, %v2603
        %2605 = vmatmul.bf16.gmra.mxu0 %v2476
        %v2606 = vpop.f32.mrf.mxu0
        %v2607 = vadd.f32 0.0, %v2606
        %v2608 = vpop.f32.mrf.mxu0
        %v2609 = vadd.f32 0.0, %v2608
        %2610 = vmatmul.bf16.gmra.mxu0 %v2477
        %v2611 = vpop.f32.mrf.mxu0
        %v2612 = vadd.f32 0.0, %v2611
        %v2613 = vpop.f32.mrf.mxu0
        %v2614 = vadd.f32 0.0, %v2613
        %2615 = vmatmul.bf16.gmra.mxu0 %v2478
        %v2616 = vpop.f32.mrf.mxu0
        %v2617 = vadd.f32 0.0, %v2616
        %v2618 = vpop.f32.mrf.mxu0
        %v2619 = vadd.f32 0.0, %v2618
        %2620 = vmatmul.bf16.gmra.mxu0 %v2479
        %v2621 = vpop.f32.mrf.mxu0
        %v2622 = vadd.f32 0.0, %v2621
        %v2623 = vpop.f32.mrf.mxu0
        %v2624 = vadd.f32 0.0, %v2623
        %2625 = vmatmul.bf16.gmra.mxu0 %v2480
        %v2626 = vpop.f32.mrf.mxu0
        %v2627 = vadd.f32 0.0, %v2626
        %v2628 = vpop.f32.mrf.mxu0
        %v2629 = vadd.f32 0.0, %v2628
        %2630 = vmatmul.bf16.gmra.mxu0 %v2481
        %v2631 = vpop.f32.mrf.mxu0
        %v2632 = vadd.f32 0.0, %v2631
        %v2633 = vpop.f32.mrf.mxu0
        %v2634 = vadd.f32 0.0, %v2633
        %2635 = vdwg.mxu0
        %v2636 = vadd.f32 %v2402, %v2557
        %v2637 = vadd.f32 %v2403, %v2559
        %v2638 = vadd.f32 %v2404, %v2562
        %v2639 = vadd.f32 %v2405, %v2564
        %v2640 = vadd.f32 %v2406, %v2567
        %v2641 = vadd.f32 %v2407, %v2569
        %v2642 = vadd.f32 %v2408, %v2572
        %v2643 = vadd.f32 %v2409, %v2574
        %v2644 = vadd.f32 %v2410, %v2577
        %v2645 = vadd.f32 %v2411, %v2579
        %v2646 = vadd.f32 %v2412, %v2582
        %v2647 = vadd.f32 %v2413, %v2584
        %v2648 = vadd.f32 %v2414, %v2587
        %v2649 = vadd.f32 %v2415, %v2589
        %v2650 = vadd.f32 %v2416, %v2592
        %v2651 = vadd.f32 %v2417, %v2594
        %v2652 = vadd.f32 %v2418, %v2597
        %v2653 = vadd.f32 %v2419, %v2599
        %v2654 = vadd.f32 %v2420, %v2602
        %v2655 = vadd.f32 %v2421, %v2604
        %v2656 = vadd.f32 %v2422, %v2607
        %v2657 = vadd.f32 %v2423, %v2609
        %v2658 = vadd.f32 %v2424, %v2612
        %v2659 = vadd.f32 %v2425, %v2614
        %v2660 = vadd.f32 %v2426, %v2617
        %v2661 = vadd.f32 %v2427, %v2619
        %v2662 = vadd.f32 %v2428, %v2622
        %v2663 = vadd.f32 %v2429, %v2624
        %v2664 = vadd.f32 %v2430, %v2627
        %v2665 = vadd.f32 %v2431, %v2629
        %v2666 = vadd.f32 %v2432, %v2632
        %v2667 = vadd.f32 %v2433, %v2634
        %v2668 = vld [vmem:[%s2] sm:$0x1]
        %v2670 = vperm.slane %v2668, 0
        %v2672 = vadd.f32 %v2636, %v2670
        %v2673 = vadd.f32 %v2637, %v2670
        %v2674 = vadd.f32 %v2638, %v2670
        %v2675 = vadd.f32 %v2639, %v2670
        %v2676 = vadd.f32 %v2640, %v2670
        %v2677 = vadd.f32 %v2641, %v2670
        %v2678 = vadd.f32 %v2642, %v2670
        %v2679 = vadd.f32 %v2643, %v2670
        %v2680 = vadd.f32 %v2644, %v2670
        %v2681 = vadd.f32 %v2645, %v2670
        %v2682 = vadd.f32 %v2646, %v2670
        %v2683 = vadd.f32 %v2647, %v2670
        %v2684 = vadd.f32 %v2648, %v2670
        %v2685 = vadd.f32 %v2649, %v2670
        %v2686 = vadd.f32 %v2650, %v2670
        %v2687 = vadd.f32 %v2651, %v2670
        %v2688 = vadd.f32 %v2652, %v2670
        %v2689 = vadd.f32 %v2653, %v2670
        %v2690 = vadd.f32 %v2654, %v2670
        %v2691 = vadd.f32 %v2655, %v2670
        %v2692 = vadd.f32 %v2656, %v2670
        %v2693 = vadd.f32 %v2657, %v2670
        %v2694 = vadd.f32 %v2658, %v2670
        %v2695 = vadd.f32 %v2659, %v2670
        %v2696 = vadd.f32 %v2660, %v2670
        %v2697 = vadd.f32 %v2661, %v2670
        %v2698 = vadd.f32 %v2662, %v2670
        %v2699 = vadd.f32 %v2663, %v2670
        %v2700 = vadd.f32 %v2664, %v2670
        %v2701 = vadd.f32 %v2665, %v2670
        %v2702 = vadd.f32 %v2666, %v2670
        %v2703 = vadd.f32 %v2667, %v2670
        %v2704 = vmax.f32 %v2672, 0.0
        %v2705 = vmax.f32 %v2673, 0.0
        %v2706 = vmax.f32 %v2674, 0.0
        %v2707 = vmax.f32 %v2675, 0.0
        %v2708 = vmax.f32 %v2676, 0.0
        %v2709 = vmax.f32 %v2677, 0.0
        %v2710 = vmax.f32 %v2678, 0.0
        %v2711 = vmax.f32 %v2679, 0.0
        %v2712 = vmax.f32 %v2680, 0.0
        %v2713 = vmax.f32 %v2681, 0.0
        %v2714 = vmax.f32 %v2682, 0.0
        %v2715 = vmax.f32 %v2683, 0.0
        %v2716 = vmax.f32 %v2684, 0.0
        %v2717 = vmax.f32 %v2685, 0.0
        %v2718 = vmax.f32 %v2686, 0.0
        %v2719 = vmax.f32 %v2687, 0.0
        %v2720 = vmax.f32 %v2688, 0.0
        %v2721 = vmax.f32 %v2689, 0.0
        %v2722 = vmax.f32 %v2690, 0.0
        %v2723 = vmax.f32 %v2691, 0.0
        %v2724 = vmax.f32 %v2692, 0.0
        %v2725 = vmax.f32 %v2693, 0.0
        %v2726 = vmax.f32 %v2694, 0.0
        %v2727 = vmax.f32 %v2695, 0.0
        %v2728 = vmax.f32 %v2696, 0.0
        %v2729 = vmax.f32 %v2697, 0.0
        %v2730 = vmax.f32 %v2698, 0.0
        %v2731 = vmax.f32 %v2699, 0.0
        %v2732 = vmax.f32 %v2700, 0.0
        %v2733 = vmax.f32 %v2701, 0.0
        %v2734 = vmax.f32 %v2702, 0.0
        %v2735 = vmax.f32 %v2703, 0.0
        %v2736 = vld [vmem:[%s5] sm:$0x1]
        %v2738 = vperm.slane %v2736, 0
        %v2740 = vmul.f32 %v2704, %v2738
        %v2741 = vmul.f32 %v2705, %v2738
        %v2742 = vmul.f32 %v2706, %v2738
        %v2743 = vmul.f32 %v2707, %v2738
        %v2744 = vmul.f32 %v2708, %v2738
        %v2745 = vmul.f32 %v2709, %v2738
        %v2746 = vmul.f32 %v2710, %v2738
        %v2747 = vmul.f32 %v2711, %v2738
        %v2748 = vmul.f32 %v2712, %v2738
        %v2749 = vmul.f32 %v2713, %v2738
        %v2750 = vmul.f32 %v2714, %v2738
        %v2751 = vmul.f32 %v2715, %v2738
        %v2752 = vmul.f32 %v2716, %v2738
        %v2753 = vmul.f32 %v2717, %v2738
        %v2754 = vmul.f32 %v2718, %v2738
        %v2755 = vmul.f32 %v2719, %v2738
        %v2756 = vmul.f32 %v2720, %v2738
        %v2757 = vmul.f32 %v2721, %v2738
        %v2758 = vmul.f32 %v2722, %v2738
        %v2759 = vmul.f32 %v2723, %v2738
        %v2760 = vmul.f32 %v2724, %v2738
        %v2761 = vmul.f32 %v2725, %v2738
        %v2762 = vmul.f32 %v2726, %v2738
        %v2763 = vmul.f32 %v2727, %v2738
        %v2764 = vmul.f32 %v2728, %v2738
        %v2765 = vmul.f32 %v2729, %v2738
        %v2766 = vmul.f32 %v2730, %v2738
        %v2767 = vmul.f32 %v2731, %v2738
        %v2768 = vmul.f32 %v2732, %v2738
        %v2769 = vmul.f32 %v2733, %v2738
        %v2770 = vmul.f32 %v2734, %v2738
        %v2771 = vmul.f32 %v2735, %v2738
        %v2772 = vld [vmem:[%s6] sm:$0x1]
        %v2774 = vperm.slane %v2772, 0
        %v2776 = vadd.f32 %v2740, %v2774
        %v2777 = vadd.f32 %v2741, %v2774
        %v2778 = vadd.f32 %v2742, %v2774
        %v2779 = vadd.f32 %v2743, %v2774
        %v2780 = vadd.f32 %v2744, %v2774
        %v2781 = vadd.f32 %v2745, %v2774
        %v2782 = vadd.f32 %v2746, %v2774
        %v2783 = vadd.f32 %v2747, %v2774
        %v2784 = vadd.f32 %v2748, %v2774
        %v2785 = vadd.f32 %v2749, %v2774
        %v2786 = vadd.f32 %v2750, %v2774
        %v2787 = vadd.f32 %v2751, %v2774
        %v2788 = vadd.f32 %v2752, %v2774
        %v2789 = vadd.f32 %v2753, %v2774
        %v2790 = vadd.f32 %v2754, %v2774
        %v2791 = vadd.f32 %v2755, %v2774
        %v2792 = vadd.f32 %v2756, %v2774
        %v2793 = vadd.f32 %v2757, %v2774
        %v2794 = vadd.f32 %v2758, %v2774
        %v2795 = vadd.f32 %v2759, %v2774
        %v2796 = vadd.f32 %v2760, %v2774
        %v2797 = vadd.f32 %v2761, %v2774
        %v2798 = vadd.f32 %v2762, %v2774
        %v2799 = vadd.f32 %v2763, %v2774
        %v2800 = vadd.f32 %v2764, %v2774
        %v2801 = vadd.f32 %v2765, %v2774
        %v2802 = vadd.f32 %v2766, %v2774
        %v2803 = vadd.f32 %v2767, %v2774
        %v2804 = vadd.f32 %v2768, %v2774
        %v2805 = vadd.f32 %v2769, %v2774
        %v2806 = vadd.f32 %v2770, %v2774
        %v2807 = vadd.f32 %v2771, %v2774
        %v2808 = vmax.f32 %v2776, %v2778
        %v2809 = vmax.f32 %v2777, %v2779
        %v2810 = vmax.f32 %v2780, %v2782
        %v2811 = vmax.f32 %v2781, %v2783
        %v2812 = vmax.f32 %v2784, %v2786
        %v2813 = vmax.f32 %v2785, %v2787
        %v2814 = vmax.f32 %v2788, %v2790
        %v2815 = vmax.f32 %v2789, %v2791
        %v2816 = vmax.f32 %v2792, %v2794
        %v2817 = vmax.f32 %v2793, %v2795
        %v2818 = vmax.f32 %v2796, %v2798
        %v2819 = vmax.f32 %v2797, %v2799
        %v2820 = vmax.f32 %v2800, %v2802
        %v2821 = vmax.f32 %v2801, %v2803
        %v2822 = vmax.f32 %v2804, %v2806
        %v2823 = vmax.f32 %v2805, %v2807
        %2824 = vst [vmem:[#allocation4] sm:$0xff] %v2808
        %2825 = vst [vmem:[#allocation4 + $0x8] sm:$0xff] %v2809
        %2826 = vst [vmem:[#allocation4 + $0x10] sm:$0xff] %v2810
        %2827 = vst [vmem:[#allocation4 + $0x18] sm:$0xff] %v2811
        %2828 = vst [vmem:[#allocation4 + $0x20] sm:$0xff] %v2812
        %2829 = vst [vmem:[#allocation4 + $0x28] sm:$0xff] %v2813
        %2830 = vst [vmem:[#allocation4 + $0x30] sm:$0xff] %v2814
        %2831 = vst [vmem:[#allocation4 + $0x38] sm:$0xff] %v2815
        %2832 = vst [vmem:[#allocation4 + $0x40] sm:$0xff] %v2816
        %2833 = vst [vmem:[#allocation4 + $0x48] sm:$0xff] %v2817
        %2834 = vst [vmem:[#allocation4 + $0x50] sm:$0xff] %v2818
        %2835 = vst [vmem:[#allocation4 + $0x58] sm:$0xff] %v2819
        %2836 = vst [vmem:[#allocation4 + $0x60] sm:$0xff] %v2820
        %2837 = vst [vmem:[#allocation4 + $0x68] sm:$0xff] %v2821
        %2838 = vst [vmem:[#allocation4 + $0x70] sm:$0xff] %v2822
        %2839 = vst [vmem:[#allocation4 + $0x78] sm:$0xff] %v2823
        %v2840 = vld [vmem:[#allocation4] ss:$2 sm:$0xff]
        %s2841 = scalar_lea.vmem [#allocation4], 16
        %v2842 = vld [vmem:[%s2841] ss:$2 sm:$0xff]
        %s2843 = scalar_lea.vmem [#allocation4], 32
        %v2844 = vld [vmem:[%s2843] ss:$2 sm:$0xff]
        %s2845 = scalar_lea.vmem [#allocation4], 48
        %v2846 = vld [vmem:[%s2845] ss:$2 sm:$0xff]
        %s2847 = scalar_lea.vmem [#allocation4], 64
        %v2848 = vld [vmem:[%s2847] ss:$2 sm:$0xff]
        %s2849 = scalar_lea.vmem [#allocation4], 80
        %v2850 = vld [vmem:[%s2849] ss:$2 sm:$0xff]
        %s2851 = scalar_lea.vmem [#allocation4], 96
        %v2852 = vld [vmem:[%s2851] ss:$2 sm:$0xff]
        %s2853 = scalar_lea.vmem [#allocation4], 112
        %v2854 = vld [vmem:[%s2853] ss:$2 sm:$0xff]
        %s2855 = scalar_lea.vmem [#allocation4], 1
        %v2856 = vld [vmem:[%s2855] ss:$2 sm:$0xff]
        %s2857 = scalar_lea.vmem [#allocation4], 17
        %v2858 = vld [vmem:[%s2857] ss:$2 sm:$0xff]
        %s2859 = scalar_lea.vmem [#allocation4], 33
        %v2860 = vld [vmem:[%s2859] ss:$2 sm:$0xff]
        %s2861 = scalar_lea.vmem [#allocation4], 49
        %v2862 = vld [vmem:[%s2861] ss:$2 sm:$0xff]
        %s2863 = scalar_lea.vmem [#allocation4], 65
        %v2864 = vld [vmem:[%s2863] ss:$2 sm:$0xff]
        %s2865 = scalar_lea.vmem [#allocation4], 81
        %v2866 = vld [vmem:[%s2865] ss:$2 sm:$0xff]
        %s2867 = scalar_lea.vmem [#allocation4], 97
        %v2868 = vld [vmem:[%s2867] ss:$2 sm:$0xff]
        %s2869 = scalar_lea.vmem [#allocation4], 113
        %v2870 = vld [vmem:[%s2869] ss:$2 sm:$0xff]
        %v2871 = vmax.f32 %v2840, %v2856
        %v2872 = vmax.f32 %v2842, %v2858
        %v2873 = vmax.f32 %v2844, %v2860
        %v2874 = vmax.f32 %v2846, %v2862
        %v2875 = vmax.f32 %v2848, %v2864
        %v2876 = vmax.f32 %v2850, %v2866
        %v2877 = vmax.f32 %v2852, %v2868
        %v2878 = vmax.f32 %v2854, %v2870
        %s2879 = scalar_lea.vmem [#allocation3], 16
        %2880 = vst [vmem:[%s2879 + $0x1] sm:$0xff] %v2871
        %2881 = vst [vmem:[%s2879 + $0x11] sm:$0xff] %v2872
        %2882 = vst [vmem:[%s2879 + $0x21] sm:$0xff] %v2873
        %2883 = vst [vmem:[%s2879 + $0x31] sm:$0xff] %v2874
        %2884 = vst [vmem:[%s2879 + $0x41] sm:$0xff] %v2875
        %2885 = vst [vmem:[%s2879 + $0x51] sm:$0xff] %v2876
        %2886 = vst [vmem:[%s2879 + $0x61] sm:$0xff] %v2877
        %2887 = vst [vmem:[%s2879 + $0x71] sm:$0xff] %v2878
        %v2888 = vld [vmem:[#allocation3] sm:$0xff]
        %v2889 = vld [vmem:[#allocation3 + $0x10] sm:$0xff]
        %v2890 = vld [vmem:[#allocation3 + $0x20] sm:$0xff]
        %v2891 = vld [vmem:[#allocation3 + $0x30] sm:$0xff]
        %v2892 = vld [vmem:[#allocation3 + $0x40] sm:$0xff]
        %v2893 = vld [vmem:[#allocation3 + $0x50] sm:$0xff]
        %v2894 = vld [vmem:[#allocation3 + $0x60] sm:$0xff]
        %v2895 = vld [vmem:[#allocation3 + $0x70] sm:$0xff]
        %v2896 = vpack.c.bf16 %v2889, %v2888
        %v2897 = vpack.c.bf16 %v2891, %v2890
        %v2898 = vpack.c.bf16 %v2893, %v2892
        %v2899 = vpack.c.bf16 %v2895, %v2894
        %v2900 = vld [vmem:[#allocation6] sm:$0xf]
        %v2901 = vld [vmem:[#allocation6 + $0x4] sm:$0xf]
        %v2902 = vld [vmem:[#allocation6 + $0x8] sm:$0xf]
        %v2903 = vld [vmem:[#allocation6 + $0xc] sm:$0xf]
        %v2904 = vld [vmem:[#allocation6 + $0x10] sm:$0xf]
        %v2905 = vld [vmem:[#allocation6 + $0x14] sm:$0xf]
        %v2906 = vld [vmem:[#allocation6 + $0x18] sm:$0xf]
        %v2907 = vld [vmem:[#allocation6 + $0x1c] sm:$0xf]
        %v2908 = vld [vmem:[#allocation6 + $0x20] sm:$0xf]
        %v2909 = vld [vmem:[#allocation6 + $0x24] sm:$0xf]
        %v2910 = vld [vmem:[#allocation6 + $0x28] sm:$0xf]
        %v2911 = vld [vmem:[#allocation6 + $0x2c] sm:$0xf]
        %v2912 = vld [vmem:[#allocation6 + $0x30] sm:$0xf]
        %v2913 = vld [vmem:[#allocation6 + $0x34] sm:$0xf]
        %v2914 = vld [vmem:[#allocation6 + $0x38] sm:$0xf]
        %v2915 = vld [vmem:[#allocation6 + $0x3c] sm:$0xf]
        %v2916 = vld [vmem:[#allocation3 + $0x1] sm:$0xff]
        %v2917 = vld [vmem:[#allocation3 + $0x11] sm:$0xff]
        %v2918 = vld [vmem:[#allocation3 + $0x21] sm:$0xff]
        %v2919 = vld [vmem:[#allocation3 + $0x31] sm:$0xff]
        %v2920 = vld [vmem:[#allocation3 + $0x41] sm:$0xff]
        %v2921 = vld [vmem:[#allocation3 + $0x51] sm:$0xff]
        %v2922 = vld [vmem:[#allocation3 + $0x61] sm:$0xff]
        %v2923 = vld [vmem:[#allocation3 + $0x71] sm:$0xff]
        %v2924 = vpack.c.bf16 %v2917, %v2916
        %v2925 = vpack.c.bf16 %v2919, %v2918
        %v2926 = vpack.c.bf16 %v2921, %v2920
        %v2927 = vpack.c.bf16 %v2923, %v2922
        %s2928 = scalar_lea.vmem [#allocation6], 64
        %v2929 = vld [vmem:[%s2928] sm:$0xf]
        %v2930 = vld [vmem:[%s2928 + $0x4] sm:$0xf]
        %v2931 = vld [vmem:[%s2928 + $0x8] sm:$0xf]
        %v2932 = vld [vmem:[%s2928 + $0xc] sm:$0xf]
        %v2933 = vld [vmem:[%s2928 + $0x10] sm:$0xf]
        %v2934 = vld [vmem:[%s2928 + $0x14] sm:$0xf]
        %v2935 = vld [vmem:[%s2928 + $0x18] sm:$0xf]
        %v2936 = vld [vmem:[%s2928 + $0x1c] sm:$0xf]
        %v2937 = vld [vmem:[%s2928 + $0x20] sm:$0xf]
        %v2938 = vld [vmem:[%s2928 + $0x24] sm:$0xf]
        %v2939 = vld [vmem:[%s2928 + $0x28] sm:$0xf]
        %v2940 = vld [vmem:[%s2928 + $0x2c] sm:$0xf]
        %v2941 = vld [vmem:[%s2928 + $0x30] sm:$0xf]
        %v2942 = vld [vmem:[%s2928 + $0x34] sm:$0xf]
        %v2943 = vld [vmem:[%s2928 + $0x38] sm:$0xf]
        %v2944 = vld [vmem:[%s2928 + $0x3c] sm:$0xf]
        %v2961 = vunpack.c.l.b16 %v2929
        %v2962 = vunpack.c.l.b16 %v2930
        %v2963 = vunpack.c.l.b16 %v2931
        %v2964 = vunpack.c.l.b16 %v2932
        %v2965 = vunpack.c.l.b16 %v2933
        %v2966 = vunpack.c.l.b16 %v2934
        %v2967 = vunpack.c.l.b16 %v2935
        %v2968 = vunpack.c.l.b16 %v2936
        %v2969 = vunpack.c.l.b16 %v2937
        %v2970 = vunpack.c.l.b16 %v2938
        %v2971 = vunpack.c.l.b16 %v2939
        %v2972 = vunpack.c.l.b16 %v2940
        %v2973 = vunpack.c.l.b16 %v2941
        %v2974 = vunpack.c.l.b16 %v2942
        %v2975 = vunpack.c.l.b16 %v2943
        %v2976 = vunpack.c.l.b16 %v2944
        %v2977 = vpack.c.b16 %v2962, %v2961
        %v2978 = vpack.c.b16 %v2964, %v2963
        %v2979 = vpack.c.b16 %v2966, %v2965
        %v2980 = vpack.c.b16 %v2968, %v2967
        %v2981 = vpack.c.b16 %v2970, %v2969
        %v2982 = vpack.c.b16 %v2972, %v2971
        %v2983 = vpack.c.b16 %v2974, %v2973
        %v2984 = vpack.c.b16 %v2976, %v2975
        %2993 = vmatpush.bf16.msra.mxu0 %v2984
        %2994 = vmatpush.bf16.msra.mxu0 %v2983
        %2995 = vmatpush.bf16.msra.mxu0 %v2982
        %2996 = vmatpush.bf16.msra.mxu0 %v2981
        %2997 = vmatpush.bf16.msra.mxu0 %v2980
        %2998 = vmatpush.bf16.msra.mxu0 %v2979
        %2999 = vmatpush.bf16.msra.mxu0 %v2978
        %3000 = vmatpush.bf16.msra.mxu0 %v2977
        %3001 = vmatmul.bf16.gmra.mxu0 %v2924
        %v3002 = vpop.f32.mrf.mxu0
        %v3003 = vadd.f32 0.0, %v3002
        %v3004 = vpop.f32.mrf.mxu0
        %v3005 = vadd.f32 0.0, %v3004
        %3006 = vmatmul.bf16.gmra.mxu0 %v2925
        %v3007 = vpop.f32.mrf.mxu0
        %v3008 = vadd.f32 0.0, %v3007
        %v3009 = vpop.f32.mrf.mxu0
        %v3010 = vadd.f32 0.0, %v3009
        %3011 = vmatmul.bf16.gmra.mxu0 %v2926
        %v3012 = vpop.f32.mrf.mxu0
        %v3013 = vadd.f32 0.0, %v3012
        %v3014 = vpop.f32.mrf.mxu0
        %v3015 = vadd.f32 0.0, %v3014
        %3016 = vmatmul.bf16.gmra.mxu0 %v2927
        %v3017 = vpop.f32.mrf.mxu0
        %v3018 = vadd.f32 0.0, %v3017
        %v3019 = vpop.f32.mrf.mxu0
        %v3020 = vadd.f32 0.0, %v3019
        %3021 = vdwg.mxu0
        %v3038 = vunpack.c.l.b16 %v2900
        %v3039 = vunpack.c.l.b16 %v2901
        %v3040 = vunpack.c.l.b16 %v2902
        %v3041 = vunpack.c.l.b16 %v2903
        %v3042 = vunpack.c.l.b16 %v2904
        %v3043 = vunpack.c.l.b16 %v2905
        %v3044 = vunpack.c.l.b16 %v2906
        %v3045 = vunpack.c.l.b16 %v2907
        %v3046 = vunpack.c.l.b16 %v2908
        %v3047 = vunpack.c.l.b16 %v2909
        %v3048 = vunpack.c.l.b16 %v2910
        %v3049 = vunpack.c.l.b16 %v2911
        %v3050 = vunpack.c.l.b16 %v2912
        %v3051 = vunpack.c.l.b16 %v2913
        %v3052 = vunpack.c.l.b16 %v2914
        %v3053 = vunpack.c.l.b16 %v2915
        %v3054 = vpack.c.b16 %v3039, %v3038
        %v3055 = vpack.c.b16 %v3041, %v3040
        %v3056 = vpack.c.b16 %v3043, %v3042
        %v3057 = vpack.c.b16 %v3045, %v3044
        %v3058 = vpack.c.b16 %v3047, %v3046
        %v3059 = vpack.c.b16 %v3049, %v3048
        %v3060 = vpack.c.b16 %v3051, %v3050
        %v3061 = vpack.c.b16 %v3053, %v3052
        %3070 = vmatpush.bf16.msra.mxu0 %v3061
        %3071 = vmatpush.bf16.msra.mxu0 %v3060
        %3072 = vmatpush.bf16.msra.mxu0 %v3059
        %3073 = vmatpush.bf16.msra.mxu0 %v3058
        %3074 = vmatpush.bf16.msra.mxu0 %v3057
        %3075 = vmatpush.bf16.msra.mxu0 %v3056
        %3076 = vmatpush.bf16.msra.mxu0 %v3055
        %3077 = vmatpush.bf16.msra.mxu0 %v3054
        %3078 = vmatmul.bf16.gmra.mxu0 %v2896
        %v3079 = vpop.f32.mrf.mxu0
        %v3080 = vadd.f32 %v3003, %v3079
        %v3081 = vpop.f32.mrf.mxu0
        %v3082 = vadd.f32 %v3005, %v3081
        %3083 = vmatmul.bf16.gmra.mxu0 %v2897
        %v3084 = vpop.f32.mrf.mxu0
        %v3085 = vadd.f32 %v3008, %v3084
        %v3086 = vpop.f32.mrf.mxu0
        %v3087 = vadd.f32 %v3010, %v3086
        %3088 = vmatmul.bf16.gmra.mxu0 %v2898
        %v3089 = vpop.f32.mrf.mxu0
        %v3090 = vadd.f32 %v3013, %v3089
        %v3091 = vpop.f32.mrf.mxu0
        %v3092 = vadd.f32 %v3015, %v3091
        %3093 = vmatmul.bf16.gmra.mxu0 %v2899
        %v3094 = vpop.f32.mrf.mxu0
        %v3095 = vadd.f32 %v3018, %v3094
        %v3096 = vpop.f32.mrf.mxu0
        %v3097 = vadd.f32 %v3020, %v3096
        %3098 = vdwg.mxu0
        %v3099 = vld [vmem:[#allocation3 + $0x2] sm:$0xff]
        %v3100 = vld [vmem:[#allocation3 + $0x12] sm:$0xff]
        %v3101 = vld [vmem:[#allocation3 + $0x22] sm:$0xff]
        %v3102 = vld [vmem:[#allocation3 + $0x32] sm:$0xff]
        %v3103 = vld [vmem:[#allocation3 + $0x42] sm:$0xff]
        %v3104 = vld [vmem:[#allocation3 + $0x52] sm:$0xff]
        %v3105 = vld [vmem:[#allocation3 + $0x62] sm:$0xff]
        %v3106 = vld [vmem:[#allocation3 + $0x72] sm:$0xff]
        %v3107 = vpack.c.bf16 %v3100, %v3099
        %v3108 = vpack.c.bf16 %v3102, %v3101
        %v3109 = vpack.c.bf16 %v3104, %v3103
        %v3110 = vpack.c.bf16 %v3106, %v3105
        %s3111 = scalar_lea.vmem [#allocation6], 128
        %v3112 = vld [vmem:[%s3111] sm:$0xf]
        %v3113 = vld [vmem:[%s3111 + $0x4] sm:$0xf]
        %v3114 = vld [vmem:[%s3111 + $0x8] sm:$0xf]
        %v3115 = vld [vmem:[%s3111 + $0xc] sm:$0xf]
        %v3116 = vld [vmem:[%s3111 + $0x10] sm:$0xf]
        %v3117 = vld [vmem:[%s3111 + $0x14] sm:$0xf]
        %v3118 = vld [vmem:[%s3111 + $0x18] sm:$0xf]
        %v3119 = vld [vmem:[%s3111 + $0x1c] sm:$0xf]
        %v3120 = vld [vmem:[%s3111 + $0x20] sm:$0xf]
        %v3121 = vld [vmem:[%s3111 + $0x24] sm:$0xf]
        %v3122 = vld [vmem:[%s3111 + $0x28] sm:$0xf]
        %v3123 = vld [vmem:[%s3111 + $0x2c] sm:$0xf]
        %v3124 = vld [vmem:[%s3111 + $0x30] sm:$0xf]
        %v3125 = vld [vmem:[%s3111 + $0x34] sm:$0xf]
        %v3126 = vld [vmem:[%s3111 + $0x38] sm:$0xf]
        %v3127 = vld [vmem:[%s3111 + $0x3c] sm:$0xf]
        %v3144 = vunpack.c.l.b16 %v3112
        %v3145 = vunpack.c.l.b16 %v3113
        %v3146 = vunpack.c.l.b16 %v3114
        %v3147 = vunpack.c.l.b16 %v3115
        %v3148 = vunpack.c.l.b16 %v3116
        %v3149 = vunpack.c.l.b16 %v3117
        %v3150 = vunpack.c.l.b16 %v3118
        %v3151 = vunpack.c.l.b16 %v3119
        %v3152 = vunpack.c.l.b16 %v3120
        %v3153 = vunpack.c.l.b16 %v3121
        %v3154 = vunpack.c.l.b16 %v3122
        %v3155 = vunpack.c.l.b16 %v3123
        %v3156 = vunpack.c.l.b16 %v3124
        %v3157 = vunpack.c.l.b16 %v3125
        %v3158 = vunpack.c.l.b16 %v3126
        %v3159 = vunpack.c.l.b16 %v3127
        %v3160 = vpack.c.b16 %v3145, %v3144
        %v3161 = vpack.c.b16 %v3147, %v3146
        %v3162 = vpack.c.b16 %v3149, %v3148
        %v3163 = vpack.c.b16 %v3151, %v3150
        %v3164 = vpack.c.b16 %v3153, %v3152
        %v3165 = vpack.c.b16 %v3155, %v3154
        %v3166 = vpack.c.b16 %v3157, %v3156
        %v3167 = vpack.c.b16 %v3159, %v3158
        %3176 = vmatpush.bf16.msra.mxu0 %v3167
        %3177 = vmatpush.bf16.msra.mxu0 %v3166
        %3178 = vmatpush.bf16.msra.mxu0 %v3165
        %3179 = vmatpush.bf16.msra.mxu0 %v3164
        %3180 = vmatpush.bf16.msra.mxu0 %v3163
        %3181 = vmatpush.bf16.msra.mxu0 %v3162
        %3182 = vmatpush.bf16.msra.mxu0 %v3161
        %3183 = vmatpush.bf16.msra.mxu0 %v3160
        %3184 = vmatmul.bf16.gmra.mxu0 %v3107
        %v3185 = vpop.f32.mrf.mxu0
        %v3186 = vadd.f32 0.0, %v3185
        %v3187 = vpop.f32.mrf.mxu0
        %v3188 = vadd.f32 0.0, %v3187
        %3189 = vmatmul.bf16.gmra.mxu0 %v3108
        %v3190 = vpop.f32.mrf.mxu0
        %v3191 = vadd.f32 0.0, %v3190
        %v3192 = vpop.f32.mrf.mxu0
        %v3193 = vadd.f32 0.0, %v3192
        %3194 = vmatmul.bf16.gmra.mxu0 %v3109
        %v3195 = vpop.f32.mrf.mxu0
        %v3196 = vadd.f32 0.0, %v3195
        %v3197 = vpop.f32.mrf.mxu0
        %v3198 = vadd.f32 0.0, %v3197
        %3199 = vmatmul.bf16.gmra.mxu0 %v3110
        %v3200 = vpop.f32.mrf.mxu0
        %v3201 = vadd.f32 0.0, %v3200
        %v3202 = vpop.f32.mrf.mxu0
        %v3203 = vadd.f32 0.0, %v3202
        %3204 = vdwg.mxu0
        %v3205 = vadd.f32 %v3080, %v3186
        %v3206 = vadd.f32 %v3082, %v3188
        %v3207 = vadd.f32 %v3085, %v3191
        %v3208 = vadd.f32 %v3087, %v3193
        %v3209 = vadd.f32 %v3090, %v3196
        %v3210 = vadd.f32 %v3092, %v3198
        %v3211 = vadd.f32 %v3095, %v3201
        %v3212 = vadd.f32 %v3097, %v3203
        %v3213 = vld [vmem:[%s2879] sm:$0xff]
        %v3214 = vld [vmem:[%s2879 + $0x10] sm:$0xff]
        %v3215 = vld [vmem:[%s2879 + $0x20] sm:$0xff]
        %v3216 = vld [vmem:[%s2879 + $0x30] sm:$0xff]
        %v3217 = vld [vmem:[%s2879 + $0x40] sm:$0xff]
        %v3218 = vld [vmem:[%s2879 + $0x50] sm:$0xff]
        %v3219 = vld [vmem:[%s2879 + $0x60] sm:$0xff]
        %v3220 = vld [vmem:[%s2879 + $0x70] sm:$0xff]
        %v3221 = vpack.c.bf16 %v3214, %v3213
        %v3222 = vpack.c.bf16 %v3216, %v3215
        %v3223 = vpack.c.bf16 %v3218, %v3217
        %v3224 = vpack.c.bf16 %v3220, %v3219
        %s3225 = scalar_lea.vmem [#allocation6], 192
        %v3226 = vld [vmem:[%s3225] sm:$0xf]
        %v3227 = vld [vmem:[%s3225 + $0x4] sm:$0xf]
        %v3228 = vld [vmem:[%s3225 + $0x8] sm:$0xf]
        %v3229 = vld [vmem:[%s3225 + $0xc] sm:$0xf]
        %v3230 = vld [vmem:[%s3225 + $0x10] sm:$0xf]
        %v3231 = vld [vmem:[%s3225 + $0x14] sm:$0xf]
        %v3232 = vld [vmem:[%s3225 + $0x18] sm:$0xf]
        %v3233 = vld [vmem:[%s3225 + $0x1c] sm:$0xf]
        %v3234 = vld [vmem:[%s3225 + $0x20] sm:$0xf]
        %v3235 = vld [vmem:[%s3225 + $0x24] sm:$0xf]
        %v3236 = vld [vmem:[%s3225 + $0x28] sm:$0xf]
        %v3237 = vld [vmem:[%s3225 + $0x2c] sm:$0xf]
        %v3238 = vld [vmem:[%s3225 + $0x30] sm:$0xf]
        %v3239 = vld [vmem:[%s3225 + $0x34] sm:$0xf]
        %v3240 = vld [vmem:[%s3225 + $0x38] sm:$0xf]
        %v3241 = vld [vmem:[%s3225 + $0x3c] sm:$0xf]
        %v3258 = vunpack.c.l.b16 %v3226
        %v3259 = vunpack.c.l.b16 %v3227
        %v3260 = vunpack.c.l.b16 %v3228
        %v3261 = vunpack.c.l.b16 %v3229
        %v3262 = vunpack.c.l.b16 %v3230
        %v3263 = vunpack.c.l.b16 %v3231
        %v3264 = vunpack.c.l.b16 %v3232
        %v3265 = vunpack.c.l.b16 %v3233
        %v3266 = vunpack.c.l.b16 %v3234
        %v3267 = vunpack.c.l.b16 %v3235
        %v3268 = vunpack.c.l.b16 %v3236
        %v3269 = vunpack.c.l.b16 %v3237
        %v3270 = vunpack.c.l.b16 %v3238
        %v3271 = vunpack.c.l.b16 %v3239
        %v3272 = vunpack.c.l.b16 %v3240
        %v3273 = vunpack.c.l.b16 %v3241
        %v3274 = vpack.c.b16 %v3259, %v3258
        %v3275 = vpack.c.b16 %v3261, %v3260
        %v3276 = vpack.c.b16 %v3263, %v3262
        %v3277 = vpack.c.b16 %v3265, %v3264
        %v3278 = vpack.c.b16 %v3267, %v3266
        %v3279 = vpack.c.b16 %v3269, %v3268
        %v3280 = vpack.c.b16 %v3271, %v3270
        %v3281 = vpack.c.b16 %v3273, %v3272
        %3290 = vmatpush.bf16.msra.mxu0 %v3281
        %3291 = vmatpush.bf16.msra.mxu0 %v3280
        %3292 = vmatpush.bf16.msra.mxu0 %v3279
        %3293 = vmatpush.bf16.msra.mxu0 %v3278
        %3294 = vmatpush.bf16.msra.mxu0 %v3277
        %3295 = vmatpush.bf16.msra.mxu0 %v3276
        %3296 = vmatpush.bf16.msra.mxu0 %v3275
        %3297 = vmatpush.bf16.msra.mxu0 %v3274
        %3298 = vmatmul.bf16.gmra.mxu0 %v3221
        %v3299 = vpop.f32.mrf.mxu0
        %v3300 = vadd.f32 0.0, %v3299
        %v3301 = vpop.f32.mrf.mxu0
        %v3302 = vadd.f32 0.0, %v3301
        %3303 = vmatmul.bf16.gmra.mxu0 %v3222
        %v3304 = vpop.f32.mrf.mxu0
        %v3305 = vadd.f32 0.0, %v3304
        %v3306 = vpop.f32.mrf.mxu0
        %v3307 = vadd.f32 0.0, %v3306
        %3308 = vmatmul.bf16.gmra.mxu0 %v3223
        %v3309 = vpop.f32.mrf.mxu0
        %v3310 = vadd.f32 0.0, %v3309
        %v3311 = vpop.f32.mrf.mxu0
        %v3312 = vadd.f32 0.0, %v3311
        %3313 = vmatmul.bf16.gmra.mxu0 %v3224
        %v3314 = vpop.f32.mrf.mxu0
        %v3315 = vadd.f32 0.0, %v3314
        %v3316 = vpop.f32.mrf.mxu0
        %v3317 = vadd.f32 0.0, %v3316
        %3318 = vdwg.mxu0
        %v3319 = vadd.f32 %v3205, %v3300
        %v3320 = vadd.f32 %v3206, %v3302
        %v3321 = vadd.f32 %v3207, %v3305
        %v3322 = vadd.f32 %v3208, %v3307
        %v3323 = vadd.f32 %v3209, %v3310
        %v3324 = vadd.f32 %v3210, %v3312
        %v3325 = vadd.f32 %v3211, %v3315
        %v3326 = vadd.f32 %v3212, %v3317
        %v3327 = vld [vmem:[%s2879 + $0x1] sm:$0xff]
        %v3328 = vld [vmem:[%s2879 + $0x11] sm:$0xff]
        %v3329 = vld [vmem:[%s2879 + $0x21] sm:$0xff]
        %v3330 = vld [vmem:[%s2879 + $0x31] sm:$0xff]
        %v3331 = vld [vmem:[%s2879 + $0x41] sm:$0xff]
        %v3332 = vld [vmem:[%s2879 + $0x51] sm:$0xff]
        %v3333 = vld [vmem:[%s2879 + $0x61] sm:$0xff]
        %v3334 = vld [vmem:[%s2879 + $0x71] sm:$0xff]
        %v3335 = vpack.c.bf16 %v3328, %v3327
        %v3336 = vpack.c.bf16 %v3330, %v3329
        %v3337 = vpack.c.bf16 %v3332, %v3331
        %v3338 = vpack.c.bf16 %v3334, %v3333
        %s3339 = scalar_lea.vmem [#allocation6], 256
        %v3340 = vld [vmem:[%s3339] sm:$0xf]
        %v3341 = vld [vmem:[%s3339 + $0x4] sm:$0xf]
        %v3342 = vld [vmem:[%s3339 + $0x8] sm:$0xf]
        %v3343 = vld [vmem:[%s3339 + $0xc] sm:$0xf]
        %v3344 = vld [vmem:[%s3339 + $0x10] sm:$0xf]
        %v3345 = vld [vmem:[%s3339 + $0x14] sm:$0xf]
        %v3346 = vld [vmem:[%s3339 + $0x18] sm:$0xf]
        %v3347 = vld [vmem:[%s3339 + $0x1c] sm:$0xf]
        %v3348 = vld [vmem:[%s3339 + $0x20] sm:$0xf]
        %v3349 = vld [vmem:[%s3339 + $0x24] sm:$0xf]
        %v3350 = vld [vmem:[%s3339 + $0x28] sm:$0xf]
        %v3351 = vld [vmem:[%s3339 + $0x2c] sm:$0xf]
        %v3352 = vld [vmem:[%s3339 + $0x30] sm:$0xf]
        %v3353 = vld [vmem:[%s3339 + $0x34] sm:$0xf]
        %v3354 = vld [vmem:[%s3339 + $0x38] sm:$0xf]
        %v3355 = vld [vmem:[%s3339 + $0x3c] sm:$0xf]
        %v3372 = vunpack.c.l.b16 %v3340
        %v3373 = vunpack.c.l.b16 %v3341
        %v3374 = vunpack.c.l.b16 %v3342
        %v3375 = vunpack.c.l.b16 %v3343
        %v3376 = vunpack.c.l.b16 %v3344
        %v3377 = vunpack.c.l.b16 %v3345
        %v3378 = vunpack.c.l.b16 %v3346
        %v3379 = vunpack.c.l.b16 %v3347
        %v3380 = vunpack.c.l.b16 %v3348
        %v3381 = vunpack.c.l.b16 %v3349
        %v3382 = vunpack.c.l.b16 %v3350
        %v3383 = vunpack.c.l.b16 %v3351
        %v3384 = vunpack.c.l.b16 %v3352
        %v3385 = vunpack.c.l.b16 %v3353
        %v3386 = vunpack.c.l.b16 %v3354
        %v3387 = vunpack.c.l.b16 %v3355
        %v3388 = vpack.c.b16 %v3373, %v3372
        %v3389 = vpack.c.b16 %v3375, %v3374
        %v3390 = vpack.c.b16 %v3377, %v3376
        %v3391 = vpack.c.b16 %v3379, %v3378
        %v3392 = vpack.c.b16 %v3381, %v3380
        %v3393 = vpack.c.b16 %v3383, %v3382
        %v3394 = vpack.c.b16 %v3385, %v3384
        %v3395 = vpack.c.b16 %v3387, %v3386
        %3404 = vmatpush.bf16.msra.mxu0 %v3395
        %3405 = vmatpush.bf16.msra.mxu0 %v3394
        %3406 = vmatpush.bf16.msra.mxu0 %v3393
        %3407 = vmatpush.bf16.msra.mxu0 %v3392
        %3408 = vmatpush.bf16.msra.mxu0 %v3391
        %3409 = vmatpush.bf16.msra.mxu0 %v3390
        %3410 = vmatpush.bf16.msra.mxu0 %v3389
        %3411 = vmatpush.bf16.msra.mxu0 %v3388
        %3412 = vmatmul.bf16.gmra.mxu0 %v3335
        %v3413 = vpop.f32.mrf.mxu0
        %v3414 = vadd.f32 0.0, %v3413
        %v3415 = vpop.f32.mrf.mxu0
        %v3416 = vadd.f32 0.0, %v3415
        %3417 = vmatmul.bf16.gmra.mxu0 %v3336
        %v3418 = vpop.f32.mrf.mxu0
        %v3419 = vadd.f32 0.0, %v3418
        %v3420 = vpop.f32.mrf.mxu0
        %v3421 = vadd.f32 0.0, %v3420
        %3422 = vmatmul.bf16.gmra.mxu0 %v3337
        %v3423 = vpop.f32.mrf.mxu0
        %v3424 = vadd.f32 0.0, %v3423
        %v3425 = vpop.f32.mrf.mxu0
        %v3426 = vadd.f32 0.0, %v3425
        %3427 = vmatmul.bf16.gmra.mxu0 %v3338
        %v3428 = vpop.f32.mrf.mxu0
        %v3429 = vadd.f32 0.0, %v3428
        %v3430 = vpop.f32.mrf.mxu0
        %v3431 = vadd.f32 0.0, %v3430
        %3432 = vdwg.mxu0
        %v3433 = vadd.f32 %v3319, %v3414
        %v3434 = vadd.f32 %v3320, %v3416
        %v3435 = vadd.f32 %v3321, %v3419
        %v3436 = vadd.f32 %v3322, %v3421
        %v3437 = vadd.f32 %v3323, %v3424
        %v3438 = vadd.f32 %v3324, %v3426
        %v3439 = vadd.f32 %v3325, %v3429
        %v3440 = vadd.f32 %v3326, %v3431
        %v3441 = vld [vmem:[%s2879 + $0x2] sm:$0xff]
        %v3442 = vld [vmem:[%s2879 + $0x12] sm:$0xff]
        %v3443 = vld [vmem:[%s2879 + $0x22] sm:$0xff]
        %v3444 = vld [vmem:[%s2879 + $0x32] sm:$0xff]
        %v3445 = vld [vmem:[%s2879 + $0x42] sm:$0xff]
        %v3446 = vld [vmem:[%s2879 + $0x52] sm:$0xff]
        %v3447 = vld [vmem:[%s2879 + $0x62] sm:$0xff]
        %v3448 = vld [vmem:[%s2879 + $0x72] sm:$0xff]
        %v3449 = vpack.c.bf16 %v3442, %v3441
        %v3450 = vpack.c.bf16 %v3444, %v3443
        %v3451 = vpack.c.bf16 %v3446, %v3445
        %v3452 = vpack.c.bf16 %v3448, %v3447
        %s3453 = scalar_lea.vmem [#allocation6], 320
        %v3454 = vld [vmem:[%s3453] sm:$0xf]
        %v3455 = vld [vmem:[%s3453 + $0x4] sm:$0xf]
        %v3456 = vld [vmem:[%s3453 + $0x8] sm:$0xf]
        %v3457 = vld [vmem:[%s3453 + $0xc] sm:$0xf]
        %v3458 = vld [vmem:[%s3453 + $0x10] sm:$0xf]
        %v3459 = vld [vmem:[%s3453 + $0x14] sm:$0xf]
        %v3460 = vld [vmem:[%s3453 + $0x18] sm:$0xf]
        %v3461 = vld [vmem:[%s3453 + $0x1c] sm:$0xf]
        %v3462 = vld [vmem:[%s3453 + $0x20] sm:$0xf]
        %v3463 = vld [vmem:[%s3453 + $0x24] sm:$0xf]
        %v3464 = vld [vmem:[%s3453 + $0x28] sm:$0xf]
        %v3465 = vld [vmem:[%s3453 + $0x2c] sm:$0xf]
        %v3466 = vld [vmem:[%s3453 + $0x30] sm:$0xf]
        %v3467 = vld [vmem:[%s3453 + $0x34] sm:$0xf]
        %v3468 = vld [vmem:[%s3453 + $0x38] sm:$0xf]
        %v3469 = vld [vmem:[%s3453 + $0x3c] sm:$0xf]
        %v3486 = vunpack.c.l.b16 %v3454
        %v3487 = vunpack.c.l.b16 %v3455
        %v3488 = vunpack.c.l.b16 %v3456
        %v3489 = vunpack.c.l.b16 %v3457
        %v3490 = vunpack.c.l.b16 %v3458
        %v3491 = vunpack.c.l.b16 %v3459
        %v3492 = vunpack.c.l.b16 %v3460
        %v3493 = vunpack.c.l.b16 %v3461
        %v3494 = vunpack.c.l.b16 %v3462
        %v3495 = vunpack.c.l.b16 %v3463
        %v3496 = vunpack.c.l.b16 %v3464
        %v3497 = vunpack.c.l.b16 %v3465
        %v3498 = vunpack.c.l.b16 %v3466
        %v3499 = vunpack.c.l.b16 %v3467
        %v3500 = vunpack.c.l.b16 %v3468
        %v3501 = vunpack.c.l.b16 %v3469
        %v3502 = vpack.c.b16 %v3487, %v3486
        %v3503 = vpack.c.b16 %v3489, %v3488
        %v3504 = vpack.c.b16 %v3491, %v3490
        %v3505 = vpack.c.b16 %v3493, %v3492
        %v3506 = vpack.c.b16 %v3495, %v3494
        %v3507 = vpack.c.b16 %v3497, %v3496
        %v3508 = vpack.c.b16 %v3499, %v3498
        %v3509 = vpack.c.b16 %v3501, %v3500
        %3518 = vmatpush.bf16.msra.mxu0 %v3509
        %3519 = vmatpush.bf16.msra.mxu0 %v3508
        %3520 = vmatpush.bf16.msra.mxu0 %v3507
        %3521 = vmatpush.bf16.msra.mxu0 %v3506
        %3522 = vmatpush.bf16.msra.mxu0 %v3505
        %3523 = vmatpush.bf16.msra.mxu0 %v3504
        %3524 = vmatpush.bf16.msra.mxu0 %v3503
        %3525 = vmatpush.bf16.msra.mxu0 %v3502
        %3526 = vmatmul.bf16.gmra.mxu0 %v3449
        %v3527 = vpop.f32.mrf.mxu0
        %v3528 = vadd.f32 0.0, %v3527
        %v3529 = vpop.f32.mrf.mxu0
        %v3530 = vadd.f32 0.0, %v3529
        %3531 = vmatmul.bf16.gmra.mxu0 %v3450
        %v3532 = vpop.f32.mrf.mxu0
        %v3533 = vadd.f32 0.0, %v3532
        %v3534 = vpop.f32.mrf.mxu0
        %v3535 = vadd.f32 0.0, %v3534
        %3536 = vmatmul.bf16.gmra.mxu0 %v3451
        %v3537 = vpop.f32.mrf.mxu0
        %v3538 = vadd.f32 0.0, %v3537
        %v3539 = vpop.f32.mrf.mxu0
        %v3540 = vadd.f32 0.0, %v3539
        %3541 = vmatmul.bf16.gmra.mxu0 %v3452
        %v3542 = vpop.f32.mrf.mxu0
        %v3543 = vadd.f32 0.0, %v3542
        %v3544 = vpop.f32.mrf.mxu0
        %v3545 = vadd.f32 0.0, %v3544
        %3546 = vdwg.mxu0
        %v3547 = vadd.f32 %v3433, %v3528
        %v3548 = vadd.f32 %v3434, %v3530
        %v3549 = vadd.f32 %v3435, %v3533
        %v3550 = vadd.f32 %v3436, %v3535
        %v3551 = vadd.f32 %v3437, %v3538
        %v3552 = vadd.f32 %v3438, %v3540
        %v3553 = vadd.f32 %v3439, %v3543
        %v3554 = vadd.f32 %v3440, %v3545
        %s3555 = scalar_lea.vmem [#allocation3], 32
        %v3556 = vld [vmem:[%s3555] sm:$0xff]
        %v3557 = vld [vmem:[%s3555 + $0x10] sm:$0xff]
        %v3558 = vld [vmem:[%s3555 + $0x20] sm:$0xff]
        %v3559 = vld [vmem:[%s3555 + $0x30] sm:$0xff]
        %v3560 = vld [vmem:[%s3555 + $0x40] sm:$0xff]
        %v3561 = vld [vmem:[%s3555 + $0x50] sm:$0xff]
        %v3562 = vld [vmem:[%s3555 + $0x60] sm:$0xff]
        %v3563 = vld [vmem:[%s3555 + $0x70] sm:$0xff]
        %v3564 = vpack.c.bf16 %v3557, %v3556
        %v3565 = vpack.c.bf16 %v3559, %v3558
        %v3566 = vpack.c.bf16 %v3561, %v3560
        %v3567 = vpack.c.bf16 %v3563, %v3562
        %s3568 = scalar_lea.vmem [#allocation6], 384
        %v3569 = vld [vmem:[%s3568] sm:$0xf]
        %v3570 = vld [vmem:[%s3568 + $0x4] sm:$0xf]
        %v3571 = vld [vmem:[%s3568 + $0x8] sm:$0xf]
        %v3572 = vld [vmem:[%s3568 + $0xc] sm:$0xf]
        %v3573 = vld [vmem:[%s3568 + $0x10] sm:$0xf]
        %v3574 = vld [vmem:[%s3568 + $0x14] sm:$0xf]
        %v3575 = vld [vmem:[%s3568 + $0x18] sm:$0xf]
        %v3576 = vld [vmem:[%s3568 + $0x1c] sm:$0xf]
        %v3577 = vld [vmem:[%s3568 + $0x20] sm:$0xf]
        %v3578 = vld [vmem:[%s3568 + $0x24] sm:$0xf]
        %v3579 = vld [vmem:[%s3568 + $0x28] sm:$0xf]
        %v3580 = vld [vmem:[%s3568 + $0x2c] sm:$0xf]
        %v3581 = vld [vmem:[%s3568 + $0x30] sm:$0xf]
        %v3582 = vld [vmem:[%s3568 + $0x34] sm:$0xf]
        %v3583 = vld [vmem:[%s3568 + $0x38] sm:$0xf]
        %v3584 = vld [vmem:[%s3568 + $0x3c] sm:$0xf]
        %v3601 = vunpack.c.l.b16 %v3569
        %v3602 = vunpack.c.l.b16 %v3570
        %v3603 = vunpack.c.l.b16 %v3571
        %v3604 = vunpack.c.l.b16 %v3572
        %v3605 = vunpack.c.l.b16 %v3573
        %v3606 = vunpack.c.l.b16 %v3574
        %v3607 = vunpack.c.l.b16 %v3575
        %v3608 = vunpack.c.l.b16 %v3576
        %v3609 = vunpack.c.l.b16 %v3577
        %v3610 = vunpack.c.l.b16 %v3578
        %v3611 = vunpack.c.l.b16 %v3579
        %v3612 = vunpack.c.l.b16 %v3580
        %v3613 = vunpack.c.l.b16 %v3581
        %v3614 = vunpack.c.l.b16 %v3582
        %v3615 = vunpack.c.l.b16 %v3583
        %v3616 = vunpack.c.l.b16 %v3584
        %v3617 = vpack.c.b16 %v3602, %v3601
        %v3618 = vpack.c.b16 %v3604, %v3603
        %v3619 = vpack.c.b16 %v3606, %v3605
        %v3620 = vpack.c.b16 %v3608, %v3607
        %v3621 = vpack.c.b16 %v3610, %v3609
        %v3622 = vpack.c.b16 %v3612, %v3611
        %v3623 = vpack.c.b16 %v3614, %v3613
        %v3624 = vpack.c.b16 %v3616, %v3615
        %3633 = vmatpush.bf16.msra.mxu0 %v3624
        %3634 = vmatpush.bf16.msra.mxu0 %v3623
        %3635 = vmatpush.bf16.msra.mxu0 %v3622
        %3636 = vmatpush.bf16.msra.mxu0 %v3621
        %3637 = vmatpush.bf16.msra.mxu0 %v3620
        %3638 = vmatpush.bf16.msra.mxu0 %v3619
        %3639 = vmatpush.bf16.msra.mxu0 %v3618
        %3640 = vmatpush.bf16.msra.mxu0 %v3617
        %3641 = vmatmul.bf16.gmra.mxu0 %v3564
        %v3642 = vpop.f32.mrf.mxu0
        %v3643 = vadd.f32 0.0, %v3642
        %v3644 = vpop.f32.mrf.mxu0
        %v3645 = vadd.f32 0.0, %v3644
        %3646 = vmatmul.bf16.gmra.mxu0 %v3565
        %v3647 = vpop.f32.mrf.mxu0
        %v3648 = vadd.f32 0.0, %v3647
        %v3649 = vpop.f32.mrf.mxu0
        %v3650 = vadd.f32 0.0, %v3649
        %3651 = vmatmul.bf16.gmra.mxu0 %v3566
        %v3652 = vpop.f32.mrf.mxu0
        %v3653 = vadd.f32 0.0, %v3652
        %v3654 = vpop.f32.mrf.mxu0
        %v3655 = vadd.f32 0.0, %v3654
        %3656 = vmatmul.bf16.gmra.mxu0 %v3567
        %v3657 = vpop.f32.mrf.mxu0
        %v3658 = vadd.f32 0.0, %v3657
        %v3659 = vpop.f32.mrf.mxu0
        %v3660 = vadd.f32 0.0, %v3659
        %3661 = vdwg.mxu0
        %v3662 = vadd.f32 %v3547, %v3643
        %v3663 = vadd.f32 %v3548, %v3645
        %v3664 = vadd.f32 %v3549, %v3648
        %v3665 = vadd.f32 %v3550, %v3650
        %v3666 = vadd.f32 %v3551, %v3653
        %v3667 = vadd.f32 %v3552, %v3655
        %v3668 = vadd.f32 %v3553, %v3658
        %v3669 = vadd.f32 %v3554, %v3660
        %v3670 = vld [vmem:[%s3555 + $0x1] sm:$0xff]
        %v3671 = vld [vmem:[%s3555 + $0x11] sm:$0xff]
        %v3672 = vld [vmem:[%s3555 + $0x21] sm:$0xff]
        %v3673 = vld [vmem:[%s3555 + $0x31] sm:$0xff]
        %v3674 = vld [vmem:[%s3555 + $0x41] sm:$0xff]
        %v3675 = vld [vmem:[%s3555 + $0x51] sm:$0xff]
        %v3676 = vld [vmem:[%s3555 + $0x61] sm:$0xff]
        %v3677 = vld [vmem:[%s3555 + $0x71] sm:$0xff]
        %v3678 = vpack.c.bf16 %v3671, %v3670
        %v3679 = vpack.c.bf16 %v3673, %v3672
        %v3680 = vpack.c.bf16 %v3675, %v3674
        %v3681 = vpack.c.bf16 %v3677, %v3676
        %s3682 = scalar_lea.vmem [#allocation6], 448
        %v3683 = vld [vmem:[%s3682] sm:$0xf]
        %v3684 = vld [vmem:[%s3682 + $0x4] sm:$0xf]
        %v3685 = vld [vmem:[%s3682 + $0x8] sm:$0xf]
        %v3686 = vld [vmem:[%s3682 + $0xc] sm:$0xf]
        %v3687 = vld [vmem:[%s3682 + $0x10] sm:$0xf]
        %v3688 = vld [vmem:[%s3682 + $0x14] sm:$0xf]
        %v3689 = vld [vmem:[%s3682 + $0x18] sm:$0xf]
        %v3690 = vld [vmem:[%s3682 + $0x1c] sm:$0xf]
        %v3691 = vld [vmem:[%s3682 + $0x20] sm:$0xf]
        %v3692 = vld [vmem:[%s3682 + $0x24] sm:$0xf]
        %v3693 = vld [vmem:[%s3682 + $0x28] sm:$0xf]
        %v3694 = vld [vmem:[%s3682 + $0x2c] sm:$0xf]
        %v3695 = vld [vmem:[%s3682 + $0x30] sm:$0xf]
        %v3696 = vld [vmem:[%s3682 + $0x34] sm:$0xf]
        %v3697 = vld [vmem:[%s3682 + $0x38] sm:$0xf]
        %v3698 = vld [vmem:[%s3682 + $0x3c] sm:$0xf]
        %v3715 = vunpack.c.l.b16 %v3683
        %v3716 = vunpack.c.l.b16 %v3684
        %v3717 = vunpack.c.l.b16 %v3685
        %v3718 = vunpack.c.l.b16 %v3686
        %v3719 = vunpack.c.l.b16 %v3687
        %v3720 = vunpack.c.l.b16 %v3688
        %v3721 = vunpack.c.l.b16 %v3689
        %v3722 = vunpack.c.l.b16 %v3690
        %v3723 = vunpack.c.l.b16 %v3691
        %v3724 = vunpack.c.l.b16 %v3692
        %v3725 = vunpack.c.l.b16 %v3693
        %v3726 = vunpack.c.l.b16 %v3694
        %v3727 = vunpack.c.l.b16 %v3695
        %v3728 = vunpack.c.l.b16 %v3696
        %v3729 = vunpack.c.l.b16 %v3697
        %v3730 = vunpack.c.l.b16 %v3698
        %v3731 = vpack.c.b16 %v3716, %v3715
        %v3732 = vpack.c.b16 %v3718, %v3717
        %v3733 = vpack.c.b16 %v3720, %v3719
        %v3734 = vpack.c.b16 %v3722, %v3721
        %v3735 = vpack.c.b16 %v3724, %v3723
        %v3736 = vpack.c.b16 %v3726, %v3725
        %v3737 = vpack.c.b16 %v3728, %v3727
        %v3738 = vpack.c.b16 %v3730, %v3729
        %3747 = vmatpush.bf16.msra.mxu0 %v3738
        %3748 = vmatpush.bf16.msra.mxu0 %v3737
        %3749 = vmatpush.bf16.msra.mxu0 %v3736
        %3750 = vmatpush.bf16.msra.mxu0 %v3735
        %3751 = vmatpush.bf16.msra.mxu0 %v3734
        %3752 = vmatpush.bf16.msra.mxu0 %v3733
        %3753 = vmatpush.bf16.msra.mxu0 %v3732
        %3754 = vmatpush.bf16.msra.mxu0 %v3731
        %3755 = vmatmul.bf16.gmra.mxu0 %v3678
        %v3756 = vpop.f32.mrf.mxu0
        %v3757 = vadd.f32 0.0, %v3756
        %v3758 = vpop.f32.mrf.mxu0
        %v3759 = vadd.f32 0.0, %v3758
        %3760 = vmatmul.bf16.gmra.mxu0 %v3679
        %v3761 = vpop.f32.mrf.mxu0
        %v3762 = vadd.f32 0.0, %v3761
        %v3763 = vpop.f32.mrf.mxu0
        %v3764 = vadd.f32 0.0, %v3763
        %3765 = vmatmul.bf16.gmra.mxu0 %v3680
        %v3766 = vpop.f32.mrf.mxu0
        %v3767 = vadd.f32 0.0, %v3766
        %v3768 = vpop.f32.mrf.mxu0
        %v3769 = vadd.f32 0.0, %v3768
        %3770 = vmatmul.bf16.gmra.mxu0 %v3681
        %v3771 = vpop.f32.mrf.mxu0
        %v3772 = vadd.f32 0.0, %v3771
        %v3773 = vpop.f32.mrf.mxu0
        %v3774 = vadd.f32 0.0, %v3773
        %3775 = vdwg.mxu0
        %v3776 = vadd.f32 %v3662, %v3757
        %v3777 = vadd.f32 %v3663, %v3759
        %v3778 = vadd.f32 %v3664, %v3762
        %v3779 = vadd.f32 %v3665, %v3764
        %v3780 = vadd.f32 %v3666, %v3767
        %v3781 = vadd.f32 %v3667, %v3769
        %v3782 = vadd.f32 %v3668, %v3772
        %v3783 = vadd.f32 %v3669, %v3774
        %v3784 = vld [vmem:[%s3555 + $0x2] sm:$0xff]
        %v3785 = vld [vmem:[%s3555 + $0x12] sm:$0xff]
        %v3786 = vld [vmem:[%s3555 + $0x22] sm:$0xff]
        %v3787 = vld [vmem:[%s3555 + $0x32] sm:$0xff]
        %v3788 = vld [vmem:[%s3555 + $0x42] sm:$0xff]
        %v3789 = vld [vmem:[%s3555 + $0x52] sm:$0xff]
        %v3790 = vld [vmem:[%s3555 + $0x62] sm:$0xff]
        %v3791 = vld [vmem:[%s3555 + $0x72] sm:$0xff]
        %v3792 = vpack.c.bf16 %v3785, %v3784
        %v3793 = vpack.c.bf16 %v3787, %v3786
        %v3794 = vpack.c.bf16 %v3789, %v3788
        %v3795 = vpack.c.bf16 %v3791, %v3790
        %s3796 = scalar_lea.vmem [#allocation6], 512
        %v3797 = vld [vmem:[%s3796] sm:$0xf]
        %v3798 = vld [vmem:[%s3796 + $0x4] sm:$0xf]
        %v3799 = vld [vmem:[%s3796 + $0x8] sm:$0xf]
        %v3800 = vld [vmem:[%s3796 + $0xc] sm:$0xf]
        %v3801 = vld [vmem:[%s3796 + $0x10] sm:$0xf]
        %v3802 = vld [vmem:[%s3796 + $0x14] sm:$0xf]
        %v3803 = vld [vmem:[%s3796 + $0x18] sm:$0xf]
        %v3804 = vld [vmem:[%s3796 + $0x1c] sm:$0xf]
        %v3805 = vld [vmem:[%s3796 + $0x20] sm:$0xf]
        %v3806 = vld [vmem:[%s3796 + $0x24] sm:$0xf]
        %v3807 = vld [vmem:[%s3796 + $0x28] sm:$0xf]
        %v3808 = vld [vmem:[%s3796 + $0x2c] sm:$0xf]
        %v3809 = vld [vmem:[%s3796 + $0x30] sm:$0xf]
        %v3810 = vld [vmem:[%s3796 + $0x34] sm:$0xf]
        %v3811 = vld [vmem:[%s3796 + $0x38] sm:$0xf]
        %v3812 = vld [vmem:[%s3796 + $0x3c] sm:$0xf]
        %v3829 = vunpack.c.l.b16 %v3797
        %v3830 = vunpack.c.l.b16 %v3798
        %v3831 = vunpack.c.l.b16 %v3799
        %v3832 = vunpack.c.l.b16 %v3800
        %v3833 = vunpack.c.l.b16 %v3801
        %v3834 = vunpack.c.l.b16 %v3802
        %v3835 = vunpack.c.l.b16 %v3803
        %v3836 = vunpack.c.l.b16 %v3804
        %v3837 = vunpack.c.l.b16 %v3805
        %v3838 = vunpack.c.l.b16 %v3806
        %v3839 = vunpack.c.l.b16 %v3807
        %v3840 = vunpack.c.l.b16 %v3808
        %v3841 = vunpack.c.l.b16 %v3809
        %v3842 = vunpack.c.l.b16 %v3810
        %v3843 = vunpack.c.l.b16 %v3811
        %v3844 = vunpack.c.l.b16 %v3812
        %v3845 = vpack.c.b16 %v3830, %v3829
        %v3846 = vpack.c.b16 %v3832, %v3831
        %v3847 = vpack.c.b16 %v3834, %v3833
        %v3848 = vpack.c.b16 %v3836, %v3835
        %v3849 = vpack.c.b16 %v3838, %v3837
        %v3850 = vpack.c.b16 %v3840, %v3839
        %v3851 = vpack.c.b16 %v3842, %v3841
        %v3852 = vpack.c.b16 %v3844, %v3843
        %3861 = vmatpush.bf16.msra.mxu0 %v3852
        %3862 = vmatpush.bf16.msra.mxu0 %v3851
        %3863 = vmatpush.bf16.msra.mxu0 %v3850
        %3864 = vmatpush.bf16.msra.mxu0 %v3849
        %3865 = vmatpush.bf16.msra.mxu0 %v3848
        %3866 = vmatpush.bf16.msra.mxu0 %v3847
        %3867 = vmatpush.bf16.msra.mxu0 %v3846
        %3868 = vmatpush.bf16.msra.mxu0 %v3845
        %3869 = vmatmul.bf16.gmra.mxu0 %v3792
        %v3870 = vpop.f32.mrf.mxu0
        %v3871 = vadd.f32 0.0, %v3870
        %v3872 = vpop.f32.mrf.mxu0
        %v3873 = vadd.f32 0.0, %v3872
        %3874 = vmatmul.bf16.gmra.mxu0 %v3793
        %v3875 = vpop.f32.mrf.mxu0
        %v3876 = vadd.f32 0.0, %v3875
        %v3877 = vpop.f32.mrf.mxu0
        %v3878 = vadd.f32 0.0, %v3877
        %3879 = vmatmul.bf16.gmra.mxu0 %v3794
        %v3880 = vpop.f32.mrf.mxu0
        %v3881 = vadd.f32 0.0, %v3880
        %v3882 = vpop.f32.mrf.mxu0
        %v3883 = vadd.f32 0.0, %v3882
        %3884 = vmatmul.bf16.gmra.mxu0 %v3795
        %v3885 = vpop.f32.mrf.mxu0
        %v3886 = vadd.f32 0.0, %v3885
        %v3887 = vpop.f32.mrf.mxu0
        %v3888 = vadd.f32 0.0, %v3887
        %3889 = vdwg.mxu0
        %v3890 = vadd.f32 %v3776, %v3871
        %v3891 = vadd.f32 %v3777, %v3873
        %v3892 = vadd.f32 %v3778, %v3876
        %v3893 = vadd.f32 %v3779, %v3878
        %v3894 = vadd.f32 %v3780, %v3881
        %v3895 = vadd.f32 %v3781, %v3883
        %v3896 = vadd.f32 %v3782, %v3886
        %v3897 = vadd.f32 %v3783, %v3888
        %v3898 = vld [vmem:[%s4] sm:$0x1]
        %v3900 = vperm.slane %v3898, 0
        %v3902 = vadd.f32 %v3890, %v3900
        %v3903 = vadd.f32 %v3891, %v3900
        %v3904 = vadd.f32 %v3892, %v3900
        %v3905 = vadd.f32 %v3893, %v3900
        %v3906 = vadd.f32 %v3894, %v3900
        %v3907 = vadd.f32 %v3895, %v3900
        %v3908 = vadd.f32 %v3896, %v3900
        %v3909 = vadd.f32 %v3897, %v3900
        %v3910 = vmax.f32 %v3902, 0.0
        %v3911 = vmax.f32 %v3903, 0.0
        %v3912 = vmax.f32 %v3904, 0.0
        %v3913 = vmax.f32 %v3905, 0.0
        %v3914 = vmax.f32 %v3906, 0.0
        %v3915 = vmax.f32 %v3907, 0.0
        %v3916 = vmax.f32 %v3908, 0.0
        %v3917 = vmax.f32 %v3909, 0.0
        %v3918 = vld [vmem:[%s7] sm:$0x1]
        %v3920 = vperm.slane %v3918, 0
        %v3922 = vmul.f32 %v3910, %v3920
        %v3923 = vmul.f32 %v3911, %v3920
        %v3924 = vmul.f32 %v3912, %v3920
        %v3925 = vmul.f32 %v3913, %v3920
        %v3926 = vmul.f32 %v3914, %v3920
        %v3927 = vmul.f32 %v3915, %v3920
        %v3928 = vmul.f32 %v3916, %v3920
        %v3929 = vmul.f32 %v3917, %v3920
        %v3930 = vld [vmem:[%s8] sm:$0x1]
        %v3932 = vperm.slane %v3930, 0
        %v3934 = vadd.f32 %v3922, %v3932
        %v3935 = vadd.f32 %v3923, %v3932
        %v3936 = vadd.f32 %v3924, %v3932
        %v3937 = vadd.f32 %v3925, %v3932
        %v3938 = vadd.f32 %v3926, %v3932
        %v3939 = vadd.f32 %v3927, %v3932
        %v3940 = vadd.f32 %v3928, %v3932
        %v3941 = vadd.f32 %v3929, %v3932
        %v3942 = vmax.f32 %v3934, %v3935
        %v3943 = vmax.f32 %v3936, %v3937
        %v3944 = vmax.f32 %v3938, %v3939
        %v3945 = vmax.f32 %v3940, %v3941
        %3946 = vst [vmem:[#allocation5] sm:$0xff] %v3942
        %3947 = vst [vmem:[#allocation5 + $0x8] sm:$0xff] %v3943
        %3948 = vst [vmem:[#allocation5 + $0x10] sm:$0xff] %v3944
        %3949 = vst [vmem:[#allocation5 + $0x18] sm:$0xff] %v3945
        %v3950 = vld [vmem:[#allocation5] ss:$2 sm:$0xf]
        %s3951 = scalar_lea.vmem [#allocation5], 8
        %v3952 = vld [vmem:[%s3951] ss:$2 sm:$0xf]
        %s3953 = scalar_lea.vmem [#allocation5], 16
        %v3954 = vld [vmem:[%s3953] ss:$2 sm:$0xf]
        %s3955 = scalar_lea.vmem [#allocation5], 24
        %v3956 = vld [vmem:[%s3955] ss:$2 sm:$0xf]
        %s3957 = scalar_lea.vmem [#allocation5], 1
        %v3958 = vld [vmem:[%s3957] ss:$2 sm:$0xf]
        %s3959 = scalar_lea.vmem [#allocation5], 9
        %v3960 = vld [vmem:[%s3959] ss:$2 sm:$0xf]
        %s3961 = scalar_lea.vmem [#allocation5], 17
        %v3962 = vld [vmem:[%s3961] ss:$2 sm:$0xf]
        %s3963 = scalar_lea.vmem [#allocation5], 25
        %v3964 = vld [vmem:[%s3963] ss:$2 sm:$0xf]
        %v3965 = vmax.f32 %v3950, %v3958
        %v3966 = vmax.f32 %v3952, %v3960
        %v3967 = vmax.f32 %v3954, %v3962
        %v3968 = vmax.f32 %v3956, %v3964
        %v3969 = vpack.c.bf16 %v3965, %v3965
        %v3970 = vld [vmem:[#allocation9] sm:$0xf]
        %v3971 = vld [vmem:[#allocation9 + $0x4] sm:$0xf]
        %v3972 = vld [vmem:[#allocation9 + $0x8] sm:$0xf]
        %v3973 = vld [vmem:[#allocation9 + $0xc] sm:$0xf]
        %v3974 = vld [vmem:[#allocation9 + $0x10] sm:$0xf]
        %v3975 = vld [vmem:[#allocation9 + $0x14] sm:$0xf]
        %v3976 = vld [vmem:[#allocation9 + $0x18] sm:$0xf]
        %v3977 = vld [vmem:[#allocation9 + $0x1c] sm:$0xf]
        %v3978 = vld [vmem:[#allocation9 + $0x20] sm:$0xf]
        %v3979 = vld [vmem:[#allocation9 + $0x24] sm:$0xf]
        %v3980 = vld [vmem:[#allocation9 + $0x28] sm:$0xf]
        %v3981 = vld [vmem:[#allocation9 + $0x2c] sm:$0xf]
        %v3982 = vld [vmem:[#allocation9 + $0x30] sm:$0xf]
        %v3983 = vld [vmem:[#allocation9 + $0x34] sm:$0xf]
        %v3984 = vld [vmem:[#allocation9 + $0x38] sm:$0xf]
        %v3985 = vld [vmem:[#allocation9 + $0x3c] sm:$0xf]
        %s3986 = scalar_lea.vmem [#allocation9], 64
        %v3987 = vld [vmem:[%s3986] sm:$0xf]
        %v3988 = vld [vmem:[%s3986 + $0x4] sm:$0xf]
        %v3989 = vld [vmem:[%s3986 + $0x8] sm:$0xf]
        %v3990 = vld [vmem:[%s3986 + $0xc] sm:$0xf]
        %v3991 = vld [vmem:[%s3986 + $0x10] sm:$0xf]
        %v3992 = vld [vmem:[%s3986 + $0x14] sm:$0xf]
        %v3993 = vld [vmem:[%s3986 + $0x18] sm:$0xf]
        %v3994 = vld [vmem:[%s3986 + $0x1c] sm:$0xf]
        %v3995 = vld [vmem:[%s3986 + $0x20] sm:$0xf]
        %v3996 = vld [vmem:[%s3986 + $0x24] sm:$0xf]
        %v3997 = vld [vmem:[%s3986 + $0x28] sm:$0xf]
        %v3998 = vld [vmem:[%s3986 + $0x2c] sm:$0xf]
        %v3999 = vld [vmem:[%s3986 + $0x30] sm:$0xf]
        %v4000 = vld [vmem:[%s3986 + $0x34] sm:$0xf]
        %v4001 = vld [vmem:[%s3986 + $0x38] sm:$0xf]
        %v4002 = vld [vmem:[%s3986 + $0x3c] sm:$0xf]
        %v4004 = vshrl.u32 %v3969, 16
        %v4023 = vunpack.c.l.b16 %v3987
        %v4024 = vunpack.c.l.b16 %v3988
        %v4025 = vunpack.c.l.b16 %v3989
        %v4026 = vunpack.c.l.b16 %v3990
        %v4027 = vunpack.c.l.b16 %v3991
        %v4028 = vunpack.c.l.b16 %v3992
        %v4029 = vunpack.c.l.b16 %v3993
        %v4030 = vunpack.c.l.b16 %v3994
        %v4031 = vunpack.c.l.b16 %v3995
        %v4032 = vunpack.c.l.b16 %v3996
        %v4033 = vunpack.c.l.b16 %v3997
        %v4034 = vunpack.c.l.b16 %v3998
        %v4035 = vunpack.c.l.b16 %v3999
        %v4036 = vunpack.c.l.b16 %v4000
        %v4037 = vunpack.c.l.b16 %v4001
        %v4038 = vunpack.c.l.b16 %v4002
        %v4039 = vpack.c.b16 %v4024, %v4023
        %v4040 = vpack.c.b16 %v4026, %v4025
        %v4041 = vpack.c.b16 %v4028, %v4027
        %v4042 = vpack.c.b16 %v4030, %v4029
        %v4043 = vpack.c.b16 %v4032, %v4031
        %v4044 = vpack.c.b16 %v4034, %v4033
        %v4045 = vpack.c.b16 %v4036, %v4035
        %v4046 = vpack.c.b16 %v4038, %v4037
        %4055 = vmatpush.bf16.msra.mxu0 %v4046
        %4056 = vmatpush.bf16.msra.mxu0 %v4045
        %4057 = vmatpush.bf16.msra.mxu0 %v4044
        %4058 = vmatpush.bf16.msra.mxu0 %v4043
        %4059 = vmatpush.bf16.msra.mxu0 %v4042
        %4060 = vmatpush.bf16.msra.mxu0 %v4041
        %4061 = vmatpush.bf16.msra.mxu0 %v4040
        %4062 = vmatpush.bf16.msra.mxu0 %v4039
        %4063 = vmatmul.bf16.gmra.mxu0 %v4004
        %v4064 = vpop.f32.mrf.mxu0
        %v4065 = vadd.f32 0.0, %v4064
        %v4066 = vpop.f32.mrf.mxu0
        %4067 = vdwg.mxu0
        %v4084 = vunpack.c.l.b16 %v3970
        %v4085 = vunpack.c.l.b16 %v3971
        %v4086 = vunpack.c.l.b16 %v3972
        %v4087 = vunpack.c.l.b16 %v3973
        %v4088 = vunpack.c.l.b16 %v3974
        %v4089 = vunpack.c.l.b16 %v3975
        %v4090 = vunpack.c.l.b16 %v3976
        %v4091 = vunpack.c.l.b16 %v3977
        %v4092 = vunpack.c.l.b16 %v3978
        %v4093 = vunpack.c.l.b16 %v3979
        %v4094 = vunpack.c.l.b16 %v3980
        %v4095 = vunpack.c.l.b16 %v3981
        %v4096 = vunpack.c.l.b16 %v3982
        %v4097 = vunpack.c.l.b16 %v3983
        %v4098 = vunpack.c.l.b16 %v3984
        %v4099 = vunpack.c.l.b16 %v3985
        %v4100 = vpack.c.b16 %v4085, %v4084
        %v4101 = vpack.c.b16 %v4087, %v4086
        %v4102 = vpack.c.b16 %v4089, %v4088
        %v4103 = vpack.c.b16 %v4091, %v4090
        %v4104 = vpack.c.b16 %v4093, %v4092
        %v4105 = vpack.c.b16 %v4095, %v4094
        %v4106 = vpack.c.b16 %v4097, %v4096
        %v4107 = vpack.c.b16 %v4099, %v4098
        %4116 = vmatpush.bf16.msra.mxu0 %v4107
        %4117 = vmatpush.bf16.msra.mxu0 %v4106
        %4118 = vmatpush.bf16.msra.mxu0 %v4105
        %4119 = vmatpush.bf16.msra.mxu0 %v4104
        %4120 = vmatpush.bf16.msra.mxu0 %v4103
        %4121 = vmatpush.bf16.msra.mxu0 %v4102
        %4122 = vmatpush.bf16.msra.mxu0 %v4101
        %4123 = vmatpush.bf16.msra.mxu0 %v4100
        %4124 = vmatmul.bf16.gmra.mxu0 %v3969
        %v4125 = vpop.f32.mrf.mxu0
        %v4126 = vadd.f32 %v4065, %v4125
        %v4127 = vpop.f32.mrf.mxu0
        %4128 = vdwg.mxu0
        %s4129 = scalar_lea.vmem [#allocation9], 128
        %v4130 = vld [vmem:[%s4129] sm:$0xf]
        %v4131 = vld [vmem:[%s4129 + $0x4] sm:$0xf]
        %v4132 = vld [vmem:[%s4129 + $0x8] sm:$0xf]
        %v4133 = vld [vmem:[%s4129 + $0xc] sm:$0xf]
        %v4134 = vld [vmem:[%s4129 + $0x10] sm:$0xf]
        %v4135 = vld [vmem:[%s4129 + $0x14] sm:$0xf]
        %v4136 = vld [vmem:[%s4129 + $0x18] sm:$0xf]
        %v4137 = vld [vmem:[%s4129 + $0x1c] sm:$0xf]
        %v4138 = vld [vmem:[%s4129 + $0x20] sm:$0xf]
        %v4139 = vld [vmem:[%s4129 + $0x24] sm:$0xf]
        %v4140 = vld [vmem:[%s4129 + $0x28] sm:$0xf]
        %v4141 = vld [vmem:[%s4129 + $0x2c] sm:$0xf]
        %v4142 = vld [vmem:[%s4129 + $0x30] sm:$0xf]
        %v4143 = vld [vmem:[%s4129 + $0x34] sm:$0xf]
        %v4144 = vld [vmem:[%s4129 + $0x38] sm:$0xf]
        %v4145 = vld [vmem:[%s4129 + $0x3c] sm:$0xf]
        %v4147 = vrot.slane %v3969, 1
        %v4165 = vunpack.c.l.b16 %v4130
        %v4166 = vunpack.c.l.b16 %v4131
        %v4167 = vunpack.c.l.b16 %v4132
        %v4168 = vunpack.c.l.b16 %v4133
        %v4169 = vunpack.c.l.b16 %v4134
        %v4170 = vunpack.c.l.b16 %v4135
        %v4171 = vunpack.c.l.b16 %v4136
        %v4172 = vunpack.c.l.b16 %v4137
        %v4173 = vunpack.c.l.b16 %v4138
        %v4174 = vunpack.c.l.b16 %v4139
        %v4175 = vunpack.c.l.b16 %v4140
        %v4176 = vunpack.c.l.b16 %v4141
        %v4177 = vunpack.c.l.b16 %v4142
        %v4178 = vunpack.c.l.b16 %v4143
        %v4179 = vunpack.c.l.b16 %v4144
        %v4180 = vunpack.c.l.b16 %v4145
        %v4181 = vpack.c.b16 %v4166, %v4165
        %v4182 = vpack.c.b16 %v4168, %v4167
        %v4183 = vpack.c.b16 %v4170, %v4169
        %v4184 = vpack.c.b16 %v4172, %v4171
        %v4185 = vpack.c.b16 %v4174, %v4173
        %v4186 = vpack.c.b16 %v4176, %v4175
        %v4187 = vpack.c.b16 %v4178, %v4177
        %v4188 = vpack.c.b16 %v4180, %v4179
        %4197 = vmatpush.bf16.msra.mxu0 %v4188
        %4198 = vmatpush.bf16.msra.mxu0 %v4187
        %4199 = vmatpush.bf16.msra.mxu0 %v4186
        %4200 = vmatpush.bf16.msra.mxu0 %v4185
        %4201 = vmatpush.bf16.msra.mxu0 %v4184
        %4202 = vmatpush.bf16.msra.mxu0 %v4183
        %4203 = vmatpush.bf16.msra.mxu0 %v4182
        %4204 = vmatpush.bf16.msra.mxu0 %v4181
        %4205 = vmatmul.bf16.gmra.mxu0 %v4147
        %v4206 = vpop.f32.mrf.mxu0
        %v4207 = vadd.f32 0.0, %v4206
        %v4208 = vpop.f32.mrf.mxu0
        %4209 = vdwg.mxu0
        %v4210 = vadd.f32 %v4126, %v4207
        %s4211 = scalar_lea.vmem [#allocation9], 192
        %v4212 = vld [vmem:[%s4211] sm:$0xf]
        %v4213 = vld [vmem:[%s4211 + $0x4] sm:$0xf]
        %v4214 = vld [vmem:[%s4211 + $0x8] sm:$0xf]
        %v4215 = vld [vmem:[%s4211 + $0xc] sm:$0xf]
        %v4216 = vld [vmem:[%s4211 + $0x10] sm:$0xf]
        %v4217 = vld [vmem:[%s4211 + $0x14] sm:$0xf]
        %v4218 = vld [vmem:[%s4211 + $0x18] sm:$0xf]
        %v4219 = vld [vmem:[%s4211 + $0x1c] sm:$0xf]
        %v4220 = vld [vmem:[%s4211 + $0x20] sm:$0xf]
        %v4221 = vld [vmem:[%s4211 + $0x24] sm:$0xf]
        %v4222 = vld [vmem:[%s4211 + $0x28] sm:$0xf]
        %v4223 = vld [vmem:[%s4211 + $0x2c] sm:$0xf]
        %v4224 = vld [vmem:[%s4211 + $0x30] sm:$0xf]
        %v4225 = vld [vmem:[%s4211 + $0x34] sm:$0xf]
        %v4226 = vld [vmem:[%s4211 + $0x38] sm:$0xf]
        %v4227 = vld [vmem:[%s4211 + $0x3c] sm:$0xf]
        %v4228 = vrot.slane %v4004, 1
        %v4246 = vunpack.c.l.b16 %v4212
        %v4247 = vunpack.c.l.b16 %v4213
        %v4248 = vunpack.c.l.b16 %v4214
        %v4249 = vunpack.c.l.b16 %v4215
        %v4250 = vunpack.c.l.b16 %v4216
        %v4251 = vunpack.c.l.b16 %v4217
        %v4252 = vunpack.c.l.b16 %v4218
        %v4253 = vunpack.c.l.b16 %v4219
        %v4254 = vunpack.c.l.b16 %v4220
        %v4255 = vunpack.c.l.b16 %v4221
        %v4256 = vunpack.c.l.b16 %v4222
        %v4257 = vunpack.c.l.b16 %v4223
        %v4258 = vunpack.c.l.b16 %v4224
        %v4259 = vunpack.c.l.b16 %v4225
        %v4260 = vunpack.c.l.b16 %v4226
        %v4261 = vunpack.c.l.b16 %v4227
        %v4262 = vpack.c.b16 %v4247, %v4246
        %v4263 = vpack.c.b16 %v4249, %v4248
        %v4264 = vpack.c.b16 %v4251, %v4250
        %v4265 = vpack.c.b16 %v4253, %v4252
        %v4266 = vpack.c.b16 %v4255, %v4254
        %v4267 = vpack.c.b16 %v4257, %v4256
        %v4268 = vpack.c.b16 %v4259, %v4258
        %v4269 = vpack.c.b16 %v4261, %v4260
        %4278 = vmatpush.bf16.msra.mxu0 %v4269
        %4279 = vmatpush.bf16.msra.mxu0 %v4268
        %4280 = vmatpush.bf16.msra.mxu0 %v4267
        %4281 = vmatpush.bf16.msra.mxu0 %v4266
        %4282 = vmatpush.bf16.msra.mxu0 %v4265
        %4283 = vmatpush.bf16.msra.mxu0 %v4264
        %4284 = vmatpush.bf16.msra.mxu0 %v4263
        %4285 = vmatpush.bf16.msra.mxu0 %v4262
        %4286 = vmatmul.bf16.gmra.mxu0 %v4228
        %v4287 = vpop.f32.mrf.mxu0
        %v4288 = vadd.f32 0.0, %v4287
        %v4289 = vpop.f32.mrf.mxu0
        %4290 = vdwg.mxu0
        %v4291 = vadd.f32 %v4210, %v4288
        %v4292 = vpack.c.bf16 %v3966, %v3966
        %s4293 = scalar_lea.vmem [#allocation9], 256
        %v4294 = vld [vmem:[%s4293] sm:$0xf]
        %v4295 = vld [vmem:[%s4293 + $0x4] sm:$0xf]
        %v4296 = vld [vmem:[%s4293 + $0x8] sm:$0xf]
        %v4297 = vld [vmem:[%s4293 + $0xc] sm:$0xf]
        %v4298 = vld [vmem:[%s4293 + $0x10] sm:$0xf]
        %v4299 = vld [vmem:[%s4293 + $0x14] sm:$0xf]
        %v4300 = vld [vmem:[%s4293 + $0x18] sm:$0xf]
        %v4301 = vld [vmem:[%s4293 + $0x1c] sm:$0xf]
        %v4302 = vld [vmem:[%s4293 + $0x20] sm:$0xf]
        %v4303 = vld [vmem:[%s4293 + $0x24] sm:$0xf]
        %v4304 = vld [vmem:[%s4293 + $0x28] sm:$0xf]
        %v4305 = vld [vmem:[%s4293 + $0x2c] sm:$0xf]
        %v4306 = vld [vmem:[%s4293 + $0x30] sm:$0xf]
        %v4307 = vld [vmem:[%s4293 + $0x34] sm:$0xf]
        %v4308 = vld [vmem:[%s4293 + $0x38] sm:$0xf]
        %v4309 = vld [vmem:[%s4293 + $0x3c] sm:$0xf]
        %v4326 = vunpack.c.l.b16 %v4294
        %v4327 = vunpack.c.l.b16 %v4295
        %v4328 = vunpack.c.l.b16 %v4296
        %v4329 = vunpack.c.l.b16 %v4297
        %v4330 = vunpack.c.l.b16 %v4298
        %v4331 = vunpack.c.l.b16 %v4299
        %v4332 = vunpack.c.l.b16 %v4300
        %v4333 = vunpack.c.l.b16 %v4301
        %v4334 = vunpack.c.l.b16 %v4302
        %v4335 = vunpack.c.l.b16 %v4303
        %v4336 = vunpack.c.l.b16 %v4304
        %v4337 = vunpack.c.l.b16 %v4305
        %v4338 = vunpack.c.l.b16 %v4306
        %v4339 = vunpack.c.l.b16 %v4307
        %v4340 = vunpack.c.l.b16 %v4308
        %v4341 = vunpack.c.l.b16 %v4309
        %v4342 = vpack.c.b16 %v4327, %v4326
        %v4343 = vpack.c.b16 %v4329, %v4328
        %v4344 = vpack.c.b16 %v4331, %v4330
        %v4345 = vpack.c.b16 %v4333, %v4332
        %v4346 = vpack.c.b16 %v4335, %v4334
        %v4347 = vpack.c.b16 %v4337, %v4336
        %v4348 = vpack.c.b16 %v4339, %v4338
        %v4349 = vpack.c.b16 %v4341, %v4340
        %4358 = vmatpush.bf16.msra.mxu0 %v4349
        %4359 = vmatpush.bf16.msra.mxu0 %v4348
        %4360 = vmatpush.bf16.msra.mxu0 %v4347
        %4361 = vmatpush.bf16.msra.mxu0 %v4346
        %4362 = vmatpush.bf16.msra.mxu0 %v4345
        %4363 = vmatpush.bf16.msra.mxu0 %v4344
        %4364 = vmatpush.bf16.msra.mxu0 %v4343
        %4365 = vmatpush.bf16.msra.mxu0 %v4342
        %4366 = vmatmul.bf16.gmra.mxu0 %v4292
        %v4367 = vpop.f32.mrf.mxu0
        %v4368 = vadd.f32 0.0, %v4367
        %v4369 = vpop.f32.mrf.mxu0
        %4370 = vdwg.mxu0
        %v4371 = vadd.f32 %v4291, %v4368
        %s4372 = scalar_lea.vmem [#allocation9], 320
        %v4373 = vld [vmem:[%s4372] sm:$0xf]
        %v4374 = vld [vmem:[%s4372 + $0x4] sm:$0xf]
        %v4375 = vld [vmem:[%s4372 + $0x8] sm:$0xf]
        %v4376 = vld [vmem:[%s4372 + $0xc] sm:$0xf]
        %v4377 = vld [vmem:[%s4372 + $0x10] sm:$0xf]
        %v4378 = vld [vmem:[%s4372 + $0x14] sm:$0xf]
        %v4379 = vld [vmem:[%s4372 + $0x18] sm:$0xf]
        %v4380 = vld [vmem:[%s4372 + $0x1c] sm:$0xf]
        %v4381 = vld [vmem:[%s4372 + $0x20] sm:$0xf]
        %v4382 = vld [vmem:[%s4372 + $0x24] sm:$0xf]
        %v4383 = vld [vmem:[%s4372 + $0x28] sm:$0xf]
        %v4384 = vld [vmem:[%s4372 + $0x2c] sm:$0xf]
        %v4385 = vld [vmem:[%s4372 + $0x30] sm:$0xf]
        %v4386 = vld [vmem:[%s4372 + $0x34] sm:$0xf]
        %v4387 = vld [vmem:[%s4372 + $0x38] sm:$0xf]
        %v4388 = vld [vmem:[%s4372 + $0x3c] sm:$0xf]
        %v4390 = vshrl.u32 %v4292, 16
        %v4409 = vunpack.c.l.b16 %v4373
        %v4410 = vunpack.c.l.b16 %v4374
        %v4411 = vunpack.c.l.b16 %v4375
        %v4412 = vunpack.c.l.b16 %v4376
        %v4413 = vunpack.c.l.b16 %v4377
        %v4414 = vunpack.c.l.b16 %v4378
        %v4415 = vunpack.c.l.b16 %v4379
        %v4416 = vunpack.c.l.b16 %v4380
        %v4417 = vunpack.c.l.b16 %v4381
        %v4418 = vunpack.c.l.b16 %v4382
        %v4419 = vunpack.c.l.b16 %v4383
        %v4420 = vunpack.c.l.b16 %v4384
        %v4421 = vunpack.c.l.b16 %v4385
        %v4422 = vunpack.c.l.b16 %v4386
        %v4423 = vunpack.c.l.b16 %v4387
        %v4424 = vunpack.c.l.b16 %v4388
        %v4425 = vpack.c.b16 %v4410, %v4409
        %v4426 = vpack.c.b16 %v4412, %v4411
        %v4427 = vpack.c.b16 %v4414, %v4413
        %v4428 = vpack.c.b16 %v4416, %v4415
        %v4429 = vpack.c.b16 %v4418, %v4417
        %v4430 = vpack.c.b16 %v4420, %v4419
        %v4431 = vpack.c.b16 %v4422, %v4421
        %v4432 = vpack.c.b16 %v4424, %v4423
        %4441 = vmatpush.bf16.msra.mxu0 %v4432
        %4442 = vmatpush.bf16.msra.mxu0 %v4431
        %4443 = vmatpush.bf16.msra.mxu0 %v4430
        %4444 = vmatpush.bf16.msra.mxu0 %v4429
        %4445 = vmatpush.bf16.msra.mxu0 %v4428
        %4446 = vmatpush.bf16.msra.mxu0 %v4427
        %4447 = vmatpush.bf16.msra.mxu0 %v4426
        %4448 = vmatpush.bf16.msra.mxu0 %v4425
        %4449 = vmatmul.bf16.gmra.mxu0 %v4390
        %v4450 = vpop.f32.mrf.mxu0
        %v4451 = vadd.f32 0.0, %v4450
        %v4452 = vpop.f32.mrf.mxu0
        %4453 = vdwg.mxu0
        %v4454 = vadd.f32 %v4371, %v4451
        %s4455 = scalar_lea.vmem [#allocation9], 384
        %v4456 = vld [vmem:[%s4455] sm:$0xf]
        %v4457 = vld [vmem:[%s4455 + $0x4] sm:$0xf]
        %v4458 = vld [vmem:[%s4455 + $0x8] sm:$0xf]
        %v4459 = vld [vmem:[%s4455 + $0xc] sm:$0xf]
        %v4460 = vld [vmem:[%s4455 + $0x10] sm:$0xf]
        %v4461 = vld [vmem:[%s4455 + $0x14] sm:$0xf]
        %v4462 = vld [vmem:[%s4455 + $0x18] sm:$0xf]
        %v4463 = vld [vmem:[%s4455 + $0x1c] sm:$0xf]
        %v4464 = vld [vmem:[%s4455 + $0x20] sm:$0xf]
        %v4465 = vld [vmem:[%s4455 + $0x24] sm:$0xf]
        %v4466 = vld [vmem:[%s4455 + $0x28] sm:$0xf]
        %v4467 = vld [vmem:[%s4455 + $0x2c] sm:$0xf]
        %v4468 = vld [vmem:[%s4455 + $0x30] sm:$0xf]
        %v4469 = vld [vmem:[%s4455 + $0x34] sm:$0xf]
        %v4470 = vld [vmem:[%s4455 + $0x38] sm:$0xf]
        %v4471 = vld [vmem:[%s4455 + $0x3c] sm:$0xf]
        %v4473 = vrot.slane %v4292, 1
        %v4491 = vunpack.c.l.b16 %v4456
        %v4492 = vunpack.c.l.b16 %v4457
        %v4493 = vunpack.c.l.b16 %v4458
        %v4494 = vunpack.c.l.b16 %v4459
        %v4495 = vunpack.c.l.b16 %v4460
        %v4496 = vunpack.c.l.b16 %v4461
        %v4497 = vunpack.c.l.b16 %v4462
        %v4498 = vunpack.c.l.b16 %v4463
        %v4499 = vunpack.c.l.b16 %v4464
        %v4500 = vunpack.c.l.b16 %v4465
        %v4501 = vunpack.c.l.b16 %v4466
        %v4502 = vunpack.c.l.b16 %v4467
        %v4503 = vunpack.c.l.b16 %v4468
        %v4504 = vunpack.c.l.b16 %v4469
        %v4505 = vunpack.c.l.b16 %v4470
        %v4506 = vunpack.c.l.b16 %v4471
        %v4507 = vpack.c.b16 %v4492, %v4491
        %v4508 = vpack.c.b16 %v4494, %v4493
        %v4509 = vpack.c.b16 %v4496, %v4495
        %v4510 = vpack.c.b16 %v4498, %v4497
        %v4511 = vpack.c.b16 %v4500, %v4499
        %v4512 = vpack.c.b16 %v4502, %v4501
        %v4513 = vpack.c.b16 %v4504, %v4503
        %v4514 = vpack.c.b16 %v4506, %v4505
        %4523 = vmatpush.bf16.msra.mxu0 %v4514
        %4524 = vmatpush.bf16.msra.mxu0 %v4513
        %4525 = vmatpush.bf16.msra.mxu0 %v4512
        %4526 = vmatpush.bf16.msra.mxu0 %v4511
        %4527 = vmatpush.bf16.msra.mxu0 %v4510
        %4528 = vmatpush.bf16.msra.mxu0 %v4509
        %4529 = vmatpush.bf16.msra.mxu0 %v4508
        %4530 = vmatpush.bf16.msra.mxu0 %v4507
        %4531 = vmatmul.bf16.gmra.mxu0 %v4473
        %v4532 = vpop.f32.mrf.mxu0
        %v4533 = vadd.f32 0.0, %v4532
        %v4534 = vpop.f32.mrf.mxu0
        %4535 = vdwg.mxu0
        %v4536 = vadd.f32 %v4454, %v4533
        %s4537 = scalar_lea.vmem [#allocation9], 448
        %v4538 = vld [vmem:[%s4537] sm:$0xf]
        %v4539 = vld [vmem:[%s4537 + $0x4] sm:$0xf]
        %v4540 = vld [vmem:[%s4537 + $0x8] sm:$0xf]
        %v4541 = vld [vmem:[%s4537 + $0xc] sm:$0xf]
        %v4542 = vld [vmem:[%s4537 + $0x10] sm:$0xf]
        %v4543 = vld [vmem:[%s4537 + $0x14] sm:$0xf]
        %v4544 = vld [vmem:[%s4537 + $0x18] sm:$0xf]
        %v4545 = vld [vmem:[%s4537 + $0x1c] sm:$0xf]
        %v4546 = vld [vmem:[%s4537 + $0x20] sm:$0xf]
        %v4547 = vld [vmem:[%s4537 + $0x24] sm:$0xf]
        %v4548 = vld [vmem:[%s4537 + $0x28] sm:$0xf]
        %v4549 = vld [vmem:[%s4537 + $0x2c] sm:$0xf]
        %v4550 = vld [vmem:[%s4537 + $0x30] sm:$0xf]
        %v4551 = vld [vmem:[%s4537 + $0x34] sm:$0xf]
        %v4552 = vld [vmem:[%s4537 + $0x38] sm:$0xf]
        %v4553 = vld [vmem:[%s4537 + $0x3c] sm:$0xf]
        %v4554 = vrot.slane %v4390, 1
        %v4572 = vunpack.c.l.b16 %v4538
        %v4573 = vunpack.c.l.b16 %v4539
        %v4574 = vunpack.c.l.b16 %v4540
        %v4575 = vunpack.c.l.b16 %v4541
        %v4576 = vunpack.c.l.b16 %v4542
        %v4577 = vunpack.c.l.b16 %v4543
        %v4578 = vunpack.c.l.b16 %v4544
        %v4579 = vunpack.c.l.b16 %v4545
        %v4580 = vunpack.c.l.b16 %v4546
        %v4581 = vunpack.c.l.b16 %v4547
        %v4582 = vunpack.c.l.b16 %v4548
        %v4583 = vunpack.c.l.b16 %v4549
        %v4584 = vunpack.c.l.b16 %v4550
        %v4585 = vunpack.c.l.b16 %v4551
        %v4586 = vunpack.c.l.b16 %v4552
        %v4587 = vunpack.c.l.b16 %v4553
        %v4588 = vpack.c.b16 %v4573, %v4572
        %v4589 = vpack.c.b16 %v4575, %v4574
        %v4590 = vpack.c.b16 %v4577, %v4576
        %v4591 = vpack.c.b16 %v4579, %v4578
        %v4592 = vpack.c.b16 %v4581, %v4580
        %v4593 = vpack.c.b16 %v4583, %v4582
        %v4594 = vpack.c.b16 %v4585, %v4584
        %v4595 = vpack.c.b16 %v4587, %v4586
        %4604 = vmatpush.bf16.msra.mxu0 %v4595
        %4605 = vmatpush.bf16.msra.mxu0 %v4594
        %4606 = vmatpush.bf16.msra.mxu0 %v4593
        %4607 = vmatpush.bf16.msra.mxu0 %v4592
        %4608 = vmatpush.bf16.msra.mxu0 %v4591
        %4609 = vmatpush.bf16.msra.mxu0 %v4590
        %4610 = vmatpush.bf16.msra.mxu0 %v4589
        %4611 = vmatpush.bf16.msra.mxu0 %v4588
        %4612 = vmatmul.bf16.gmra.mxu0 %v4554
        %v4613 = vpop.f32.mrf.mxu0
        %v4614 = vadd.f32 0.0, %v4613
        %v4615 = vpop.f32.mrf.mxu0
        %4616 = vdwg.mxu0
        %v4617 = vadd.f32 %v4536, %v4614
        %v4618 = vpack.c.bf16 %v3967, %v3967
        %s4619 = scalar_lea.vmem [#allocation9], 512
        %v4620 = vld [vmem:[%s4619] sm:$0xf]
        %v4621 = vld [vmem:[%s4619 + $0x4] sm:$0xf]
        %v4622 = vld [vmem:[%s4619 + $0x8] sm:$0xf]
        %v4623 = vld [vmem:[%s4619 + $0xc] sm:$0xf]
        %v4624 = vld [vmem:[%s4619 + $0x10] sm:$0xf]
        %v4625 = vld [vmem:[%s4619 + $0x14] sm:$0xf]
        %v4626 = vld [vmem:[%s4619 + $0x18] sm:$0xf]
        %v4627 = vld [vmem:[%s4619 + $0x1c] sm:$0xf]
        %v4628 = vld [vmem:[%s4619 + $0x20] sm:$0xf]
        %v4629 = vld [vmem:[%s4619 + $0x24] sm:$0xf]
        %v4630 = vld [vmem:[%s4619 + $0x28] sm:$0xf]
        %v4631 = vld [vmem:[%s4619 + $0x2c] sm:$0xf]
        %v4632 = vld [vmem:[%s4619 + $0x30] sm:$0xf]
        %v4633 = vld [vmem:[%s4619 + $0x34] sm:$0xf]
        %v4634 = vld [vmem:[%s4619 + $0x38] sm:$0xf]
        %v4635 = vld [vmem:[%s4619 + $0x3c] sm:$0xf]
        %v4652 = vunpack.c.l.b16 %v4620
        %v4653 = vunpack.c.l.b16 %v4621
        %v4654 = vunpack.c.l.b16 %v4622
        %v4655 = vunpack.c.l.b16 %v4623
        %v4656 = vunpack.c.l.b16 %v4624
        %v4657 = vunpack.c.l.b16 %v4625
        %v4658 = vunpack.c.l.b16 %v4626
        %v4659 = vunpack.c.l.b16 %v4627
        %v4660 = vunpack.c.l.b16 %v4628
        %v4661 = vunpack.c.l.b16 %v4629
        %v4662 = vunpack.c.l.b16 %v4630
        %v4663 = vunpack.c.l.b16 %v4631
        %v4664 = vunpack.c.l.b16 %v4632
        %v4665 = vunpack.c.l.b16 %v4633
        %v4666 = vunpack.c.l.b16 %v4634
        %v4667 = vunpack.c.l.b16 %v4635
        %v4668 = vpack.c.b16 %v4653, %v4652
        %v4669 = vpack.c.b16 %v4655, %v4654
        %v4670 = vpack.c.b16 %v4657, %v4656
        %v4671 = vpack.c.b16 %v4659, %v4658
        %v4672 = vpack.c.b16 %v4661, %v4660
        %v4673 = vpack.c.b16 %v4663, %v4662
        %v4674 = vpack.c.b16 %v4665, %v4664
        %v4675 = vpack.c.b16 %v4667, %v4666
        %4684 = vmatpush.bf16.msra.mxu0 %v4675
        %4685 = vmatpush.bf16.msra.mxu0 %v4674
        %4686 = vmatpush.bf16.msra.mxu0 %v4673
        %4687 = vmatpush.bf16.msra.mxu0 %v4672
        %4688 = vmatpush.bf16.msra.mxu0 %v4671
        %4689 = vmatpush.bf16.msra.mxu0 %v4670
        %4690 = vmatpush.bf16.msra.mxu0 %v4669
        %4691 = vmatpush.bf16.msra.mxu0 %v4668
        %4692 = vmatmul.bf16.gmra.mxu0 %v4618
        %v4693 = vpop.f32.mrf.mxu0
        %v4694 = vadd.f32 0.0, %v4693
        %v4695 = vpop.f32.mrf.mxu0
        %4696 = vdwg.mxu0
        %v4697 = vadd.f32 %v4617, %v4694
        %s4698 = scalar_lea.vmem [#allocation9], 576
        %v4699 = vld [vmem:[%s4698] sm:$0xf]
        %v4700 = vld [vmem:[%s4698 + $0x4] sm:$0xf]
        %v4701 = vld [vmem:[%s4698 + $0x8] sm:$0xf]
        %v4702 = vld [vmem:[%s4698 + $0xc] sm:$0xf]
        %v4703 = vld [vmem:[%s4698 + $0x10] sm:$0xf]
        %v4704 = vld [vmem:[%s4698 + $0x14] sm:$0xf]
        %v4705 = vld [vmem:[%s4698 + $0x18] sm:$0xf]
        %v4706 = vld [vmem:[%s4698 + $0x1c] sm:$0xf]
        %v4707 = vld [vmem:[%s4698 + $0x20] sm:$0xf]
        %v4708 = vld [vmem:[%s4698 + $0x24] sm:$0xf]
        %v4709 = vld [vmem:[%s4698 + $0x28] sm:$0xf]
        %v4710 = vld [vmem:[%s4698 + $0x2c] sm:$0xf]
        %v4711 = vld [vmem:[%s4698 + $0x30] sm:$0xf]
        %v4712 = vld [vmem:[%s4698 + $0x34] sm:$0xf]
        %v4713 = vld [vmem:[%s4698 + $0x38] sm:$0xf]
        %v4714 = vld [vmem:[%s4698 + $0x3c] sm:$0xf]
        %v4716 = vshrl.u32 %v4618, 16
        %v4735 = vunpack.c.l.b16 %v4699
        %v4736 = vunpack.c.l.b16 %v4700
        %v4737 = vunpack.c.l.b16 %v4701
        %v4738 = vunpack.c.l.b16 %v4702
        %v4739 = vunpack.c.l.b16 %v4703
        %v4740 = vunpack.c.l.b16 %v4704
        %v4741 = vunpack.c.l.b16 %v4705
        %v4742 = vunpack.c.l.b16 %v4706
        %v4743 = vunpack.c.l.b16 %v4707
        %v4744 = vunpack.c.l.b16 %v4708
        %v4745 = vunpack.c.l.b16 %v4709
        %v4746 = vunpack.c.l.b16 %v4710
        %v4747 = vunpack.c.l.b16 %v4711
        %v4748 = vunpack.c.l.b16 %v4712
        %v4749 = vunpack.c.l.b16 %v4713
        %v4750 = vunpack.c.l.b16 %v4714
        %v4751 = vpack.c.b16 %v4736, %v4735
        %v4752 = vpack.c.b16 %v4738, %v4737
        %v4753 = vpack.c.b16 %v4740, %v4739
        %v4754 = vpack.c.b16 %v4742, %v4741
        %v4755 = vpack.c.b16 %v4744, %v4743
        %v4756 = vpack.c.b16 %v4746, %v4745
        %v4757 = vpack.c.b16 %v4748, %v4747
        %v4758 = vpack.c.b16 %v4750, %v4749
        %4767 = vmatpush.bf16.msra.mxu0 %v4758
        %4768 = vmatpush.bf16.msra.mxu0 %v4757
        %4769 = vmatpush.bf16.msra.mxu0 %v4756
        %4770 = vmatpush.bf16.msra.mxu0 %v4755
        %4771 = vmatpush.bf16.msra.mxu0 %v4754
        %4772 = vmatpush.bf16.msra.mxu0 %v4753
        %4773 = vmatpush.bf16.msra.mxu0 %v4752
        %4774 = vmatpush.bf16.msra.mxu0 %v4751
        %4775 = vmatmul.bf16.gmra.mxu0 %v4716
        %v4776 = vpop.f32.mrf.mxu0
        %v4777 = vadd.f32 0.0, %v4776
        %v4778 = vpop.f32.mrf.mxu0
        %4779 = vdwg.mxu0
        %v4780 = vadd.f32 %v4697, %v4777
        %s4781 = scalar_lea.vmem [#allocation9], 640
        %v4782 = vld [vmem:[%s4781] sm:$0xf]
        %v4783 = vld [vmem:[%s4781 + $0x4] sm:$0xf]
        %v4784 = vld [vmem:[%s4781 + $0x8] sm:$0xf]
        %v4785 = vld [vmem:[%s4781 + $0xc] sm:$0xf]
        %v4786 = vld [vmem:[%s4781 + $0x10] sm:$0xf]
        %v4787 = vld [vmem:[%s4781 + $0x14] sm:$0xf]
        %v4788 = vld [vmem:[%s4781 + $0x18] sm:$0xf]
        %v4789 = vld [vmem:[%s4781 + $0x1c] sm:$0xf]
        %v4790 = vld [vmem:[%s4781 + $0x20] sm:$0xf]
        %v4791 = vld [vmem:[%s4781 + $0x24] sm:$0xf]
        %v4792 = vld [vmem:[%s4781 + $0x28] sm:$0xf]
        %v4793 = vld [vmem:[%s4781 + $0x2c] sm:$0xf]
        %v4794 = vld [vmem:[%s4781 + $0x30] sm:$0xf]
        %v4795 = vld [vmem:[%s4781 + $0x34] sm:$0xf]
        %v4796 = vld [vmem:[%s4781 + $0x38] sm:$0xf]
        %v4797 = vld [vmem:[%s4781 + $0x3c] sm:$0xf]
        %v4799 = vrot.slane %v4618, 1
        %v4817 = vunpack.c.l.b16 %v4782
        %v4818 = vunpack.c.l.b16 %v4783
        %v4819 = vunpack.c.l.b16 %v4784
        %v4820 = vunpack.c.l.b16 %v4785
        %v4821 = vunpack.c.l.b16 %v4786
        %v4822 = vunpack.c.l.b16 %v4787
        %v4823 = vunpack.c.l.b16 %v4788
        %v4824 = vunpack.c.l.b16 %v4789
        %v4825 = vunpack.c.l.b16 %v4790
        %v4826 = vunpack.c.l.b16 %v4791
        %v4827 = vunpack.c.l.b16 %v4792
        %v4828 = vunpack.c.l.b16 %v4793
        %v4829 = vunpack.c.l.b16 %v4794
        %v4830 = vunpack.c.l.b16 %v4795
        %v4831 = vunpack.c.l.b16 %v4796
        %v4832 = vunpack.c.l.b16 %v4797
        %v4833 = vpack.c.b16 %v4818, %v4817
        %v4834 = vpack.c.b16 %v4820, %v4819
        %v4835 = vpack.c.b16 %v4822, %v4821
        %v4836 = vpack.c.b16 %v4824, %v4823
        %v4837 = vpack.c.b16 %v4826, %v4825
        %v4838 = vpack.c.b16 %v4828, %v4827
        %v4839 = vpack.c.b16 %v4830, %v4829
        %v4840 = vpack.c.b16 %v4832, %v4831
        %4849 = vmatpush.bf16.msra.mxu0 %v4840
        %4850 = vmatpush.bf16.msra.mxu0 %v4839
        %4851 = vmatpush.bf16.msra.mxu0 %v4838
        %4852 = vmatpush.bf16.msra.mxu0 %v4837
        %4853 = vmatpush.bf16.msra.mxu0 %v4836
        %4854 = vmatpush.bf16.msra.mxu0 %v4835
        %4855 = vmatpush.bf16.msra.mxu0 %v4834
        %4856 = vmatpush.bf16.msra.mxu0 %v4833
        %4857 = vmatmul.bf16.gmra.mxu0 %v4799
        %v4858 = vpop.f32.mrf.mxu0
        %v4859 = vadd.f32 0.0, %v4858
        %v4860 = vpop.f32.mrf.mxu0
        %4861 = vdwg.mxu0
        %v4862 = vadd.f32 %v4780, %v4859
        %s4863 = scalar_lea.vmem [#allocation9], 704
        %v4864 = vld [vmem:[%s4863] sm:$0xf]
        %v4865 = vld [vmem:[%s4863 + $0x4] sm:$0xf]
        %v4866 = vld [vmem:[%s4863 + $0x8] sm:$0xf]
        %v4867 = vld [vmem:[%s4863 + $0xc] sm:$0xf]
        %v4868 = vld [vmem:[%s4863 + $0x10] sm:$0xf]
        %v4869 = vld [vmem:[%s4863 + $0x14] sm:$0xf]
        %v4870 = vld [vmem:[%s4863 + $0x18] sm:$0xf]
        %v4871 = vld [vmem:[%s4863 + $0x1c] sm:$0xf]
        %v4872 = vld [vmem:[%s4863 + $0x20] sm:$0xf]
        %v4873 = vld [vmem:[%s4863 + $0x24] sm:$0xf]
        %v4874 = vld [vmem:[%s4863 + $0x28] sm:$0xf]
        %v4875 = vld [vmem:[%s4863 + $0x2c] sm:$0xf]
        %v4876 = vld [vmem:[%s4863 + $0x30] sm:$0xf]
        %v4877 = vld [vmem:[%s4863 + $0x34] sm:$0xf]
        %v4878 = vld [vmem:[%s4863 + $0x38] sm:$0xf]
        %v4879 = vld [vmem:[%s4863 + $0x3c] sm:$0xf]
        %v4880 = vrot.slane %v4716, 1
        %v4898 = vunpack.c.l.b16 %v4864
        %v4899 = vunpack.c.l.b16 %v4865
        %v4900 = vunpack.c.l.b16 %v4866
        %v4901 = vunpack.c.l.b16 %v4867
        %v4902 = vunpack.c.l.b16 %v4868
        %v4903 = vunpack.c.l.b16 %v4869
        %v4904 = vunpack.c.l.b16 %v4870
        %v4905 = vunpack.c.l.b16 %v4871
        %v4906 = vunpack.c.l.b16 %v4872
        %v4907 = vunpack.c.l.b16 %v4873
        %v4908 = vunpack.c.l.b16 %v4874
        %v4909 = vunpack.c.l.b16 %v4875
        %v4910 = vunpack.c.l.b16 %v4876
        %v4911 = vunpack.c.l.b16 %v4877
        %v4912 = vunpack.c.l.b16 %v4878
        %v4913 = vunpack.c.l.b16 %v4879
        %v4914 = vpack.c.b16 %v4899, %v4898
        %v4915 = vpack.c.b16 %v4901, %v4900
        %v4916 = vpack.c.b16 %v4903, %v4902
        %v4917 = vpack.c.b16 %v4905, %v4904
        %v4918 = vpack.c.b16 %v4907, %v4906
        %v4919 = vpack.c.b16 %v4909, %v4908
        %v4920 = vpack.c.b16 %v4911, %v4910
        %v4921 = vpack.c.b16 %v4913, %v4912
        %4930 = vmatpush.bf16.msra.mxu0 %v4921
        %4931 = vmatpush.bf16.msra.mxu0 %v4920
        %4932 = vmatpush.bf16.msra.mxu0 %v4919
        %4933 = vmatpush.bf16.msra.mxu0 %v4918
        %4934 = vmatpush.bf16.msra.mxu0 %v4917
        %4935 = vmatpush.bf16.msra.mxu0 %v4916
        %4936 = vmatpush.bf16.msra.mxu0 %v4915
        %4937 = vmatpush.bf16.msra.mxu0 %v4914
        %4938 = vmatmul.bf16.gmra.mxu0 %v4880
        %v4939 = vpop.f32.mrf.mxu0
        %v4940 = vadd.f32 0.0, %v4939
        %v4941 = vpop.f32.mrf.mxu0
        %4942 = vdwg.mxu0
        %v4943 = vadd.f32 %v4862, %v4940
        %v4944 = vpack.c.bf16 %v3968, %v3968
        %s4945 = scalar_lea.vmem [#allocation9], 768
        %v4946 = vld [vmem:[%s4945] sm:$0xf]
        %v4947 = vld [vmem:[%s4945 + $0x4] sm:$0xf]
        %v4948 = vld [vmem:[%s4945 + $0x8] sm:$0xf]
        %v4949 = vld [vmem:[%s4945 + $0xc] sm:$0xf]
        %v4950 = vld [vmem:[%s4945 + $0x10] sm:$0xf]
        %v4951 = vld [vmem:[%s4945 + $0x14] sm:$0xf]
        %v4952 = vld [vmem:[%s4945 + $0x18] sm:$0xf]
        %v4953 = vld [vmem:[%s4945 + $0x1c] sm:$0xf]
        %v4954 = vld [vmem:[%s4945 + $0x20] sm:$0xf]
        %v4955 = vld [vmem:[%s4945 + $0x24] sm:$0xf]
        %v4956 = vld [vmem:[%s4945 + $0x28] sm:$0xf]
        %v4957 = vld [vmem:[%s4945 + $0x2c] sm:$0xf]
        %v4958 = vld [vmem:[%s4945 + $0x30] sm:$0xf]
        %v4959 = vld [vmem:[%s4945 + $0x34] sm:$0xf]
        %v4960 = vld [vmem:[%s4945 + $0x38] sm:$0xf]
        %v4961 = vld [vmem:[%s4945 + $0x3c] sm:$0xf]
        %v4978 = vunpack.c.l.b16 %v4946
        %v4979 = vunpack.c.l.b16 %v4947
        %v4980 = vunpack.c.l.b16 %v4948
        %v4981 = vunpack.c.l.b16 %v4949
        %v4982 = vunpack.c.l.b16 %v4950
        %v4983 = vunpack.c.l.b16 %v4951
        %v4984 = vunpack.c.l.b16 %v4952
        %v4985 = vunpack.c.l.b16 %v4953
        %v4986 = vunpack.c.l.b16 %v4954
        %v4987 = vunpack.c.l.b16 %v4955
        %v4988 = vunpack.c.l.b16 %v4956
        %v4989 = vunpack.c.l.b16 %v4957
        %v4990 = vunpack.c.l.b16 %v4958
        %v4991 = vunpack.c.l.b16 %v4959
        %v4992 = vunpack.c.l.b16 %v4960
        %v4993 = vunpack.c.l.b16 %v4961
        %v4994 = vpack.c.b16 %v4979, %v4978
        %v4995 = vpack.c.b16 %v4981, %v4980
        %v4996 = vpack.c.b16 %v4983, %v4982
        %v4997 = vpack.c.b16 %v4985, %v4984
        %v4998 = vpack.c.b16 %v4987, %v4986
        %v4999 = vpack.c.b16 %v4989, %v4988
        %v5000 = vpack.c.b16 %v4991, %v4990
        %v5001 = vpack.c.b16 %v4993, %v4992
        %5010 = vmatpush.bf16.msra.mxu0 %v5001
        %5011 = vmatpush.bf16.msra.mxu0 %v5000
        %5012 = vmatpush.bf16.msra.mxu0 %v4999
        %5013 = vmatpush.bf16.msra.mxu0 %v4998
        %5014 = vmatpush.bf16.msra.mxu0 %v4997
        %5015 = vmatpush.bf16.msra.mxu0 %v4996
        %5016 = vmatpush.bf16.msra.mxu0 %v4995
        %5017 = vmatpush.bf16.msra.mxu0 %v4994
        %5018 = vmatmul.bf16.gmra.mxu0 %v4944
        %v5019 = vpop.f32.mrf.mxu0
        %v5020 = vadd.f32 0.0, %v5019
        %v5021 = vpop.f32.mrf.mxu0
        %5022 = vdwg.mxu0
        %v5023 = vadd.f32 %v4943, %v5020
        %s5024 = scalar_lea.vmem [#allocation9], 832
        %v5025 = vld [vmem:[%s5024] sm:$0xf]
        %v5026 = vld [vmem:[%s5024 + $0x4] sm:$0xf]
        %v5027 = vld [vmem:[%s5024 + $0x8] sm:$0xf]
        %v5028 = vld [vmem:[%s5024 + $0xc] sm:$0xf]
        %v5029 = vld [vmem:[%s5024 + $0x10] sm:$0xf]
        %v5030 = vld [vmem:[%s5024 + $0x14] sm:$0xf]
        %v5031 = vld [vmem:[%s5024 + $0x18] sm:$0xf]
        %v5032 = vld [vmem:[%s5024 + $0x1c] sm:$0xf]
        %v5033 = vld [vmem:[%s5024 + $0x20] sm:$0xf]
        %v5034 = vld [vmem:[%s5024 + $0x24] sm:$0xf]
        %v5035 = vld [vmem:[%s5024 + $0x28] sm:$0xf]
        %v5036 = vld [vmem:[%s5024 + $0x2c] sm:$0xf]
        %v5037 = vld [vmem:[%s5024 + $0x30] sm:$0xf]
        %v5038 = vld [vmem:[%s5024 + $0x34] sm:$0xf]
        %v5039 = vld [vmem:[%s5024 + $0x38] sm:$0xf]
        %v5040 = vld [vmem:[%s5024 + $0x3c] sm:$0xf]
        %v5042 = vshrl.u32 %v4944, 16
        %v5061 = vunpack.c.l.b16 %v5025
        %v5062 = vunpack.c.l.b16 %v5026
        %v5063 = vunpack.c.l.b16 %v5027
        %v5064 = vunpack.c.l.b16 %v5028
        %v5065 = vunpack.c.l.b16 %v5029
        %v5066 = vunpack.c.l.b16 %v5030
        %v5067 = vunpack.c.l.b16 %v5031
        %v5068 = vunpack.c.l.b16 %v5032
        %v5069 = vunpack.c.l.b16 %v5033
        %v5070 = vunpack.c.l.b16 %v5034
        %v5071 = vunpack.c.l.b16 %v5035
        %v5072 = vunpack.c.l.b16 %v5036
        %v5073 = vunpack.c.l.b16 %v5037
        %v5074 = vunpack.c.l.b16 %v5038
        %v5075 = vunpack.c.l.b16 %v5039
        %v5076 = vunpack.c.l.b16 %v5040
        %v5077 = vpack.c.b16 %v5062, %v5061
        %v5078 = vpack.c.b16 %v5064, %v5063
        %v5079 = vpack.c.b16 %v5066, %v5065
        %v5080 = vpack.c.b16 %v5068, %v5067
        %v5081 = vpack.c.b16 %v5070, %v5069
        %v5082 = vpack.c.b16 %v5072, %v5071
        %v5083 = vpack.c.b16 %v5074, %v5073
        %v5084 = vpack.c.b16 %v5076, %v5075
        %5093 = vmatpush.bf16.msra.mxu0 %v5084
        %5094 = vmatpush.bf16.msra.mxu0 %v5083
        %5095 = vmatpush.bf16.msra.mxu0 %v5082
        %5096 = vmatpush.bf16.msra.mxu0 %v5081
        %5097 = vmatpush.bf16.msra.mxu0 %v5080
        %5098 = vmatpush.bf16.msra.mxu0 %v5079
        %5099 = vmatpush.bf16.msra.mxu0 %v5078
        %5100 = vmatpush.bf16.msra.mxu0 %v5077
        %5101 = vmatmul.bf16.gmra.mxu0 %v5042
        %v5102 = vpop.f32.mrf.mxu0
        %v5103 = vadd.f32 0.0, %v5102
        %v5104 = vpop.f32.mrf.mxu0
        %5105 = vdwg.mxu0
        %v5106 = vadd.f32 %v5023, %v5103
        %s5107 = scalar_lea.vmem [#allocation9], 896
        %v5108 = vld [vmem:[%s5107] sm:$0xf]
        %v5109 = vld [vmem:[%s5107 + $0x4] sm:$0xf]
        %v5110 = vld [vmem:[%s5107 + $0x8] sm:$0xf]
        %v5111 = vld [vmem:[%s5107 + $0xc] sm:$0xf]
        %v5112 = vld [vmem:[%s5107 + $0x10] sm:$0xf]
        %v5113 = vld [vmem:[%s5107 + $0x14] sm:$0xf]
        %v5114 = vld [vmem:[%s5107 + $0x18] sm:$0xf]
        %v5115 = vld [vmem:[%s5107 + $0x1c] sm:$0xf]
        %v5116 = vld [vmem:[%s5107 + $0x20] sm:$0xf]
        %v5117 = vld [vmem:[%s5107 + $0x24] sm:$0xf]
        %v5118 = vld [vmem:[%s5107 + $0x28] sm:$0xf]
        %v5119 = vld [vmem:[%s5107 + $0x2c] sm:$0xf]
        %v5120 = vld [vmem:[%s5107 + $0x30] sm:$0xf]
        %v5121 = vld [vmem:[%s5107 + $0x34] sm:$0xf]
        %v5122 = vld [vmem:[%s5107 + $0x38] sm:$0xf]
        %v5123 = vld [vmem:[%s5107 + $0x3c] sm:$0xf]
        %v5125 = vrot.slane %v4944, 1
        %v5143 = vunpack.c.l.b16 %v5108
        %v5144 = vunpack.c.l.b16 %v5109
        %v5145 = vunpack.c.l.b16 %v5110
        %v5146 = vunpack.c.l.b16 %v5111
        %v5147 = vunpack.c.l.b16 %v5112
        %v5148 = vunpack.c.l.b16 %v5113
        %v5149 = vunpack.c.l.b16 %v5114
        %v5150 = vunpack.c.l.b16 %v5115
        %v5151 = vunpack.c.l.b16 %v5116
        %v5152 = vunpack.c.l.b16 %v5117
        %v5153 = vunpack.c.l.b16 %v5118
        %v5154 = vunpack.c.l.b16 %v5119
        %v5155 = vunpack.c.l.b16 %v5120
        %v5156 = vunpack.c.l.b16 %v5121
        %v5157 = vunpack.c.l.b16 %v5122
        %v5158 = vunpack.c.l.b16 %v5123
        %v5159 = vpack.c.b16 %v5144, %v5143
        %v5160 = vpack.c.b16 %v5146, %v5145
        %v5161 = vpack.c.b16 %v5148, %v5147
        %v5162 = vpack.c.b16 %v5150, %v5149
        %v5163 = vpack.c.b16 %v5152, %v5151
        %v5164 = vpack.c.b16 %v5154, %v5153
        %v5165 = vpack.c.b16 %v5156, %v5155
        %v5166 = vpack.c.b16 %v5158, %v5157
        %5175 = vmatpush.bf16.msra.mxu0 %v5166
        %5176 = vmatpush.bf16.msra.mxu0 %v5165
        %5177 = vmatpush.bf16.msra.mxu0 %v5164
        %5178 = vmatpush.bf16.msra.mxu0 %v5163
        %5179 = vmatpush.bf16.msra.mxu0 %v5162
        %5180 = vmatpush.bf16.msra.mxu0 %v5161
        %5181 = vmatpush.bf16.msra.mxu0 %v5160
        %5182 = vmatpush.bf16.msra.mxu0 %v5159
        %5183 = vmatmul.bf16.gmra.mxu0 %v5125
        %v5184 = vpop.f32.mrf.mxu0
        %v5185 = vadd.f32 0.0, %v5184
        %v5186 = vpop.f32.mrf.mxu0
        %5187 = vdwg.mxu0
        %v5188 = vadd.f32 %v5106, %v5185
        %s5189 = scalar_lea.vmem [#allocation9], 960
        %v5190 = vld [vmem:[%s5189] sm:$0xf]
        %v5191 = vld [vmem:[%s5189 + $0x4] sm:$0xf]
        %v5192 = vld [vmem:[%s5189 + $0x8] sm:$0xf]
        %v5193 = vld [vmem:[%s5189 + $0xc] sm:$0xf]
        %v5194 = vld [vmem:[%s5189 + $0x10] sm:$0xf]
        %v5195 = vld [vmem:[%s5189 + $0x14] sm:$0xf]
        %v5196 = vld [vmem:[%s5189 + $0x18] sm:$0xf]
        %v5197 = vld [vmem:[%s5189 + $0x1c] sm:$0xf]
        %v5198 = vld [vmem:[%s5189 + $0x20] sm:$0xf]
        %v5199 = vld [vmem:[%s5189 + $0x24] sm:$0xf]
        %v5200 = vld [vmem:[%s5189 + $0x28] sm:$0xf]
        %v5201 = vld [vmem:[%s5189 + $0x2c] sm:$0xf]
        %v5202 = vld [vmem:[%s5189 + $0x30] sm:$0xf]
        %v5203 = vld [vmem:[%s5189 + $0x34] sm:$0xf]
        %v5204 = vld [vmem:[%s5189 + $0x38] sm:$0xf]
        %v5205 = vld [vmem:[%s5189 + $0x3c] sm:$0xf]
        %v5206 = vrot.slane %v5042, 1
        %v5224 = vunpack.c.l.b16 %v5190
        %v5225 = vunpack.c.l.b16 %v5191
        %v5226 = vunpack.c.l.b16 %v5192
        %v5227 = vunpack.c.l.b16 %v5193
        %v5228 = vunpack.c.l.b16 %v5194
        %v5229 = vunpack.c.l.b16 %v5195
        %v5230 = vunpack.c.l.b16 %v5196
        %v5231 = vunpack.c.l.b16 %v5197
        %v5232 = vunpack.c.l.b16 %v5198
        %v5233 = vunpack.c.l.b16 %v5199
        %v5234 = vunpack.c.l.b16 %v5200
        %v5235 = vunpack.c.l.b16 %v5201
        %v5236 = vunpack.c.l.b16 %v5202
        %v5237 = vunpack.c.l.b16 %v5203
        %v5238 = vunpack.c.l.b16 %v5204
        %v5239 = vunpack.c.l.b16 %v5205
        %v5240 = vpack.c.b16 %v5225, %v5224
        %v5241 = vpack.c.b16 %v5227, %v5226
        %v5242 = vpack.c.b16 %v5229, %v5228
        %v5243 = vpack.c.b16 %v5231, %v5230
        %v5244 = vpack.c.b16 %v5233, %v5232
        %v5245 = vpack.c.b16 %v5235, %v5234
        %v5246 = vpack.c.b16 %v5237, %v5236
        %v5247 = vpack.c.b16 %v5239, %v5238
        %5256 = vmatpush.bf16.msra.mxu0 %v5247
        %5257 = vmatpush.bf16.msra.mxu0 %v5246
        %5258 = vmatpush.bf16.msra.mxu0 %v5245
        %5259 = vmatpush.bf16.msra.mxu0 %v5244
        %5260 = vmatpush.bf16.msra.mxu0 %v5243
        %5261 = vmatpush.bf16.msra.mxu0 %v5242
        %5262 = vmatpush.bf16.msra.mxu0 %v5241
        %5263 = vmatpush.bf16.msra.mxu0 %v5240
        %5264 = vmatmul.bf16.gmra.mxu0 %v5206
        %v5265 = vpop.f32.mrf.mxu0
        %v5266 = vadd.f32 0.0, %v5265
        %v5267 = vpop.f32.mrf.mxu0
        %5268 = vdwg.mxu0
        %v5269 = vadd.f32 %v5188, %v5266
        %v5270 = vld [vmem:[%s10] sm:$0x1]
        %v5271 = vadd.f32 %v5269, %v5270
        %v5272 = vmax.f32 %v5271, 0.0
        %v5273 = vpack.c.bf16 %v5272, %v5272
        %v5274 = vld [vmem:[%s11] sm:$0xf]
        %v5275 = vld [vmem:[%s11 + $0x4] sm:$0xf]
        %v5276 = vld [vmem:[%s11 + $0x8] sm:$0xf]
        %v5277 = vld [vmem:[%s11 + $0xc] sm:$0xf]
        %v5278 = vld [vmem:[%s11 + $0x10] sm:$0xf]
        %v5279 = vld [vmem:[%s11 + $0x14] sm:$0xf]
        %v5280 = vld [vmem:[%s11 + $0x18] sm:$0xf]
        %v5281 = vld [vmem:[%s11 + $0x1c] sm:$0xf]
        %v5282 = vld [vmem:[%s11 + $0x20] sm:$0xf]
        %v5283 = vld [vmem:[%s11 + $0x24] sm:$0xf]
        %v5284 = vld [vmem:[%s11 + $0x28] sm:$0xf]
        %v5285 = vld [vmem:[%s11 + $0x2c] sm:$0xf]
        %v5286 = vld [vmem:[%s11 + $0x30] sm:$0xf]
        %v5287 = vld [vmem:[%s11 + $0x34] sm:$0xf]
        %v5288 = vld [vmem:[%s11 + $0x38] sm:$0xf]
        %v5289 = vld [vmem:[%s11 + $0x3c] sm:$0xf]
        %v5290 = vld [vmem:[#allocation11] sm:$0x1]
        %v5307 = vunpack.c.l.b16 %v5274
        %v5308 = vunpack.c.l.b16 %v5275
        %v5309 = vunpack.c.l.b16 %v5276
        %v5310 = vunpack.c.l.b16 %v5277
        %v5311 = vunpack.c.l.b16 %v5278
        %v5312 = vunpack.c.l.b16 %v5279
        %v5313 = vunpack.c.l.b16 %v5280
        %v5314 = vunpack.c.l.b16 %v5281
        %v5315 = vunpack.c.l.b16 %v5282
        %v5316 = vunpack.c.l.b16 %v5283
        %v5317 = vunpack.c.l.b16 %v5284
        %v5318 = vunpack.c.l.b16 %v5285
        %v5319 = vunpack.c.l.b16 %v5286
        %v5320 = vunpack.c.l.b16 %v5287
        %v5321 = vunpack.c.l.b16 %v5288
        %v5322 = vunpack.c.l.b16 %v5289
        %v5323 = vpack.c.b16 %v5308, %v5307
        %v5324 = vpack.c.b16 %v5310, %v5309
        %v5325 = vpack.c.b16 %v5312, %v5311
        %v5326 = vpack.c.b16 %v5314, %v5313
        %v5327 = vpack.c.b16 %v5316, %v5315
        %v5328 = vpack.c.b16 %v5318, %v5317
        %v5329 = vpack.c.b16 %v5320, %v5319
        %v5330 = vpack.c.b16 %v5322, %v5321
        %5339 = vmatpush.bf16.msra.mxu0 %v5330
        %5340 = vmatpush.bf16.msra.mxu0 %v5329
        %5341 = vmatpush.bf16.msra.mxu0 %v5328
        %5342 = vmatpush.bf16.msra.mxu0 %v5327
        %5343 = vmatpush.bf16.msra.mxu0 %v5326
        %5344 = vmatpush.bf16.msra.mxu0 %v5325
        %5345 = vmatpush.bf16.msra.mxu0 %v5324
        %5346 = vmatpush.bf16.msra.mxu0 %v5323
        %5347 = vmatmul.bf16.gmra.mxu0 %v5273
        %v5348 = vpop.f32.mrf.mxu0
        %v5349 = vadd.f32 %v5290, %v5348
        %v5350 = vpop.f32.mrf.mxu0
        %5351 = vdwg.mxu0
        %5352 = vst [vmem:[%s480] sm:$0x1] %v5349
        %s5353 = sand.u32 %s315, 1
        %s5354 = scalar_lea.sflag [#allocation8], %s5353
        %s5355 = sand.u32 %s315, 1
        %s5356 = scalar_lea.vmem [#allocation12], %s5355
        // Predicated region
        $region85: #{your_code_net_forward.1} parent=71 // pred_check
          %p5357 = pneg %p325
        $region86: #{your_code_net_forward.1} parent=71 // pred_check_branch
          %5359 = sbr.rel (%p5357) target = $region88
        $region87: #{your_code_net_forward.1} parent=71 // pred_region
          %5361 = vsyncadd %s5354, 0
          %s5362 = scalar_lea.hbm %s13, %s29
          %s5364 = sshll.u32 %s5356, 4
          %s5365 = int_to_ptr.vmem [resolvable:$true] %s5364
          %s5366 = sshll.u32 %s5362, 4
          %s5367 = int_to_ptr.hbm [resolvable:$true] %s5366
          %5369 = dma.vmem_to_hbm [thread:$0]  %s5365, 16, %s5367, %s5354
        $region88: #{your_code_net_forward.1} parent=71 // pred_fallthru
          _
      $region72: #{your_code_net_forward.1} parent=5 // pred_fallthru
        _
      %p5370 = scmp.le.s32.totalorder 2, %s24
      // Predicated region
      $region89: #{your_code_net_forward.1} parent=5 // pred_check
        %p5371 = pneg %p5370
      $region90: #{your_code_net_forward.1} parent=5 // pred_check_branch
        %5373 = sbr.rel (%p5371) target = $region92
      $region91: #{your_code_net_forward.1} parent=5 // pred_region
        %s5374 = ssub.s32 %s24, 2
        // Predicated region
        $region93: #{your_code_net_forward.1} parent=91 // pred_check
          %p5375 = pneg %p331
        $region94: #{your_code_net_forward.1} parent=91 // pred_check_branch
          %5377 = sbr.rel (%p5375) target = $region96
        $region95: #{your_code_net_forward.1} parent=91 // pred_region
          %s5378 = sand.u32 %s316, 1
          %s5379 = scalar_lea.sflag [#allocation8], %s5378
          %s5380 = sand.u32 %s316, 1
          %s5381 = scalar_lea.vmem [#allocation12], %s5380
          %5383 = dma.done %s5379, 16
        $region96: #{your_code_net_forward.1} parent=91 // pred_fallthru
          _
      $region92: #{your_code_net_forward.1} parent=5 // pred_fallthru
        _
    $region6: #{your_code_net_forward.1} parent=1 // loop_footer
      %s28 = sadd.s32 1, %s24
    $region7: #{your_code_net_forward.1} parent=1 // loop_footer_branch
      %23 = sbr.rel target = $region3
    $region8: #{your_code_net_forward.1} parent=1 // loop_exit
      _
    %5384 = vsyncpa [#allocation7], 1
    %s5385 = scalar_lea.sflag [#allocation7], 1
    %5386 = vsyncpa %s5385, 1
    %5387 = vsyncpa [#allocation10], 1
    %5388 = vsyncpa [#allocation8], 1
    %s5389 = scalar_lea.sflag [#allocation8], 1
    %5390 = vsyncpa %s5389, 1

</llo_original>
